<compile_context>
chip_gen: v6e
topology: v6e:2x2x1
jax: 0.10.0
libtpu: 0.0.40
codegen_flags: <defaults>
</compile_context>

<pallas_src>
import math

import jax
import jax.numpy as jnp
from jax.experimental import pallas as pl
from jax.experimental.pallas import tpu as pltpu

# ---- Model hyper-parameters (matching the PyTorch module) -------------------
CONTEXT_LENGTH = 94
INST_LENGTH = 39

OUT = 4
CK = (3, 3, 3, 3, 3)          # ck1..ck5
CH = (8, 8, 8, 8, 8)          # ch1..ch5
F1 = 32

_LENS = [CONTEXT_LENGTH]
for _k in CK:
    _LENS.append(_LENS[-1] - _k + 1)
L_OUT_FINAL = _LENS[-1]                    # 84
F1_INPUT = CH[-1] * L_OUT_FINAL            # 672

LANE_STRIDE = 128   # per-element padded length (lane-tile aligned stride)
MAX_TILE_B = 128    # batch elements folded into one grid step


# -----------------------------------------------------------------------------
# Fused Pallas kernel
# -----------------------------------------------------------------------------
def _cnn5_fused_kernel(x_ref,
                       w1, b1, w2, b2, w3, b3, w4, b4, w5, b5,
                       fw1, fb1, fw2, fb2,
                       o_ref,
                       xin_ref, tr_ref):
    tile_b = x_ref.shape[0]
    n_lanes = tile_b * LANE_STRIDE

    # ---- Stage 1: (TILE_B, C_in, L0) block -> channel-major with the batch
    # folded into the lane axis: xin[c, b*128 + l] = x[b, c, l], zero padded.
    # All stores are at 128-aligned lane offsets.
    xin_ref[...] = jnp.zeros_like(xin_ref)
    for b in range(tile_b):
        off = b * LANE_STRIDE
        xin_ref[:, off:off + CONTEXT_LENGTH] = x_ref[b]
    h = xin_ref[...].astype(jnp.bfloat16)                    # (C_in, N) bf16

    # ---- Stage 2: 5x (valid Conv1d + ReLU).  Each tap k is one lane-dense
    # MXU matmul (C_out, C_in) @ (C_in, TILE_B*128); tap alignment is done with
    # a circular lane roll (wraparound only ever lands in per-element padding).
    def conv_relu(h, w_ref, bias_ref):
        k_taps = w_ref.shape[0]
        acc = jnp.dot(w_ref[0], h, preferred_element_type=jnp.float32)
        for k in range(1, k_taps):
            p = jnp.dot(w_ref[k], h, preferred_element_type=jnp.float32)
            acc = acc + pltpu.roll(p, n_lanes - k, axis=1)   # == shift by -k
        return jnp.maximum(acc + bias_ref[...], 0.0)         # (C_out, N) f32

    h = conv_relu(h, w1, b1).astype(jnp.bfloat16)
    h = conv_relu(h, w2, b2).astype(jnp.bfloat16)
    h = conv_relu(h, w3, b3).astype(jnp.bfloat16)
    h = conv_relu(h, w4, b4).astype(jnp.bfloat16)
    h5 = conv_relu(h, w5, b5)                                # (C5, N) f32

    # ---- Stage 3: channel-major -> batch-major transition for the FC head,
    # done through VMEM scratch.  Every store moves one aligned (C5, 128) tile.
    for b in range(tile_b):
        off = b * LANE_STRIDE
        tr_ref[b] = h5[:, off:off + LANE_STRIDE]             # (C5, 128)

    # ---- Stage 4: fused FC head.  fc1 is accumulated channel-by-channel so
    # each matmul stays a plain 2D (TILE_B, 128) @ (128, F1) MXU op; the fc1
    # weight is pre-padded with zeros for the l >= 84 padding lanes.
    acc1 = jnp.zeros((tile_b, F1), jnp.float32)
    for c in range(CH[-1]):
        xc = tr_ref[:, c, :].astype(jnp.bfloat16)            # (TILE_B, 128)
        acc1 = acc1 + jnp.dot(xc, fw1[c], preferred_element_type=jnp.float32)
    h1 = jnp.maximum(acc1 + fb1[...], 0.0).astype(jnp.bfloat16)
    out = jnp.dot(h1, fw2[...], preferred_element_type=jnp.float32) + fb2[...]
    o_ref[...] = out                                          # (TILE_B, OUT)


# -----------------------------------------------------------------------------
# Wrapper
# -----------------------------------------------------------------------------
def _round_up(x, m):
    return (x + m - 1) // m * m


def cnn5_forward_fn(x, kparams):
    """Full CNN5 forward.  x: anything reshapeable to (B, 39, 94)."""
    x = x.reshape(-1, INST_LENGTH, CONTEXT_LENGTH).astype(jnp.float32)
    batch = x.shape[0]
    tile_b = MAX_TILE_B if batch >= MAX_TILE_B else _round_up(batch, 8)
    padded = _round_up(batch, tile_b)
    if padded != batch:
        x = jnp.pad(x, ((0, padded - batch), (0, 0), (0, 0)))
    grid = (padded // tile_b,)

    flat_args = [x]
    in_specs = [pl.BlockSpec((tile_b, INST_LENGTH, CONTEXT_LENGTH),
                             lambda i: (i, 0, 0))]
    for w, b in zip(kparams["conv_w"], kparams["conv_b"]):
        flat_args += [w, b]
        in_specs += [pl.BlockSpec(w.shape, lambda i: (0, 0, 0)),
                     pl.BlockSpec(b.shape, lambda i: (0, 0))]
    flat_args += [kparams["fc1_w"], kparams["fc1_b"],
                  kparams["fc2_w"], kparams["fc2_b"]]
    in_specs += [pl.BlockSpec(kparams["fc1_w"].shape, lambda i: (0, 0, 0)),
                 pl.BlockSpec(kparams["fc1_b"].shape, lambda i: (0, 0)),
                 pl.BlockSpec(kparams["fc2_w"].shape, lambda i: (0, 0)),
                 pl.BlockSpec(kparams["fc2_b"].shape, lambda i: (0, 0))]

    out = pl.pallas_call(
        _cnn5_fused_kernel,
        out_shape=jax.ShapeDtypeStruct((padded, OUT), jnp.float32),
        grid=grid,
        in_specs=in_specs,
        out_specs=pl.BlockSpec((tile_b, OUT), lambda i: (i, 0)),
        scratch_shapes=[
            # channel-major, lane-folded input image of the current batch tile
            pltpu.VMEM((INST_LENGTH, tile_b * LANE_STRIDE), jnp.float32),
            # batch-major staging buffer for the FC head
            pltpu.VMEM((tile_b, CH[-1], LANE_STRIDE), jnp.float32),
        ],
        compiler_params=pltpu.CompilerParams(
            dimension_semantics=("parallel",),
            vmem_limit_bytes=32 * 1024 * 1024),
    )(*flat_args)
    return out[:batch]


cnn5_forward = jax.jit(cnn5_forward_fn)


# -----------------------------------------------------------------------------
# Parameters: raw (PyTorch layout) + kernel-prepared layouts
# -----------------------------------------------------------------------------
def init_raw_params(key):
    """PyTorch-layout params: Conv1d (C_out, C_in, K), Linear (out, in)."""
    keys = jax.random.split(key, 14)
    conv = []
    c_in = INST_LENGTH
    ki = 0
    for c_out, k in zip(CH, CK):
        scale = 1.0 / math.sqrt(c_in * k)
        w = jax.random.normal(keys[ki], (c_out, c_in, k), jnp.float32) * scale
        b = jax.random.normal(keys[ki + 1], (c_out,), jnp.float32) * scale
        conv.append((w, b))
        c_in = c_out
        ki += 2
    s1 = 1.0 / math.sqrt(F1_INPUT)
    fc1_w = jax.random.normal(keys[10], (F1, F1_INPUT), jnp.float32) * s1
    fc1_b = jax.random.normal(keys[11], (F1,), jnp.float32) * s1
    s2 = 1.0 / math.sqrt(F1)
    fc2_w = jax.random.normal(keys[12], (OUT, F1), jnp.float32) * s2
    fc2_b = jax.random.normal(keys[13], (OUT,), jnp.float32) * s2
    return {"conv": conv, "fc1_w": fc1_w, "fc1_b": fc1_b,
            "fc2_w": fc2_w, "fc2_b": fc2_b}


def prepare_kernel_params(raw):
    """Re-layout weights for the fused kernel (bf16 MXU operands, f32 biases)."""
    conv_w, conv_b = [], []
    for w, b in raw["conv"]:
        conv_w.append(jnp.transpose(w, (2, 0, 1)).astype(jnp.bfloat16))  # (K, C_out, C_in)
        conv_b.append(b.reshape(-1, 1).astype(jnp.float32))              # (C_out, 1)
    # fc1: (F1, C5*L5) -> (C5, L5, F1), zero-padded along L5 to the 128 stride.
    w1 = raw["fc1_w"].reshape(F1, CH[-1], L_OUT_FINAL)
    w1 = jnp.transpose(w1, (1, 2, 0))
    w1 = jnp.pad(w1, ((0, 0), (0, LANE_STRIDE - L_OUT_FINAL), (0, 0)))
    return {
        "conv_w": conv_w,
        "conv_b": conv_b,
        "fc1_w": w1.astype(jnp.bfloat16),                                # (C5, 128, F1)
        "fc1_b": raw["fc1_b"].reshape(1, -1).astype(jnp.float32),
        "fc2_w": raw["fc2_w"].T.astype(jnp.bfloat16),                    # (F1, OUT)
        "fc2_b": raw["fc2_b"].reshape(1, -1).astype(jnp.float32),
    }


# -----------------------------------------------------------------------------
# Pure-JAX f32 reference (for a sanity check against the bf16 kernel)
# -----------------------------------------------------------------------------
def reference_forward(x, raw):
    h = x.reshape(-1, INST_LENGTH, CONTEXT_LENGTH).astype(jnp.float32)
    for w, b in raw["conv"]:
        k = w.shape[2]
        l_out = h.shape[2] - k + 1
        cols = jnp.stack([h[:, :, t:t + l_out] for t in range(k)], axis=-1)
        h = jnp.einsum("bclk,ock->bol", cols, w) + b[None, :, None]
        h = jnp.maximum(h, 0.0)
    hf = h.reshape(h.shape[0], -1)
    h1 = jnp.maximum(hf @ raw["fc1_w"].T + raw["fc1_b"], 0.0)
    return h1 @ raw["fc2_w"].T + raw["fc2_b"]


if __name__ == "__main__":
    key = jax.random.PRNGKey(0)
    pkey, xkey = jax.random.split(key)
    raw_params = init_raw_params(pkey)
    kparams = prepare_kernel_params(raw_params)

    batch = 2
    x = jax.random.normal(xkey, (batch, INST_LENGTH, CONTEXT_LENGTH),
                          jnp.float32)

    out = cnn5_forward(x, kparams)
    out = jax.block_until_ready(out)
    assert out.shape == (batch, OUT), out.shape
    assert out.dtype == jnp.float32

    ref = reference_forward(x, raw_params)
    max_err = float(jnp.max(jnp.abs(out - ref)))
    assert max_err < 0.1, f"max abs err vs f32 reference too large: {max_err}"
    print("KERNEL_OK")
</pallas_src>

<mosaic_0001>
module attributes {stable_mosaic.version = 11 : i64} {
  func.func @_cnn5_fused_kernel(%arg0: i32, %arg1: memref<8x39x94xf32, #tpu.memory_space<vmem>>, %arg2: memref<3x8x39xbf16, #tpu.memory_space<vmem>>, %arg3: memref<8x1xf32, #tpu.memory_space<vmem>>, %arg4: memref<3x8x8xbf16, #tpu.memory_space<vmem>>, %arg5: memref<8x1xf32, #tpu.memory_space<vmem>>, %arg6: memref<3x8x8xbf16, #tpu.memory_space<vmem>>, %arg7: memref<8x1xf32, #tpu.memory_space<vmem>>, %arg8: memref<3x8x8xbf16, #tpu.memory_space<vmem>>, %arg9: memref<8x1xf32, #tpu.memory_space<vmem>>, %arg10: memref<3x8x8xbf16, #tpu.memory_space<vmem>>, %arg11: memref<8x1xf32, #tpu.memory_space<vmem>>, %arg12: memref<8x128x32xbf16, #tpu.memory_space<vmem>>, %arg13: memref<1x32xf32, #tpu.memory_space<vmem>>, %arg14: memref<32x4xbf16, #tpu.memory_space<vmem>>, %arg15: memref<1x4xf32, #tpu.memory_space<vmem>>, %arg16: memref<8x4xf32, #tpu.memory_space<vmem>>, %arg17: memref<39x1024xf32, #tpu.memory_space<vmem>>, %arg18: memref<8x8x128xf32, #tpu.memory_space<vmem>>) attributes {dimension_semantics = [#tpu.dimension_semantics<parallel>], iteration_bounds = array<i64: 1>, scalar_prefetch = 0 : i64, scratch_operands = 2 : i64, tpu.core_type = #tpu.core_type<tc>, window_params = [{transform_indices = @transform_0, window_bounds = array<i64: 8, 39, 94>}, {pipeline_mode = #tpu.pipeline_mode<synchronous>, transform_indices = @transform_1, window_bounds = array<i64: 3, 8, 39>}, {pipeline_mode = #tpu.pipeline_mode<synchronous>, transform_indices = @transform_2, window_bounds = array<i64: 8, 1>}, {pipeline_mode = #tpu.pipeline_mode<synchronous>, transform_indices = @transform_3, window_bounds = array<i64: 3, 8, 8>}, {pipeline_mode = #tpu.pipeline_mode<synchronous>, transform_indices = @transform_4, window_bounds = array<i64: 8, 1>}, {pipeline_mode = #tpu.pipeline_mode<synchronous>, transform_indices = @transform_5, window_bounds = array<i64: 3, 8, 8>}, {pipeline_mode = #tpu.pipeline_mode<synchronous>, transform_indices = @transform_6, window_bounds = array<i64: 8, 1>}, {pipeline_mode = #tpu.pipeline_mode<synchronous>, transform_indices = @transform_7, window_bounds = array<i64: 3, 8, 8>}, {pipeline_mode = #tpu.pipeline_mode<synchronous>, transform_indices = @transform_8, window_bounds = array<i64: 8, 1>}, {pipeline_mode = #tpu.pipeline_mode<synchronous>, transform_indices = @transform_9, window_bounds = array<i64: 3, 8, 8>}, {pipeline_mode = #tpu.pipeline_mode<synchronous>, transform_indices = @transform_10, window_bounds = array<i64: 8, 1>}, {pipeline_mode = #tpu.pipeline_mode<synchronous>, transform_indices = @transform_11, window_bounds = array<i64: 8, 128, 32>}, {pipeline_mode = #tpu.pipeline_mode<synchronous>, transform_indices = @transform_12, window_bounds = array<i64: 1, 32>}, {pipeline_mode = #tpu.pipeline_mode<synchronous>, transform_indices = @transform_13, window_bounds = array<i64: 32, 4>}, {pipeline_mode = #tpu.pipeline_mode<synchronous>, transform_indices = @transform_14, window_bounds = array<i64: 1, 4>}, {transform_indices = @transform_15, window_bounds = array<i64: 8, 4>}]} {
    %cst = arith.constant 0.000000e+00 : f32
    %0 = vector.broadcast %cst : f32 to vector<39x1024xf32>
    %c0 = arith.constant 0 : index
    %c0_0 = arith.constant 0 : index
    %1 = vector.load %arg17[%c0, %c0_0] : memref<39x1024xf32, #tpu.memory_space<vmem>>, vector<39x1024xf32>
    tpu.vector_store %arg17[%c0, %c0_0], %0 {strides = array<i32>} : memref<39x1024xf32, #tpu.memory_space<vmem>>, vector<39x1024xf32>,
    %c0_1 = arith.constant 0 : index
    %c0_2 = arith.constant 0 : index
    %c0_3 = arith.constant 0 : index
    %2 = vector.load %arg1[%c0_1, %c0_2, %c0_3] : memref<8x39x94xf32, #tpu.memory_space<vmem>>, vector<1x39x94xf32>
    %3 = vector.shape_cast %2 : vector<1x39x94xf32> to vector<39x94xf32>
    %c0_4 = arith.constant 0 : index
    %c0_5 = arith.constant 0 : index
    %4 = vector.load %arg17[%c0_4, %c0_5] : memref<39x1024xf32, #tpu.memory_space<vmem>>, vector<39x94xf32>
    tpu.vector_store %arg17[%c0_4, %c0_5], %3 {strides = array<i32>} : memref<39x1024xf32, #tpu.memory_space<vmem>>, vector<39x94xf32>,
    %c1 = arith.constant 1 : index
    %c0_6 = arith.constant 0 : index
    %c0_7 = arith.constant 0 : index
    %5 = vector.load %arg1[%c1, %c0_6, %c0_7] : memref<8x39x94xf32, #tpu.memory_space<vmem>>, vector<1x39x94xf32>
    %6 = vector.shape_cast %5 : vector<1x39x94xf32> to vector<39x94xf32>
    %c0_8 = arith.constant 0 : index
    %c128 = arith.constant 128 : index
    %7 = vector.load %arg17[%c0_8, %c128] : memref<39x1024xf32, #tpu.memory_space<vmem>>, vector<39x94xf32>
    tpu.vector_store %arg17[%c0_8, %c128], %6 {strides = array<i32>} : memref<39x1024xf32, #tpu.memory_space<vmem>>, vector<39x94xf32>,
    %c2 = arith.constant 2 : index
    %c0_9 = arith.constant 0 : index
    %c0_10 = arith.constant 0 : index
    %8 = vector.load %arg1[%c2, %c0_9, %c0_10] : memref<8x39x94xf32, #tpu.memory_space<vmem>>, vector<1x39x94xf32>
    %9 = vector.shape_cast %8 : vector<1x39x94xf32> to vector<39x94xf32>
    %c0_11 = arith.constant 0 : index
    %c256 = arith.constant 256 : index
    %10 = vector.load %arg17[%c0_11, %c256] : memref<39x1024xf32, #tpu.memory_space<vmem>>, vector<39x94xf32>
    tpu.vector_store %arg17[%c0_11, %c256], %9 {strides = array<i32>} : memref<39x1024xf32, #tpu.memory_space<vmem>>, vector<39x94xf32>,
    %c3 = arith.constant 3 : index
    %c0_12 = arith.constant 0 : index
    %c0_13 = arith.constant 0 : index
    %11 = vector.load %arg1[%c3, %c0_12, %c0_13] : memref<8x39x94xf32, #tpu.memory_space<vmem>>, vector<1x39x94xf32>
    %12 = vector.shape_cast %11 : vector<1x39x94xf32> to vector<39x94xf32>
    %c0_14 = arith.constant 0 : index
    %c384 = arith.constant 384 : index
    %13 = vector.load %arg17[%c0_14, %c384] : memref<39x1024xf32, #tpu.memory_space<vmem>>, vector<39x94xf32>
    tpu.vector_store %arg17[%c0_14, %c384], %12 {strides = array<i32>} : memref<39x1024xf32, #tpu.memory_space<vmem>>, vector<39x94xf32>,
    %c4 = arith.constant 4 : index
    %c0_15 = arith.constant 0 : index
    %c0_16 = arith.constant 0 : index
    %14 = vector.load %arg1[%c4, %c0_15, %c0_16] : memref<8x39x94xf32, #tpu.memory_space<vmem>>, vector<1x39x94xf32>
    %15 = vector.shape_cast %14 : vector<1x39x94xf32> to vector<39x94xf32>
    %c0_17 = arith.constant 0 : index
    %c512 = arith.constant 512 : index
    %16 = vector.load %arg17[%c0_17, %c512] : memref<39x1024xf32, #tpu.memory_space<vmem>>, vector<39x94xf32>
    tpu.vector_store %arg17[%c0_17, %c512], %15 {strides = array<i32>} : memref<39x1024xf32, #tpu.memory_space<vmem>>, vector<39x94xf32>,
    %c5 = arith.constant 5 : index
    %c0_18 = arith.constant 0 : index
    %c0_19 = arith.constant 0 : index
    %17 = vector.load %arg1[%c5, %c0_18, %c0_19] : memref<8x39x94xf32, #tpu.memory_space<vmem>>, vector<1x39x94xf32>
    %18 = vector.shape_cast %17 : vector<1x39x94xf32> to vector<39x94xf32>
    %c0_20 = arith.constant 0 : index
    %c640 = arith.constant 640 : index
    %19 = vector.load %arg17[%c0_20, %c640] : memref<39x1024xf32, #tpu.memory_space<vmem>>, vector<39x94xf32>
    tpu.vector_store %arg17[%c0_20, %c640], %18 {strides = array<i32>} : memref<39x1024xf32, #tpu.memory_space<vmem>>, vector<39x94xf32>,
    %c6 = arith.constant 6 : index
    %c0_21 = arith.constant 0 : index
    %c0_22 = arith.constant 0 : index
    %20 = vector.load %arg1[%c6, %c0_21, %c0_22] : memref<8x39x94xf32, #tpu.memory_space<vmem>>, vector<1x39x94xf32>
    %21 = vector.shape_cast %20 : vector<1x39x94xf32> to vector<39x94xf32>
    %c0_23 = arith.constant 0 : index
    %c768 = arith.constant 768 : index
    %22 = vector.load %arg17[%c0_23, %c768] : memref<39x1024xf32, #tpu.memory_space<vmem>>, vector<39x94xf32>
    tpu.vector_store %arg17[%c0_23, %c768], %21 {strides = array<i32>} : memref<39x1024xf32, #tpu.memory_space<vmem>>, vector<39x94xf32>,
    %c7 = arith.constant 7 : index
    %c0_24 = arith.constant 0 : index
    %c0_25 = arith.constant 0 : index
    %23 = vector.load %arg1[%c7, %c0_24, %c0_25] : memref<8x39x94xf32, #tpu.memory_space<vmem>>, vector<1x39x94xf32>
    %24 = vector.shape_cast %23 : vector<1x39x94xf32> to vector<39x94xf32>
    %c0_26 = arith.constant 0 : index
    %c896 = arith.constant 896 : index
    %25 = vector.load %arg17[%c0_26, %c896] : memref<39x1024xf32, #tpu.memory_space<vmem>>, vector<39x94xf32>
    tpu.vector_store %arg17[%c0_26, %c896], %24 {strides = array<i32>} : memref<39x1024xf32, #tpu.memory_space<vmem>>, vector<39x94xf32>,
    %c0_27 = arith.constant 0 : index
    %c0_28 = arith.constant 0 : index
    %26 = vector.load %arg17[%c0_27, %c0_28] : memref<39x1024xf32, #tpu.memory_space<vmem>>, vector<39x1024xf32>
    %27 = arith.truncf %26 : vector<39x1024xf32> to vector<39x1024xbf16>
    %c0_29 = arith.constant 0 : index
    %c0_30 = arith.constant 0 : index
    %c0_31 = arith.constant 0 : index
    %28 = vector.load %arg2[%c0_29, %c0_30, %c0_31] : memref<3x8x39xbf16, #tpu.memory_space<vmem>>, vector<1x8x39xbf16>
    %29 = vector.shape_cast %28 : vector<1x8x39xbf16> to vector<8x39xbf16>
    %cst_32 = arith.constant dense<0.000000e+00> : vector<8x1024xf32>
    %30 = tpu.matmul %29, %27, %cst_32 {dimension_numbers = #tpu.dot_dimension_numbers<[1], [0], [0], [1], [0, 0, 1, 1], [], []>} : vector<8x39xbf16>, vector<39x1024xbf16>, vector<8x1024xf32> -> vector<8x1024xf32>
    %c1_33 = arith.constant 1 : index
    %c0_34 = arith.constant 0 : index
    %c0_35 = arith.constant 0 : index
    %31 = vector.load %arg2[%c1_33, %c0_34, %c0_35] : memref<3x8x39xbf16, #tpu.memory_space<vmem>>, vector<1x8x39xbf16>
    %32 = vector.shape_cast %31 : vector<1x8x39xbf16> to vector<8x39xbf16>
    %cst_36 = arith.constant dense<0.000000e+00> : vector<8x1024xf32>
    %33 = tpu.matmul %32, %27, %cst_36 {dimension_numbers = #tpu.dot_dimension_numbers<[1], [0], [0], [1], [0, 0, 1, 1], [], []>} : vector<8x39xbf16>, vector<39x1024xbf16>, vector<8x1024xf32> -> vector<8x1024xf32>
    %c1023_i32 = arith.constant 1023 : i32
    %34 = tpu.dynamic_rotate %33 by %c1023_i32 dim 1 : vector<8x1024xf32>, i32 -> vector<8x1024xf32>
    %35 = arith.addf %30, %34 : vector<8x1024xf32>
    %c2_37 = arith.constant 2 : index
    %c0_38 = arith.constant 0 : index
    %c0_39 = arith.constant 0 : index
    %36 = vector.load %arg2[%c2_37, %c0_38, %c0_39] : memref<3x8x39xbf16, #tpu.memory_space<vmem>>, vector<1x8x39xbf16>
    %37 = vector.shape_cast %36 : vector<1x8x39xbf16> to vector<8x39xbf16>
    %cst_40 = arith.constant dense<0.000000e+00> : vector<8x1024xf32>
    %38 = tpu.matmul %37, %27, %cst_40 {dimension_numbers = #tpu.dot_dimension_numbers<[1], [0], [0], [1], [0, 0, 1, 1], [], []>} : vector<8x39xbf16>, vector<39x1024xbf16>, vector<8x1024xf32> -> vector<8x1024xf32>
    %c1022_i32 = arith.constant 1022 : i32
    %39 = tpu.dynamic_rotate %38 by %c1022_i32 dim 1 : vector<8x1024xf32>, i32 -> vector<8x1024xf32>
    %40 = arith.addf %35, %39 : vector<8x1024xf32>
    %c0_41 = arith.constant 0 : index
    %c0_42 = arith.constant 0 : index
    %41 = vector.load %arg3[%c0_41, %c0_42] : memref<8x1xf32, #tpu.memory_space<vmem>>, vector<8x1xf32>
    %42 = vector.broadcast %41 : vector<8x1xf32> to vector<8x1024xf32>
    %43 = arith.addf %40, %42 : vector<8x1024xf32>
    %cst_43 = arith.constant 0.000000e+00 : f32
    %44 = vector.broadcast %cst_43 : f32 to vector<8x1024xf32>
    %45 = arith.maximumf %43, %44 : vector<8x1024xf32>
    %46 = arith.truncf %45 : vector<8x1024xf32> to vector<8x1024xbf16>
    %c0_44 = arith.constant 0 : index
    %c0_45 = arith.constant 0 : index
    %c0_46 = arith.constant 0 : index
    %47 = vector.load %arg4[%c0_44, %c0_45, %c0_46] : memref<3x8x8xbf16, #tpu.memory_space<vmem>>, vector<1x8x8xbf16>
    %48 = vector.shape_cast %47 : vector<1x8x8xbf16> to vector<8x8xbf16>
    %cst_47 = arith.constant dense<0.000000e+00> : vector<8x1024xf32>
    %49 = tpu.matmul %48, %46, %cst_47 {dimension_numbers = #tpu.dot_dimension_numbers<[1], [0], [0], [1], [0, 0, 1, 1], [], []>} : vector<8x8xbf16>, vector<8x1024xbf16>, vector<8x1024xf32> -> vector<8x1024xf32>
    %c1_48 = arith.constant 1 : index
    %c0_49 = arith.constant 0 : index
    %c0_50 = arith.constant 0 : index
    %50 = vector.load %arg4[%c1_48, %c0_49, %c0_50] : memref<3x8x8xbf16, #tpu.memory_space<vmem>>, vector<1x8x8xbf16>
    %51 = vector.shape_cast %50 : vector<1x8x8xbf16> to vector<8x8xbf16>
    %cst_51 = arith.constant dense<0.000000e+00> : vector<8x1024xf32>
    %52 = tpu.matmul %51, %46, %cst_51 {dimension_numbers = #tpu.dot_dimension_numbers<[1], [0], [0], [1], [0, 0, 1, 1], [], []>} : vector<8x8xbf16>, vector<8x1024xbf16>, vector<8x1024xf32> -> vector<8x1024xf32>
    %c1023_i32_52 = arith.constant 1023 : i32
    %53 = tpu.dynamic_rotate %52 by %c1023_i32_52 dim 1 : vector<8x1024xf32>, i32 -> vector<8x1024xf32>
    %54 = arith.addf %49, %53 : vector<8x1024xf32>
    %c2_53 = arith.constant 2 : index
    %c0_54 = arith.constant 0 : index
    %c0_55 = arith.constant 0 : index
    %55 = vector.load %arg4[%c2_53, %c0_54, %c0_55] : memref<3x8x8xbf16, #tpu.memory_space<vmem>>, vector<1x8x8xbf16>
    %56 = vector.shape_cast %55 : vector<1x8x8xbf16> to vector<8x8xbf16>
    %cst_56 = arith.constant dense<0.000000e+00> : vector<8x1024xf32>
    %57 = tpu.matmul %56, %46, %cst_56 {dimension_numbers = #tpu.dot_dimension_numbers<[1], [0], [0], [1], [0, 0, 1, 1], [], []>} : vector<8x8xbf16>, vector<8x1024xbf16>, vector<8x1024xf32> -> vector<8x1024xf32>
    %c1022_i32_57 = arith.constant 1022 : i32
    %58 = tpu.dynamic_rotate %57 by %c1022_i32_57 dim 1 : vector<8x1024xf32>, i32 -> vector<8x1024xf32>
    %59 = arith.addf %54, %58 : vector<8x1024xf32>
    %c0_58 = arith.constant 0 : index
    %c0_59 = arith.constant 0 : index
    %60 = vector.load %arg5[%c0_58, %c0_59] : memref<8x1xf32, #tpu.memory_space<vmem>>, vector<8x1xf32>
    %61 = vector.broadcast %60 : vector<8x1xf32> to vector<8x1024xf32>
    %62 = arith.addf %59, %61 : vector<8x1024xf32>
    %cst_60 = arith.constant 0.000000e+00 : f32
    %63 = vector.broadcast %cst_60 : f32 to vector<8x1024xf32>
    %64 = arith.maximumf %62, %63 : vector<8x1024xf32>
    %65 = arith.truncf %64 : vector<8x1024xf32> to vector<8x1024xbf16>
    %c0_61 = arith.constant 0 : index
    %c0_62 = arith.constant 0 : index
    %c0_63 = arith.constant 0 : index
    %66 = vector.load %arg6[%c0_61, %c0_62, %c0_63] : memref<3x8x8xbf16, #tpu.memory_space<vmem>>, vector<1x8x8xbf16>
    %67 = vector.shape_cast %66 : vector<1x8x8xbf16> to vector<8x8xbf16>
    %cst_64 = arith.constant dense<0.000000e+00> : vector<8x1024xf32>
    %68 = tpu.matmul %67, %65, %cst_64 {dimension_numbers = #tpu.dot_dimension_numbers<[1], [0], [0], [1], [0, 0, 1, 1], [], []>} : vector<8x8xbf16>, vector<8x1024xbf16>, vector<8x1024xf32> -> vector<8x1024xf32>
    %c1_65 = arith.constant 1 : index
    %c0_66 = arith.constant 0 : index
    %c0_67 = arith.constant 0 : index
    %69 = vector.load %arg6[%c1_65, %c0_66, %c0_67] : memref<3x8x8xbf16, #tpu.memory_space<vmem>>, vector<1x8x8xbf16>
    %70 = vector.shape_cast %69 : vector<1x8x8xbf16> to vector<8x8xbf16>
    %cst_68 = arith.constant dense<0.000000e+00> : vector<8x1024xf32>
    %71 = tpu.matmul %70, %65, %cst_68 {dimension_numbers = #tpu.dot_dimension_numbers<[1], [0], [0], [1], [0, 0, 1, 1], [], []>} : vector<8x8xbf16>, vector<8x1024xbf16>, vector<8x1024xf32> -> vector<8x1024xf32>
    %c1023_i32_69 = arith.constant 1023 : i32
    %72 = tpu.dynamic_rotate %71 by %c1023_i32_69 dim 1 : vector<8x1024xf32>, i32 -> vector<8x1024xf32>
    %73 = arith.addf %68, %72 : vector<8x1024xf32>
    %c2_70 = arith.constant 2 : index
    %c0_71 = arith.constant 0 : index
    %c0_72 = arith.constant 0 : index
    %74 = vector.load %arg6[%c2_70, %c0_71, %c0_72] : memref<3x8x8xbf16, #tpu.memory_space<vmem>>, vector<1x8x8xbf16>
    %75 = vector.shape_cast %74 : vector<1x8x8xbf16> to vector<8x8xbf16>
    %cst_73 = arith.constant dense<0.000000e+00> : vector<8x1024xf32>
    %76 = tpu.matmul %75, %65, %cst_73 {dimension_numbers = #tpu.dot_dimension_numbers<[1], [0], [0], [1], [0, 0, 1, 1], [], []>} : vector<8x8xbf16>, vector<8x1024xbf16>, vector<8x1024xf32> -> vector<8x1024xf32>
    %c1022_i32_74 = arith.constant 1022 : i32
    %77 = tpu.dynamic_rotate %76 by %c1022_i32_74 dim 1 : vector<8x1024xf32>, i32 -> vector<8x1024xf32>
    %78 = arith.addf %73, %77 : vector<8x1024xf32>
    %c0_75 = arith.constant 0 : index
    %c0_76 = arith.constant 0 : index
    %79 = vector.load %arg7[%c0_75, %c0_76] : memref<8x1xf32, #tpu.memory_space<vmem>>, vector<8x1xf32>
    %80 = vector.broadcast %79 : vector<8x1xf32> to vector<8x1024xf32>
    %81 = arith.addf %78, %80 : vector<8x1024xf32>
    %cst_77 = arith.constant 0.000000e+00 : f32
    %82 = vector.broadcast %cst_77 : f32 to vector<8x1024xf32>
    %83 = arith.maximumf %81, %82 : vector<8x1024xf32>
    %84 = arith.truncf %83 : vector<8x1024xf32> to vector<8x1024xbf16>
    %c0_78 = arith.constant 0 : index
    %c0_79 = arith.constant 0 : index
    %c0_80 = arith.constant 0 : index
    %85 = vector.load %arg8[%c0_78, %c0_79, %c0_80] : memref<3x8x8xbf16, #tpu.memory_space<vmem>>, vector<1x8x8xbf16>
    %86 = vector.shape_cast %85 : vector<1x8x8xbf16> to vector<8x8xbf16>
    %cst_81 = arith.constant dense<0.000000e+00> : vector<8x1024xf32>
    %87 = tpu.matmul %86, %84, %cst_81 {dimension_numbers = #tpu.dot_dimension_numbers<[1], [0], [0], [1], [0, 0, 1, 1], [], []>} : vector<8x8xbf16>, vector<8x1024xbf16>, vector<8x1024xf32> -> vector<8x1024xf32>
    %c1_82 = arith.constant 1 : index
    %c0_83 = arith.constant 0 : index
    %c0_84 = arith.constant 0 : index
    %88 = vector.load %arg8[%c1_82, %c0_83, %c0_84] : memref<3x8x8xbf16, #tpu.memory_space<vmem>>, vector<1x8x8xbf16>
    %89 = vector.shape_cast %88 : vector<1x8x8xbf16> to vector<8x8xbf16>
    %cst_85 = arith.constant dense<0.000000e+00> : vector<8x1024xf32>
    %90 = tpu.matmul %89, %84, %cst_85 {dimension_numbers = #tpu.dot_dimension_numbers<[1], [0], [0], [1], [0, 0, 1, 1], [], []>} : vector<8x8xbf16>, vector<8x1024xbf16>, vector<8x1024xf32> -> vector<8x1024xf32>
    %c1023_i32_86 = arith.constant 1023 : i32
    %91 = tpu.dynamic_rotate %90 by %c1023_i32_86 dim 1 : vector<8x1024xf32>, i32 -> vector<8x1024xf32>
    %92 = arith.addf %87, %91 : vector<8x1024xf32>
    %c2_87 = arith.constant 2 : index
    %c0_88 = arith.constant 0 : index
    %c0_89 = arith.constant 0 : index
    %93 = vector.load %arg8[%c2_87, %c0_88, %c0_89] : memref<3x8x8xbf16, #tpu.memory_space<vmem>>, vector<1x8x8xbf16>
    %94 = vector.shape_cast %93 : vector<1x8x8xbf16> to vector<8x8xbf16>
    %cst_90 = arith.constant dense<0.000000e+00> : vector<8x1024xf32>
    %95 = tpu.matmul %94, %84, %cst_90 {dimension_numbers = #tpu.dot_dimension_numbers<[1], [0], [0], [1], [0, 0, 1, 1], [], []>} : vector<8x8xbf16>, vector<8x1024xbf16>, vector<8x1024xf32> -> vector<8x1024xf32>
    %c1022_i32_91 = arith.constant 1022 : i32
    %96 = tpu.dynamic_rotate %95 by %c1022_i32_91 dim 1 : vector<8x1024xf32>, i32 -> vector<8x1024xf32>
    %97 = arith.addf %92, %96 : vector<8x1024xf32>
    %c0_92 = arith.constant 0 : index
    %c0_93 = arith.constant 0 : index
    %98 = vector.load %arg9[%c0_92, %c0_93] : memref<8x1xf32, #tpu.memory_space<vmem>>, vector<8x1xf32>
    %99 = vector.broadcast %98 : vector<8x1xf32> to vector<8x1024xf32>
    %100 = arith.addf %97, %99 : vector<8x1024xf32>
    %cst_94 = arith.constant 0.000000e+00 : f32
    %101 = vector.broadcast %cst_94 : f32 to vector<8x1024xf32>
    %102 = arith.maximumf %100, %101 : vector<8x1024xf32>
    %103 = arith.truncf %102 : vector<8x1024xf32> to vector<8x1024xbf16>
    %c0_95 = arith.constant 0 : index
    %c0_96 = arith.constant 0 : index
    %c0_97 = arith.constant 0 : index
    %104 = vector.load %arg10[%c0_95, %c0_96, %c0_97] : memref<3x8x8xbf16, #tpu.memory_space<vmem>>, vector<1x8x8xbf16>
    %105 = vector.shape_cast %104 : vector<1x8x8xbf16> to vector<8x8xbf16>
    %cst_98 = arith.constant dense<0.000000e+00> : vector<8x1024xf32>
    %106 = tpu.matmul %105, %103, %cst_98 {dimension_numbers = #tpu.dot_dimension_numbers<[1], [0], [0], [1], [0, 0, 1, 1], [], []>} : vector<8x8xbf16>, vector<8x1024xbf16>, vector<8x1024xf32> -> vector<8x1024xf32>
    %c1_99 = arith.constant 1 : index
    %c0_100 = arith.constant 0 : index
    %c0_101 = arith.constant 0 : index
    %107 = vector.load %arg10[%c1_99, %c0_100, %c0_101] : memref<3x8x8xbf16, #tpu.memory_space<vmem>>, vector<1x8x8xbf16>
    %108 = vector.shape_cast %107 : vector<1x8x8xbf16> to vector<8x8xbf16>
    %cst_102 = arith.constant dense<0.000000e+00> : vector<8x1024xf32>
    %109 = tpu.matmul %108, %103, %cst_102 {dimension_numbers = #tpu.dot_dimension_numbers<[1], [0], [0], [1], [0, 0, 1, 1], [], []>} : vector<8x8xbf16>, vector<8x1024xbf16>, vector<8x1024xf32> -> vector<8x1024xf32>
    %c1023_i32_103 = arith.constant 1023 : i32
    %110 = tpu.dynamic_rotate %109 by %c1023_i32_103 dim 1 : vector<8x1024xf32>, i32 -> vector<8x1024xf32>
    %111 = arith.addf %106, %110 : vector<8x1024xf32>
    %c2_104 = arith.constant 2 : index
    %c0_105 = arith.constant 0 : index
    %c0_106 = arith.constant 0 : index
    %112 = vector.load %arg10[%c2_104, %c0_105, %c0_106] : memref<3x8x8xbf16, #tpu.memory_space<vmem>>, vector<1x8x8xbf16>
    %113 = vector.shape_cast %112 : vector<1x8x8xbf16> to vector<8x8xbf16>
    %cst_107 = arith.constant dense<0.000000e+00> : vector<8x1024xf32>
    %114 = tpu.matmul %113, %103, %cst_107 {dimension_numbers = #tpu.dot_dimension_numbers<[1], [0], [0], [1], [0, 0, 1, 1], [], []>} : vector<8x8xbf16>, vector<8x1024xbf16>, vector<8x1024xf32> -> vector<8x1024xf32>
    %c1022_i32_108 = arith.constant 1022 : i32
    %115 = tpu.dynamic_rotate %114 by %c1022_i32_108 dim 1 : vector<8x1024xf32>, i32 -> vector<8x1024xf32>
    %116 = arith.addf %111, %115 : vector<8x1024xf32>
    %c0_109 = arith.constant 0 : index
    %c0_110 = arith.constant 0 : index
    %117 = vector.load %arg11[%c0_109, %c0_110] : memref<8x1xf32, #tpu.memory_space<vmem>>, vector<8x1xf32>
    %118 = vector.broadcast %117 : vector<8x1xf32> to vector<8x1024xf32>
    %119 = arith.addf %116, %118 : vector<8x1024xf32>
    %cst_111 = arith.constant 0.000000e+00 : f32
    %120 = vector.broadcast %cst_111 : f32 to vector<8x1024xf32>
    %121 = arith.maximumf %119, %120 : vector<8x1024xf32>
    %122 = vector.extract_strided_slice %121 {offsets = [0, 0], sizes = [8, 128], strides = [1, 1]} : vector<8x1024xf32> to vector<8x128xf32>
    %c0_112 = arith.constant 0 : index
    %c0_113 = arith.constant 0 : index
    %c0_114 = arith.constant 0 : index
    %123 = vector.load %arg18[%c0_112, %c0_113, %c0_114] : memref<8x8x128xf32, #tpu.memory_space<vmem>>, vector<1x8x128xf32>
    %124 = vector.shape_cast %123 : vector<1x8x128xf32> to vector<8x128xf32>
    %125 = vector.shape_cast %122 : vector<8x128xf32> to vector<1x8x128xf32>
    tpu.vector_store %arg18[%c0_112, %c0_113, %c0_114], %125 {strides = array<i32>} : memref<8x8x128xf32, #tpu.memory_space<vmem>>, vector<1x8x128xf32>,
    %126 = vector.extract_strided_slice %121 {offsets = [0, 128], sizes = [8, 128], strides = [1, 1]} : vector<8x1024xf32> to vector<8x128xf32>
    %c1_115 = arith.constant 1 : index
    %c0_116 = arith.constant 0 : index
    %c0_117 = arith.constant 0 : index
    %127 = vector.load %arg18[%c1_115, %c0_116, %c0_117] : memref<8x8x128xf32, #tpu.memory_space<vmem>>, vector<1x8x128xf32>
    %128 = vector.shape_cast %127 : vector<1x8x128xf32> to vector<8x128xf32>
    %129 = vector.shape_cast %126 : vector<8x128xf32> to vector<1x8x128xf32>
    tpu.vector_store %arg18[%c1_115, %c0_116, %c0_117], %129 {strides = array<i32>} : memref<8x8x128xf32, #tpu.memory_space<vmem>>, vector<1x8x128xf32>,
    %130 = vector.extract_strided_slice %121 {offsets = [0, 256], sizes = [8, 128], strides = [1, 1]} : vector<8x1024xf32> to vector<8x128xf32>
    %c2_118 = arith.constant 2 : index
    %c0_119 = arith.constant 0 : index
    %c0_120 = arith.constant 0 : index
    %131 = vector.load %arg18[%c2_118, %c0_119, %c0_120] : memref<8x8x128xf32, #tpu.memory_space<vmem>>, vector<1x8x128xf32>
    %132 = vector.shape_cast %131 : vector<1x8x128xf32> to vector<8x128xf32>
    %133 = vector.shape_cast %130 : vector<8x128xf32> to vector<1x8x128xf32>
    tpu.vector_store %arg18[%c2_118, %c0_119, %c0_120], %133 {strides = array<i32>} : memref<8x8x128xf32, #tpu.memory_space<vmem>>, vector<1x8x128xf32>,
    %134 = vector.extract_strided_slice %121 {offsets = [0, 384], sizes = [8, 128], strides = [1, 1]} : vector<8x1024xf32> to vector<8x128xf32>
    %c3_121 = arith.constant 3 : index
    %c0_122 = arith.constant 0 : index
    %c0_123 = arith.constant 0 : index
    %135 = vector.load %arg18[%c3_121, %c0_122, %c0_123] : memref<8x8x128xf32, #tpu.memory_space<vmem>>, vector<1x8x128xf32>
    %136 = vector.shape_cast %135 : vector<1x8x128xf32> to vector<8x128xf32>
    %137 = vector.shape_cast %134 : vector<8x128xf32> to vector<1x8x128xf32>
    tpu.vector_store %arg18[%c3_121, %c0_122, %c0_123], %137 {strides = array<i32>} : memref<8x8x128xf32, #tpu.memory_space<vmem>>, vector<1x8x128xf32>,
    %138 = vector.extract_strided_slice %121 {offsets = [0, 512], sizes = [8, 128], strides = [1, 1]} : vector<8x1024xf32> to vector<8x128xf32>
    %c4_124 = arith.constant 4 : index
    %c0_125 = arith.constant 0 : index
    %c0_126 = arith.constant 0 : index
    %139 = vector.load %arg18[%c4_124, %c0_125, %c0_126] : memref<8x8x128xf32, #tpu.memory_space<vmem>>, vector<1x8x128xf32>
    %140 = vector.shape_cast %139 : vector<1x8x128xf32> to vector<8x128xf32>
    %141 = vector.shape_cast %138 : vector<8x128xf32> to vector<1x8x128xf32>
    tpu.vector_store %arg18[%c4_124, %c0_125, %c0_126], %141 {strides = array<i32>} : memref<8x8x128xf32, #tpu.memory_space<vmem>>, vector<1x8x128xf32>,
    %142 = vector.extract_strided_slice %121 {offsets = [0, 640], sizes = [8, 128], strides = [1, 1]} : vector<8x1024xf32> to vector<8x128xf32>
    %c5_127 = arith.constant 5 : index
    %c0_128 = arith.constant 0 : index
    %c0_129 = arith.constant 0 : index
    %143 = vector.load %arg18[%c5_127, %c0_128, %c0_129] : memref<8x8x128xf32, #tpu.memory_space<vmem>>, vector<1x8x128xf32>
    %144 = vector.shape_cast %143 : vector<1x8x128xf32> to vector<8x128xf32>
    %145 = vector.shape_cast %142 : vector<8x128xf32> to vector<1x8x128xf32>
    tpu.vector_store %arg18[%c5_127, %c0_128, %c0_129], %145 {strides = array<i32>} : memref<8x8x128xf32, #tpu.memory_space<vmem>>, vector<1x8x128xf32>,
    %146 = vector.extract_strided_slice %121 {offsets = [0, 768], sizes = [8, 128], strides = [1, 1]} : vector<8x1024xf32> to vector<8x128xf32>
    %c6_130 = arith.constant 6 : index
    %c0_131 = arith.constant 0 : index
    %c0_132 = arith.constant 0 : index
    %147 = vector.load %arg18[%c6_130, %c0_131, %c0_132] : memref<8x8x128xf32, #tpu.memory_space<vmem>>, vector<1x8x128xf32>
    %148 = vector.shape_cast %147 : vector<1x8x128xf32> to vector<8x128xf32>
    %149 = vector.shape_cast %146 : vector<8x128xf32> to vector<1x8x128xf32>
    tpu.vector_store %arg18[%c6_130, %c0_131, %c0_132], %149 {strides = array<i32>} : memref<8x8x128xf32, #tpu.memory_space<vmem>>, vector<1x8x128xf32>,
    %150 = vector.extract_strided_slice %121 {offsets = [0, 896], sizes = [8, 128], strides = [1, 1]} : vector<8x1024xf32> to vector<8x128xf32>
    %c7_133 = arith.constant 7 : index
    %c0_134 = arith.constant 0 : index
    %c0_135 = arith.constant 0 : index
    %151 = vector.load %arg18[%c7_133, %c0_134, %c0_135] : memref<8x8x128xf32, #tpu.memory_space<vmem>>, vector<1x8x128xf32>
    %152 = vector.shape_cast %151 : vector<1x8x128xf32> to vector<8x128xf32>
    %153 = vector.shape_cast %150 : vector<8x128xf32> to vector<1x8x128xf32>
    tpu.vector_store %arg18[%c7_133, %c0_134, %c0_135], %153 {strides = array<i32>} : memref<8x8x128xf32, #tpu.memory_space<vmem>>, vector<1x8x128xf32>,
    %cst_136 = arith.constant 0.000000e+00 : f32
    %154 = vector.broadcast %cst_136 : f32 to vector<8x32xf32>
    %c0_137 = arith.constant 0 : index
    %c0_138 = arith.constant 0 : index
    %c0_139 = arith.constant 0 : index
    %155 = vector.load %arg18[%c0_137, %c0_138, %c0_139] : memref<8x8x128xf32, #tpu.memory_space<vmem>>, vector<8x1x128xf32>
    %156 = vector.shape_cast %155 : vector<8x1x128xf32> to vector<8x128xf32>
    %157 = arith.truncf %156 : vector<8x128xf32> to vector<8x128xbf16>
    %c0_140 = arith.constant 0 : index
    %c0_141 = arith.constant 0 : index
    %c0_142 = arith.constant 0 : index
    %158 = vector.load %arg12[%c0_140, %c0_141, %c0_142] : memref<8x128x32xbf16, #tpu.memory_space<vmem>>, vector<1x128x32xbf16>
    %159 = vector.shape_cast %158 : vector<1x128x32xbf16> to vector<128x32xbf16>
    %cst_143 = arith.constant dense<0.000000e+00> : vector<8x32xf32>
    %160 = tpu.matmul %157, %159, %cst_143 {dimension_numbers = #tpu.dot_dimension_numbers<[1], [0], [0], [1], [0, 0, 1, 1], [], []>} : vector<8x128xbf16>, vector<128x32xbf16>, vector<8x32xf32> -> vector<8x32xf32>
    %161 = arith.addf %154, %160 : vector<8x32xf32>
    %c0_144 = arith.constant 0 : index
    %c1_145 = arith.constant 1 : index
    %c0_146 = arith.constant 0 : index
    %162 = vector.load %arg18[%c0_144, %c1_145, %c0_146] : memref<8x8x128xf32, #tpu.memory_space<vmem>>, vector<8x1x128xf32>
    %163 = vector.shape_cast %162 : vector<8x1x128xf32> to vector<8x128xf32>
    %164 = arith.truncf %163 : vector<8x128xf32> to vector<8x128xbf16>
    %c1_147 = arith.constant 1 : index
    %c0_148 = arith.constant 0 : index
    %c0_149 = arith.constant 0 : index
    %165 = vector.load %arg12[%c1_147, %c0_148, %c0_149] : memref<8x128x32xbf16, #tpu.memory_space<vmem>>, vector<1x128x32xbf16>
    %166 = vector.shape_cast %165 : vector<1x128x32xbf16> to vector<128x32xbf16>
    %cst_150 = arith.constant dense<0.000000e+00> : vector<8x32xf32>
    %167 = tpu.matmul %164, %166, %cst_150 {dimension_numbers = #tpu.dot_dimension_numbers<[1], [0], [0], [1], [0, 0, 1, 1], [], []>} : vector<8x128xbf16>, vector<128x32xbf16>, vector<8x32xf32> -> vector<8x32xf32>
    %168 = arith.addf %161, %167 : vector<8x32xf32>
    %c0_151 = arith.constant 0 : index
    %c2_152 = arith.constant 2 : index
    %c0_153 = arith.constant 0 : index
    %169 = vector.load %arg18[%c0_151, %c2_152, %c0_153] : memref<8x8x128xf32, #tpu.memory_space<vmem>>, vector<8x1x128xf32>
    %170 = vector.shape_cast %169 : vector<8x1x128xf32> to vector<8x128xf32>
    %171 = arith.truncf %170 : vector<8x128xf32> to vector<8x128xbf16>
    %c2_154 = arith.constant 2 : index
    %c0_155 = arith.constant 0 : index
    %c0_156 = arith.constant 0 : index
    %172 = vector.load %arg12[%c2_154, %c0_155, %c0_156] : memref<8x128x32xbf16, #tpu.memory_space<vmem>>, vector<1x128x32xbf16>
    %173 = vector.shape_cast %172 : vector<1x128x32xbf16> to vector<128x32xbf16>
    %cst_157 = arith.constant dense<0.000000e+00> : vector<8x32xf32>
    %174 = tpu.matmul %171, %173, %cst_157 {dimension_numbers = #tpu.dot_dimension_numbers<[1], [0], [0], [1], [0, 0, 1, 1], [], []>} : vector<8x128xbf16>, vector<128x32xbf16>, vector<8x32xf32> -> vector<8x32xf32>
    %175 = arith.addf %168, %174 : vector<8x32xf32>
    %c0_158 = arith.constant 0 : index
    %c3_159 = arith.constant 3 : index
    %c0_160 = arith.constant 0 : index
    %176 = vector.load %arg18[%c0_158, %c3_159, %c0_160] : memref<8x8x128xf32, #tpu.memory_space<vmem>>, vector<8x1x128xf32>
    %177 = vector.shape_cast %176 : vector<8x1x128xf32> to vector<8x128xf32>
    %178 = arith.truncf %177 : vector<8x128xf32> to vector<8x128xbf16>
    %c3_161 = arith.constant 3 : index
    %c0_162 = arith.constant 0 : index
    %c0_163 = arith.constant 0 : index
    %179 = vector.load %arg12[%c3_161, %c0_162, %c0_163] : memref<8x128x32xbf16, #tpu.memory_space<vmem>>, vector<1x128x32xbf16>
    %180 = vector.shape_cast %179 : vector<1x128x32xbf16> to vector<128x32xbf16>
    %cst_164 = arith.constant dense<0.000000e+00> : vector<8x32xf32>
    %181 = tpu.matmul %178, %180, %cst_164 {dimension_numbers = #tpu.dot_dimension_numbers<[1], [0], [0], [1], [0, 0, 1, 1], [], []>} : vector<8x128xbf16>, vector<128x32xbf16>, vector<8x32xf32> -> vector<8x32xf32>
    %182 = arith.addf %175, %181 : vector<8x32xf32>
    %c0_165 = arith.constant 0 : index
    %c4_166 = arith.constant 4 : index
    %c0_167 = arith.constant 0 : index
    %183 = vector.load %arg18[%c0_165, %c4_166, %c0_167] : memref<8x8x128xf32, #tpu.memory_space<vmem>>, vector<8x1x128xf32>
    %184 = vector.shape_cast %183 : vector<8x1x128xf32> to vector<8x128xf32>
    %185 = arith.truncf %184 : vector<8x128xf32> to vector<8x128xbf16>
    %c4_168 = arith.constant 4 : index
    %c0_169 = arith.constant 0 : index
    %c0_170 = arith.constant 0 : index
    %186 = vector.load %arg12[%c4_168, %c0_169, %c0_170] : memref<8x128x32xbf16, #tpu.memory_space<vmem>>, vector<1x128x32xbf16>
    %187 = vector.shape_cast %186 : vector<1x128x32xbf16> to vector<128x32xbf16>
    %cst_171 = arith.constant dense<0.000000e+00> : vector<8x32xf32>
    %188 = tpu.matmul %185, %187, %cst_171 {dimension_numbers = #tpu.dot_dimension_numbers<[1], [0], [0], [1], [0, 0, 1, 1], [], []>} : vector<8x128xbf16>, vector<128x32xbf16>, vector<8x32xf32> -> vector<8x32xf32>
    %189 = arith.addf %182, %188 : vector<8x32xf32>
    %c0_172 = arith.constant 0 : index
    %c5_173 = arith.constant 5 : index
    %c0_174 = arith.constant 0 : index
    %190 = vector.load %arg18[%c0_172, %c5_173, %c0_174] : memref<8x8x128xf32, #tpu.memory_space<vmem>>, vector<8x1x128xf32>
    %191 = vector.shape_cast %190 : vector<8x1x128xf32> to vector<8x128xf32>
    %192 = arith.truncf %191 : vector<8x128xf32> to vector<8x128xbf16>
    %c5_175 = arith.constant 5 : index
    %c0_176 = arith.constant 0 : index
    %c0_177 = arith.constant 0 : index
    %193 = vector.load %arg12[%c5_175, %c0_176, %c0_177] : memref<8x128x32xbf16, #tpu.memory_space<vmem>>, vector<1x128x32xbf16>
    %194 = vector.shape_cast %193 : vector<1x128x32xbf16> to vector<128x32xbf16>
    %cst_178 = arith.constant dense<0.000000e+00> : vector<8x32xf32>
    %195 = tpu.matmul %192, %194, %cst_178 {dimension_numbers = #tpu.dot_dimension_numbers<[1], [0], [0], [1], [0, 0, 1, 1], [], []>} : vector<8x128xbf16>, vector<128x32xbf16>, vector<8x32xf32> -> vector<8x32xf32>
    %196 = arith.addf %189, %195 : vector<8x32xf32>
    %c0_179 = arith.constant 0 : index
    %c6_180 = arith.constant 6 : index
    %c0_181 = arith.constant 0 : index
    %197 = vector.load %arg18[%c0_179, %c6_180, %c0_181] : memref<8x8x128xf32, #tpu.memory_space<vmem>>, vector<8x1x128xf32>
    %198 = vector.shape_cast %197 : vector<8x1x128xf32> to vector<8x128xf32>
    %199 = arith.truncf %198 : vector<8x128xf32> to vector<8x128xbf16>
    %c6_182 = arith.constant 6 : index
    %c0_183 = arith.constant 0 : index
    %c0_184 = arith.constant 0 : index
    %200 = vector.load %arg12[%c6_182, %c0_183, %c0_184] : memref<8x128x32xbf16, #tpu.memory_space<vmem>>, vector<1x128x32xbf16>
    %201 = vector.shape_cast %200 : vector<1x128x32xbf16> to vector<128x32xbf16>
    %cst_185 = arith.constant dense<0.000000e+00> : vector<8x32xf32>
    %202 = tpu.matmul %199, %201, %cst_185 {dimension_numbers = #tpu.dot_dimension_numbers<[1], [0], [0], [1], [0, 0, 1, 1], [], []>} : vector<8x128xbf16>, vector<128x32xbf16>, vector<8x32xf32> -> vector<8x32xf32>
    %203 = arith.addf %196, %202 : vector<8x32xf32>
    %c0_186 = arith.constant 0 : index
    %c7_187 = arith.constant 7 : index
    %c0_188 = arith.constant 0 : index
    %204 = vector.load %arg18[%c0_186, %c7_187, %c0_188] : memref<8x8x128xf32, #tpu.memory_space<vmem>>, vector<8x1x128xf32>
    %205 = vector.shape_cast %204 : vector<8x1x128xf32> to vector<8x128xf32>
    %206 = arith.truncf %205 : vector<8x128xf32> to vector<8x128xbf16>
    %c7_189 = arith.constant 7 : index
    %c0_190 = arith.constant 0 : index
    %c0_191 = arith.constant 0 : index
    %207 = vector.load %arg12[%c7_189, %c0_190, %c0_191] : memref<8x128x32xbf16, #tpu.memory_space<vmem>>, vector<1x128x32xbf16>
    %208 = vector.shape_cast %207 : vector<1x128x32xbf16> to vector<128x32xbf16>
    %cst_192 = arith.constant dense<0.000000e+00> : vector<8x32xf32>
    %209 = tpu.matmul %206, %208, %cst_192 {dimension_numbers = #tpu.dot_dimension_numbers<[1], [0], [0], [1], [0, 0, 1, 1], [], []>} : vector<8x128xbf16>, vector<128x32xbf16>, vector<8x32xf32> -> vector<8x32xf32>
    %210 = arith.addf %203, %209 : vector<8x32xf32>
    %c0_193 = arith.constant 0 : index
    %c0_194 = arith.constant 0 : index
    %211 = vector.load %arg13[%c0_193, %c0_194] : memref<1x32xf32, #tpu.memory_space<vmem>>, vector<1x32xf32>
    %212 = vector.broadcast %211 : vector<1x32xf32> to vector<8x32xf32>
    %213 = arith.addf %210, %212 : vector<8x32xf32>
    %cst_195 = arith.constant 0.000000e+00 : f32
    %214 = vector.broadcast %cst_195 : f32 to vector<8x32xf32>
    %215 = arith.maximumf %213, %214 : vector<8x32xf32>
    %216 = arith.truncf %215 : vector<8x32xf32> to vector<8x32xbf16>
    %c0_196 = arith.constant 0 : index
    %c0_197 = arith.constant 0 : index
    %217 = vector.load %arg14[%c0_196, %c0_197] : memref<32x4xbf16, #tpu.memory_space<vmem>>, vector<32x4xbf16>
    %cst_198 = arith.constant dense<0.000000e+00> : vector<8x4xf32>
    %218 = tpu.matmul %216, %217, %cst_198 {dimension_numbers = #tpu.dot_dimension_numbers<[1], [0], [0], [1], [0, 0, 1, 1], [], []>} : vector<8x32xbf16>, vector<32x4xbf16>, vector<8x4xf32> -> vector<8x4xf32>
    %c0_199 = arith.constant 0 : index
    %c0_200 = arith.constant 0 : index
    %219 = vector.load %arg15[%c0_199, %c0_200] : memref<1x4xf32, #tpu.memory_space<vmem>>, vector<1x4xf32>
    %220 = vector.broadcast %219 : vector<1x4xf32> to vector<8x4xf32>
    %221 = arith.addf %218, %220 : vector<8x4xf32>
    %c0_201 = arith.constant 0 : index
    %c0_202 = arith.constant 0 : index
    %222 = vector.load %arg16[%c0_201, %c0_202] : memref<8x4xf32, #tpu.memory_space<vmem>>, vector<8x4xf32>
    tpu.vector_store %arg16[%c0_201, %c0_202], %221 {strides = array<i32>} : memref<8x4xf32, #tpu.memory_space<vmem>>, vector<8x4xf32>,
    return
  }
  func.func @transform_0(%arg0: i32) -> (i32, i32, i32) {
    %c0_i32 = arith.constant 0 : i32
    %c0_i32_0 = arith.constant 0 : i32
    %c0_i32_1 = arith.constant 0 : i32
    return %arg0, %c0_i32, %c0_i32_0 : i32, i32, i32
  }
  func.func @transform_1(%arg0: i32) -> (i32, i32, i32) {
    %c0_i32 = arith.constant 0 : i32
    %c0_i32_0 = arith.constant 0 : i32
    %c0_i32_1 = arith.constant 0 : i32
    %c0_i32_2 = arith.constant 0 : i32
    return %c0_i32, %c0_i32_0, %c0_i32_1 : i32, i32, i32
  }
  func.func @transform_2(%arg0: i32) -> (i32, i32) {
    %c0_i32 = arith.constant 0 : i32
    %c0_i32_0 = arith.constant 0 : i32
    %c0_i32_1 = arith.constant 0 : i32
    return %c0_i32, %c0_i32_0 : i32, i32
  }
  func.func @transform_3(%arg0: i32) -> (i32, i32, i32) {
    %c0_i32 = arith.constant 0 : i32
    %c0_i32_0 = arith.constant 0 : i32
    %c0_i32_1 = arith.constant 0 : i32
    %c0_i32_2 = arith.constant 0 : i32
    return %c0_i32, %c0_i32_0, %c0_i32_1 : i32, i32, i32
  }
  func.func @transform_4(%arg0: i32) -> (i32, i32) {
    %c0_i32 = arith.constant 0 : i32
    %c0_i32_0 = arith.constant 0 : i32
    %c0_i32_1 = arith.constant 0 : i32
    return %c0_i32, %c0_i32_0 : i32, i32
  }
  func.func @transform_5(%arg0: i32) -> (i32, i32, i32) {
    %c0_i32 = arith.constant 0 : i32
    %c0_i32_0 = arith.constant 0 : i32
    %c0_i32_1 = arith.constant 0 : i32
    %c0_i32_2 = arith.constant 0 : i32
    return %c0_i32, %c0_i32_0, %c0_i32_1 : i32, i32, i32
  }
  func.func @transform_6(%arg0: i32) -> (i32, i32) {
    %c0_i32 = arith.constant 0 : i32
    %c0_i32_0 = arith.constant 0 : i32
    %c0_i32_1 = arith.constant 0 : i32
    return %c0_i32, %c0_i32_0 : i32, i32
  }
  func.func @transform_7(%arg0: i32) -> (i32, i32, i32) {
    %c0_i32 = arith.constant 0 : i32
    %c0_i32_0 = arith.constant 0 : i32
    %c0_i32_1 = arith.constant 0 : i32
    %c0_i32_2 = arith.constant 0 : i32
    return %c0_i32, %c0_i32_0, %c0_i32_1 : i32, i32, i32
  }
  func.func @transform_8(%arg0: i32) -> (i32, i32) {
    %c0_i32 = arith.constant 0 : i32
    %c0_i32_0 = arith.constant 0 : i32
    %c0_i32_1 = arith.constant 0 : i32
    return %c0_i32, %c0_i32_0 : i32, i32
  }
  func.func @transform_9(%arg0: i32) -> (i32, i32, i32) {
    %c0_i32 = arith.constant 0 : i32
    %c0_i32_0 = arith.constant 0 : i32
    %c0_i32_1 = arith.constant 0 : i32
    %c0_i32_2 = arith.constant 0 : i32
    return %c0_i32, %c0_i32_0, %c0_i32_1 : i32, i32, i32
  }
  func.func @transform_10(%arg0: i32) -> (i32, i32) {
    %c0_i32 = arith.constant 0 : i32
    %c0_i32_0 = arith.constant 0 : i32
    %c0_i32_1 = arith.constant 0 : i32
    return %c0_i32, %c0_i32_0 : i32, i32
  }
  func.func @transform_11(%arg0: i32) -> (i32, i32, i32) {
    %c0_i32 = arith.constant 0 : i32
    %c0_i32_0 = arith.constant 0 : i32
    %c0_i32_1 = arith.constant 0 : i32
    %c0_i32_2 = arith.constant 0 : i32
    return %c0_i32, %c0_i32_0, %c0_i32_1 : i32, i32, i32
  }
  func.func @transform_12(%arg0: i32) -> (i32, i32) {
    %c0_i32 = arith.constant 0 : i32
    %c0_i32_0 = arith.constant 0 : i32
    %c0_i32_1 = arith.constant 0 : i32
    return %c0_i32, %c0_i32_0 : i32, i32
  }
  func.func @transform_13(%arg0: i32) -> (i32, i32) {
    %c0_i32 = arith.constant 0 : i32
    %c0_i32_0 = arith.constant 0 : i32
    %c0_i32_1 = arith.constant 0 : i32
    return %c0_i32, %c0_i32_0 : i32, i32
  }
  func.func @transform_14(%arg0: i32) -> (i32, i32) {
    %c0_i32 = arith.constant 0 : i32
    %c0_i32_0 = arith.constant 0 : i32
    %c0_i32_1 = arith.constant 0 : i32
    return %c0_i32, %c0_i32_0 : i32, i32
  }
  func.func @transform_15(%arg0: i32) -> (i32, i32) {
    %c0_i32 = arith.constant 0 : i32
    %c0_i32_0 = arith.constant 0 : i32
    return %arg0, %c0_i32 : i32, i32
  }
}

</mosaic_0001>

<llo_original>
// kernel: cnn5_forward_fn.1
$region0: #{cnn5_forward_fn.1}
  #allocation0 [shape = 'u32[]', space=smem, size = 0x4, offset = 0x4, fixed_abs, tag = 'smem constant byte address 0x4 - core index']
  #allocation1 [shape = 'u32[144,128]{1,0:T(1,128)}', space=vmem, size = 0x12000, scoped, tag = 'internal scratch']
  #allocation2 [shape = 'f32[39,1024]{1,0:T(8,128)}', space=vmem, size = 0x28000, scoped, tag = 'scratch operand']
  #allocation3 [shape = 'f32[8,8,128]{2,1,0:T(8,128)}', space=vmem, size = 0x8000, scoped, tag = 'scratch operand']
  %s0 = inlined_call_operand.vmem [shape: f32[8,39,94], index: 0, kind: input, shape index: {}]
  %s1 = inlined_call_operand.vmem [shape: bf16[3,8,39], index: 1, kind: input, shape index: {}]
  %s2 = inlined_call_operand.vmem [shape: f32[8,1], index: 2, kind: input, shape index: {}]
  %s3 = inlined_call_operand.vmem [shape: bf16[3,8,8], index: 3, kind: input, shape index: {}]
  %s4 = inlined_call_operand.vmem [shape: f32[8,1], index: 4, kind: input, shape index: {}]
  %s5 = inlined_call_operand.vmem [shape: bf16[3,8,8], index: 5, kind: input, shape index: {}]
  %s6 = inlined_call_operand.vmem [shape: f32[8,1], index: 6, kind: input, shape index: {}]
  %s7 = inlined_call_operand.vmem [shape: bf16[3,8,8], index: 7, kind: input, shape index: {}]
  %s8 = inlined_call_operand.vmem [shape: f32[8,1], index: 8, kind: input, shape index: {}]
  %s9 = inlined_call_operand.vmem [shape: bf16[3,8,8], index: 9, kind: input, shape index: {}]
  %s10 = inlined_call_operand.vmem [shape: f32[8,1], index: 10, kind: input, shape index: {}]
  %s11 = inlined_call_operand.vmem [shape: bf16[8,128,32], index: 11, kind: input, shape index: {}]
  %s12 = inlined_call_operand.vmem [shape: f32[1,32], index: 12, kind: input, shape index: {}]
  %s13 = inlined_call_operand.vmem [shape: bf16[32,4], index: 13, kind: input, shape index: {}]
  %s14 = inlined_call_operand.vmem [shape: f32[1,4], index: 14, kind: input, shape index: {}]
  %s15 = inlined_call_operand.vmem [shape: f32[8,4], index: 15, kind: output, shape index: {}]
  %s16 = sld [smem:[#allocation0]]
  $region70: #{cnn5_forward_fn.1} parent=0
    _
  %s18 = ssub.s32 1, %s16
  %s19 = scalar_select 0, %s18, %s16
  // Predicated region
  $region2: #{cnn5_forward_fn.1} parent=0 // pred_check
    _
  $region3: #{cnn5_forward_fn.1} parent=0 // pred_check_branch
    %21 = sbr.rel (0) target = $region5
  $region4: #{cnn5_forward_fn.1} parent=0 // pred_region
    _
  $region5: #{cnn5_forward_fn.1} parent=0 // pred_fallthru
    _
  // Predicated region
  $region6: #{cnn5_forward_fn.1} parent=0 // pred_check
    _
  $region7: #{cnn5_forward_fn.1} parent=0 // pred_check_branch
    %23 = sbr.rel (0) target = $region9
  $region8: #{cnn5_forward_fn.1} parent=0 // pred_region
    _
  $region9: #{cnn5_forward_fn.1} parent=0 // pred_fallthru
    _
  // Predicated region
  $region10: #{cnn5_forward_fn.1} parent=0 // pred_check
    _
  $region11: #{cnn5_forward_fn.1} parent=0 // pred_check_branch
    %25 = sbr.rel (0) target = $region13
  $region12: #{cnn5_forward_fn.1} parent=0 // pred_region
    _
  $region13: #{cnn5_forward_fn.1} parent=0 // pred_fallthru
    _
  // Predicated region
  $region14: #{cnn5_forward_fn.1} parent=0 // pred_check
    _
  $region15: #{cnn5_forward_fn.1} parent=0 // pred_check_branch
    %27 = sbr.rel (0) target = $region17
  $region16: #{cnn5_forward_fn.1} parent=0 // pred_region
    _
  $region17: #{cnn5_forward_fn.1} parent=0 // pred_fallthru
    _
  // Predicated region
  $region18: #{cnn5_forward_fn.1} parent=0 // pred_check
    _
  $region19: #{cnn5_forward_fn.1} parent=0 // pred_check_branch
    %29 = sbr.rel (0) target = $region21
  $region20: #{cnn5_forward_fn.1} parent=0 // pred_region
    _
  $region21: #{cnn5_forward_fn.1} parent=0 // pred_fallthru
    _
  // Predicated region
  $region22: #{cnn5_forward_fn.1} parent=0 // pred_check
    _
  $region23: #{cnn5_forward_fn.1} parent=0 // pred_check_branch
    %31 = sbr.rel (0) target = $region25
  $region24: #{cnn5_forward_fn.1} parent=0 // pred_region
    _
  $region25: #{cnn5_forward_fn.1} parent=0 // pred_fallthru
    _
  // Predicated region
  $region26: #{cnn5_forward_fn.1} parent=0 // pred_check
    _
  $region27: #{cnn5_forward_fn.1} parent=0 // pred_check_branch
    %33 = sbr.rel (0) target = $region29
  $region28: #{cnn5_forward_fn.1} parent=0 // pred_region
    _
  $region29: #{cnn5_forward_fn.1} parent=0 // pred_fallthru
    _
  // Predicated region
  $region30: #{cnn5_forward_fn.1} parent=0 // pred_check
    _
  $region31: #{cnn5_forward_fn.1} parent=0 // pred_check_branch
    %35 = sbr.rel (0) target = $region33
  $region32: #{cnn5_forward_fn.1} parent=0 // pred_region
    _
  $region33: #{cnn5_forward_fn.1} parent=0 // pred_fallthru
    _
  // Predicated region
  $region34: #{cnn5_forward_fn.1} parent=0 // pred_check
    _
  $region35: #{cnn5_forward_fn.1} parent=0 // pred_check_branch
    %37 = sbr.rel (0) target = $region37
  $region36: #{cnn5_forward_fn.1} parent=0 // pred_region
    _
  $region37: #{cnn5_forward_fn.1} parent=0 // pred_fallthru
    _
  // Predicated region
  $region38: #{cnn5_forward_fn.1} parent=0 // pred_check
    _
  $region39: #{cnn5_forward_fn.1} parent=0 // pred_check_branch
    %39 = sbr.rel (0) target = $region41
  $region40: #{cnn5_forward_fn.1} parent=0 // pred_region
    _
  $region41: #{cnn5_forward_fn.1} parent=0 // pred_fallthru
    _
  // Predicated region
  $region42: #{cnn5_forward_fn.1} parent=0 // pred_check
    _
  $region43: #{cnn5_forward_fn.1} parent=0 // pred_check_branch
    %41 = sbr.rel (0) target = $region45
  $region44: #{cnn5_forward_fn.1} parent=0 // pred_region
    _
  $region45: #{cnn5_forward_fn.1} parent=0 // pred_fallthru
    _
  // Predicated region
  $region46: #{cnn5_forward_fn.1} parent=0 // pred_check
    _
  $region47: #{cnn5_forward_fn.1} parent=0 // pred_check_branch
    %43 = sbr.rel (0) target = $region49
  $region48: #{cnn5_forward_fn.1} parent=0 // pred_region
    _
  $region49: #{cnn5_forward_fn.1} parent=0 // pred_fallthru
    _
  // Predicated region
  $region50: #{cnn5_forward_fn.1} parent=0 // pred_check
    _
  $region51: #{cnn5_forward_fn.1} parent=0 // pred_check_branch
    %45 = sbr.rel (0) target = $region53
  $region52: #{cnn5_forward_fn.1} parent=0 // pred_region
    _
  $region53: #{cnn5_forward_fn.1} parent=0 // pred_fallthru
    _
  // Predicated region
  $region54: #{cnn5_forward_fn.1} parent=0 // pred_check
    _
  $region55: #{cnn5_forward_fn.1} parent=0 // pred_check_branch
    %47 = sbr.rel (0) target = $region57
  $region56: #{cnn5_forward_fn.1} parent=0 // pred_region
    _
  $region57: #{cnn5_forward_fn.1} parent=0 // pred_fallthru
    _
  // Predicated region
  $region58: #{cnn5_forward_fn.1} parent=0 // pred_check
    _
  $region59: #{cnn5_forward_fn.1} parent=0 // pred_check_branch
    %49 = sbr.rel (0) target = $region61
  $region60: #{cnn5_forward_fn.1} parent=0 // pred_region
    _
  $region61: #{cnn5_forward_fn.1} parent=0 // pred_fallthru
    _
  %51 = vst [vmem:[#allocation2] sm:$0xff] 0.0
  %52 = vst [vmem:[#allocation2 + $0x8] sm:$0xff] 0.0
  %53 = vst [vmem:[#allocation2 + $0x10] sm:$0xff] 0.0
  %54 = vst [vmem:[#allocation2 + $0x18] sm:$0xff] 0.0
  %55 = vst [vmem:[#allocation2 + $0x20] sm:$0xff] 0.0
  %56 = vst [vmem:[#allocation2 + $0x28] sm:$0xff] 0.0
  %57 = vst [vmem:[#allocation2 + $0x30] sm:$0xff] 0.0
  %58 = vst [vmem:[#allocation2 + $0x38] sm:$0xff] 0.0
  %59 = vst [vmem:[#allocation2 + $0x40] sm:$0xff] 0.0
  %60 = vst [vmem:[#allocation2 + $0x48] sm:$0xff] 0.0
  %61 = vst [vmem:[#allocation2 + $0x50] sm:$0xff] 0.0
  %62 = vst [vmem:[#allocation2 + $0x58] sm:$0xff] 0.0
  %63 = vst [vmem:[#allocation2 + $0x60] sm:$0xff] 0.0
  %64 = vst [vmem:[#allocation2 + $0x68] sm:$0xff] 0.0
  %65 = vst [vmem:[#allocation2 + $0x70] sm:$0xff] 0.0
  %66 = vst [vmem:[#allocation2 + $0x78] sm:$0xff] 0.0
  %67 = vst [vmem:[#allocation2 + $0x80] sm:$0xff] 0.0
  %68 = vst [vmem:[#allocation2 + $0x88] sm:$0xff] 0.0
  %69 = vst [vmem:[#allocation2 + $0x90] sm:$0xff] 0.0
  %70 = vst [vmem:[#allocation2 + $0x98] sm:$0xff] 0.0
  %71 = vst [vmem:[#allocation2 + $0xa0] sm:$0xff] 0.0
  %72 = vst [vmem:[#allocation2 + $0xa8] sm:$0xff] 0.0
  %73 = vst [vmem:[#allocation2 + $0xb0] sm:$0xff] 0.0
  %74 = vst [vmem:[#allocation2 + $0xb8] sm:$0xff] 0.0
  %75 = vst [vmem:[#allocation2 + $0xc0] sm:$0xff] 0.0
  %76 = vst [vmem:[#allocation2 + $0xc8] sm:$0xff] 0.0
  %77 = vst [vmem:[#allocation2 + $0xd0] sm:$0xff] 0.0
  %78 = vst [vmem:[#allocation2 + $0xd8] sm:$0xff] 0.0
  %79 = vst [vmem:[#allocation2 + $0xe0] sm:$0xff] 0.0
  %80 = vst [vmem:[#allocation2 + $0xe8] sm:$0xff] 0.0
  %81 = vst [vmem:[#allocation2 + $0xf0] sm:$0xff] 0.0
  %82 = vst [vmem:[#allocation2 + $0xf8] sm:$0xff] 0.0
  %83 = vst [vmem:[#allocation2 + $0x100] sm:$0x7f] 0.0
  %84 = vst [vmem:[#allocation2 + $0x108] sm:$0x7f] 0.0
  %85 = vst [vmem:[#allocation2 + $0x110] sm:$0x7f] 0.0
  %86 = vst [vmem:[#allocation2 + $0x118] sm:$0x7f] 0.0
  %87 = vst [vmem:[#allocation2 + $0x120] sm:$0x7f] 0.0
  %88 = vst [vmem:[#allocation2 + $0x128] sm:$0x7f] 0.0
  %89 = vst [vmem:[#allocation2 + $0x130] sm:$0x7f] 0.0
  %90 = vst [vmem:[#allocation2 + $0x138] sm:$0x7f] 0.0
  %v91 = vld [vmem:[%s0] sm:$0xff]
  %v92 = vld [vmem:[%s0 + $0x8] sm:$0xff]
  %v93 = vld [vmem:[%s0 + $0x10] sm:$0xff]
  %v94 = vld [vmem:[%s0 + $0x18] sm:$0xff]
  %v95 = vld [vmem:[%s0 + $0x20] sm:$0x7f]
  %vm96 = vcmask 769024
  %97 = vst.msk [vmem:[#allocation2] sm:$0xff] %vm96, %v91
  %98 = vst.msk [vmem:[#allocation2 + $0x40] sm:$0xff] %vm96, %v92
  %99 = vst.msk [vmem:[#allocation2 + $0x80] sm:$0xff] %vm96, %v93
  %100 = vst.msk [vmem:[#allocation2 + $0xc0] sm:$0xff] %vm96, %v94
  %vm101 = vcmask 768000
  %102 = vst.msk [vmem:[#allocation2 + $0x100] sm:$0x7f] %vm101, %v95
  %s103 = scalar_lea.vmem %s0, 40
  %v104 = vld [vmem:[%s103] sm:$0xff]
  %v105 = vld [vmem:[%s103 + $0x8] sm:$0xff]
  %v106 = vld [vmem:[%s103 + $0x10] sm:$0xff]
  %v107 = vld [vmem:[%s103 + $0x18] sm:$0xff]
  %v108 = vld [vmem:[%s103 + $0x20] sm:$0x7f]
  %109 = vst.msk [vmem:[#allocation2 + $0x8] sm:$0xff] %vm96, %v104
  %110 = vst.msk [vmem:[#allocation2 + $0x48] sm:$0xff] %vm96, %v105
  %111 = vst.msk [vmem:[#allocation2 + $0x88] sm:$0xff] %vm96, %v106
  %112 = vst.msk [vmem:[#allocation2 + $0xc8] sm:$0xff] %vm96, %v107
  %113 = vst.msk [vmem:[#allocation2 + $0x108] sm:$0x7f] %vm101, %v108
  %s114 = scalar_lea.vmem %s0, 80
  %v115 = vld [vmem:[%s114] sm:$0xff]
  %v116 = vld [vmem:[%s114 + $0x8] sm:$0xff]
  %v117 = vld [vmem:[%s114 + $0x10] sm:$0xff]
  %v118 = vld [vmem:[%s114 + $0x18] sm:$0xff]
  %v119 = vld [vmem:[%s114 + $0x20] sm:$0x7f]
  %120 = vst.msk [vmem:[#allocation2 + $0x10] sm:$0xff] %vm96, %v115
  %121 = vst.msk [vmem:[#allocation2 + $0x50] sm:$0xff] %vm96, %v116
  %122 = vst.msk [vmem:[#allocation2 + $0x90] sm:$0xff] %vm96, %v117
  %123 = vst.msk [vmem:[#allocation2 + $0xd0] sm:$0xff] %vm96, %v118
  %124 = vst.msk [vmem:[#allocation2 + $0x110] sm:$0x7f] %vm101, %v119
  %s125 = scalar_lea.vmem %s0, 120
  %v126 = vld [vmem:[%s125] sm:$0xff]
  %v127 = vld [vmem:[%s125 + $0x8] sm:$0xff]
  %v128 = vld [vmem:[%s125 + $0x10] sm:$0xff]
  %v129 = vld [vmem:[%s125 + $0x18] sm:$0xff]
  %v130 = vld [vmem:[%s125 + $0x20] sm:$0x7f]
  %131 = vst.msk [vmem:[#allocation2 + $0x18] sm:$0xff] %vm96, %v126
  %132 = vst.msk [vmem:[#allocation2 + $0x58] sm:$0xff] %vm96, %v127
  %133 = vst.msk [vmem:[#allocation2 + $0x98] sm:$0xff] %vm96, %v128
  %134 = vst.msk [vmem:[#allocation2 + $0xd8] sm:$0xff] %vm96, %v129
  %135 = vst.msk [vmem:[#allocation2 + $0x118] sm:$0x7f] %vm101, %v130
  %s136 = scalar_lea.vmem %s0, 160
  %v137 = vld [vmem:[%s136] sm:$0xff]
  %v138 = vld [vmem:[%s136 + $0x8] sm:$0xff]
  %v139 = vld [vmem:[%s136 + $0x10] sm:$0xff]
  %v140 = vld [vmem:[%s136 + $0x18] sm:$0xff]
  %v141 = vld [vmem:[%s136 + $0x20] sm:$0x7f]
  %142 = vst.msk [vmem:[#allocation2 + $0x20] sm:$0xff] %vm96, %v137
  %143 = vst.msk [vmem:[#allocation2 + $0x60] sm:$0xff] %vm96, %v138
  %144 = vst.msk [vmem:[#allocation2 + $0xa0] sm:$0xff] %vm96, %v139
  %145 = vst.msk [vmem:[#allocation2 + $0xe0] sm:$0xff] %vm96, %v140
  %146 = vst.msk [vmem:[#allocation2 + $0x120] sm:$0x7f] %vm101, %v141
  %s147 = scalar_lea.vmem %s0, 200
  %v148 = vld [vmem:[%s147] sm:$0xff]
  %v149 = vld [vmem:[%s147 + $0x8] sm:$0xff]
  %v150 = vld [vmem:[%s147 + $0x10] sm:$0xff]
  %v151 = vld [vmem:[%s147 + $0x18] sm:$0xff]
  %v152 = vld [vmem:[%s147 + $0x20] sm:$0x7f]
  %153 = vst.msk [vmem:[#allocation2 + $0x28] sm:$0xff] %vm96, %v148
  %154 = vst.msk [vmem:[#allocation2 + $0x68] sm:$0xff] %vm96, %v149
  %155 = vst.msk [vmem:[#allocation2 + $0xa8] sm:$0xff] %vm96, %v150
  %156 = vst.msk [vmem:[#allocation2 + $0xe8] sm:$0xff] %vm96, %v151
  %157 = vst.msk [vmem:[#allocation2 + $0x128] sm:$0x7f] %vm101, %v152
  %s158 = scalar_lea.vmem %s0, 240
  %v159 = vld [vmem:[%s158] sm:$0xff]
  %v160 = vld [vmem:[%s158 + $0x8] sm:$0xff]
  %v161 = vld [vmem:[%s158 + $0x10] sm:$0xff]
  %v162 = vld [vmem:[%s158 + $0x18] sm:$0xff]
  %v163 = vld [vmem:[%s158 + $0x20] sm:$0x7f]
  %164 = vst.msk [vmem:[#allocation2 + $0x30] sm:$0xff] %vm96, %v159
  %165 = vst.msk [vmem:[#allocation2 + $0x70] sm:$0xff] %vm96, %v160
  %166 = vst.msk [vmem:[#allocation2 + $0xb0] sm:$0xff] %vm96, %v161
  %167 = vst.msk [vmem:[#allocation2 + $0xf0] sm:$0xff] %vm96, %v162
  %168 = vst.msk [vmem:[#allocation2 + $0x130] sm:$0x7f] %vm101, %v163
  %s169 = scalar_lea.vmem %s0, 280
  %v170 = vld [vmem:[%s169] sm:$0xff]
  %v171 = vld [vmem:[%s169 + $0x8] sm:$0xff]
  %v172 = vld [vmem:[%s169 + $0x10] sm:$0xff]
  %v173 = vld [vmem:[%s169 + $0x18] sm:$0xff]
  %v174 = vld [vmem:[%s169 + $0x20] sm:$0x7f]
  %175 = vst.msk [vmem:[#allocation2 + $0x38] sm:$0xff] %vm96, %v170
  %176 = vst.msk [vmem:[#allocation2 + $0x78] sm:$0xff] %vm96, %v171
  %177 = vst.msk [vmem:[#allocation2 + $0xb8] sm:$0xff] %vm96, %v172
  %178 = vst.msk [vmem:[#allocation2 + $0xf8] sm:$0xff] %vm96, %v173
  %179 = vst.msk [vmem:[#allocation2 + $0x138] sm:$0x7f] %vm101, %v174
  %v180 = vld [vmem:[#allocation2] sm:$0xff]
  %v181 = vld [vmem:[#allocation2 + $0x8] sm:$0xff]
  %v182 = vld [vmem:[#allocation2 + $0x10] sm:$0xff]
  %v183 = vld [vmem:[#allocation2 + $0x18] sm:$0xff]
  %v184 = vld [vmem:[#allocation2 + $0x20] sm:$0xff]
  %v185 = vld [vmem:[#allocation2 + $0x28] sm:$0xff]
  %v186 = vld [vmem:[#allocation2 + $0x30] sm:$0xff]
  %v187 = vld [vmem:[#allocation2 + $0x38] sm:$0xff]
  %v188 = vld [vmem:[#allocation2 + $0x40] sm:$0xff]
  %v189 = vld [vmem:[#allocation2 + $0x48] sm:$0xff]
  %v190 = vld [vmem:[#allocation2 + $0x50] sm:$0xff]
  %v191 = vld [vmem:[#allocation2 + $0x58] sm:$0xff]
  %v192 = vld [vmem:[#allocation2 + $0x60] sm:$0xff]
  %v193 = vld [vmem:[#allocation2 + $0x68] sm:$0xff]
  %v194 = vld [vmem:[#allocation2 + $0x70] sm:$0xff]
  %v195 = vld [vmem:[#allocation2 + $0x78] sm:$0xff]
  %v196 = vld [vmem:[#allocation2 + $0x80] sm:$0xff]
  %v197 = vld [vmem:[#allocation2 + $0x88] sm:$0xff]
  %v198 = vld [vmem:[#allocation2 + $0x90] sm:$0xff]
  %v199 = vld [vmem:[#allocation2 + $0x98] sm:$0xff]
  %v200 = vld [vmem:[#allocation2 + $0xa0] sm:$0xff]
  %v201 = vld [vmem:[#allocation2 + $0xa8] sm:$0xff]
  %v202 = vld [vmem:[#allocation2 + $0xb0] sm:$0xff]
  %v203 = vld [vmem:[#allocation2 + $0xb8] sm:$0xff]
  %v204 = vld [vmem:[#allocation2 + $0xc0] sm:$0xff]
  %v205 = vld [vmem:[#allocation2 + $0xc8] sm:$0xff]
  %v206 = vld [vmem:[#allocation2 + $0xd0] sm:$0xff]
  %v207 = vld [vmem:[#allocation2 + $0xd8] sm:$0xff]
  %v208 = vld [vmem:[#allocation2 + $0xe0] sm:$0xff]
  %v209 = vld [vmem:[#allocation2 + $0xe8] sm:$0xff]
  %v210 = vld [vmem:[#allocation2 + $0xf0] sm:$0xff]
  %v211 = vld [vmem:[#allocation2 + $0xf8] sm:$0xff]
  %v212 = vld [vmem:[#allocation2 + $0x100] sm:$0x7f]
  %v213 = vld [vmem:[#allocation2 + $0x108] sm:$0x7f]
  %v214 = vld [vmem:[#allocation2 + $0x110] sm:$0x7f]
  %v215 = vld [vmem:[#allocation2 + $0x118] sm:$0x7f]
  %v216 = vld [vmem:[#allocation2 + $0x120] sm:$0x7f]
  %v217 = vld [vmem:[#allocation2 + $0x128] sm:$0x7f]
  %v218 = vld [vmem:[#allocation2 + $0x130] sm:$0x7f]
  %v219 = vld [vmem:[#allocation2 + $0x138] sm:$0x7f]
  %v220 = vpack.c.bf16 %v188, %v180
  %v221 = vpack.c.bf16 %v189, %v181
  %v222 = vpack.c.bf16 %v190, %v182
  %v223 = vpack.c.bf16 %v191, %v183
  %v224 = vpack.c.bf16 %v192, %v184
  %v225 = vpack.c.bf16 %v193, %v185
  %v226 = vpack.c.bf16 %v194, %v186
  %v227 = vpack.c.bf16 %v195, %v187
  %v228 = vpack.c.bf16 %v204, %v196
  %v229 = vpack.c.bf16 %v205, %v197
  %v230 = vpack.c.bf16 %v206, %v198
  %v231 = vpack.c.bf16 %v207, %v199
  %v232 = vpack.c.bf16 %v208, %v200
  %v233 = vpack.c.bf16 %v209, %v201
  %v234 = vpack.c.bf16 %v210, %v202
  %v235 = vpack.c.bf16 %v211, %v203
  %v236 = vpack.c.bf16 %v212, %v212
  %v237 = vpack.c.bf16 %v213, %v213
  %v238 = vpack.c.bf16 %v214, %v214
  %v239 = vpack.c.bf16 %v215, %v215
  %v240 = vpack.c.bf16 %v216, %v216
  %v241 = vpack.c.bf16 %v217, %v217
  %v242 = vpack.c.bf16 %v218, %v218
  %v243 = vpack.c.bf16 %v219, %v219
  %v244 = vld [vmem:[%s1] sm:$0xf]
  %s245 = scalar_lea.vmem %s1, 4
  %v246 = vld [vmem:[%s245] sm:$0xf]
  %vm247 = vcmask 318464
  %v249 = vsel %vm247, %v246, 0
  %vm251 = vcmask 1042432
  %vm252 = vcmask 1043456
  %v253 = vsel %vm251, 4294967295, 65535
  %v254 = vsel %vm252, %v253, 0
  %v256 = vand.u32 %v236, %v254
  %v259 = vand.u32 %v237, %v254
  %v262 = vand.u32 %v238, %v254
  %v265 = vand.u32 %v239, %v254
  %v268 = vand.u32 %v240, %v254
  %v271 = vand.u32 %v241, %v254
  %v274 = vand.u32 %v242, %v254
  %v277 = vand.u32 %v243, %v254
  %279 = vmatprep.subr.bf16.mxu0 0
  %280 = vmatpush1.bf16.msra.mxu0 0
  %281 = vmatprep.subr.bf16.mxu0 0
  %282 = vmatpush1.bf16.msra.mxu0 0
  %283 = vmatprep.subr.bf16.mxu0 0
  %284 = vmatpush1.bf16.msra.mxu0 0
  %285 = vmatprep.subr.bf16.mxu0 0
  %286 = vmatpush1.bf16.msra.mxu0 0
  %287 = vmatprep.subr.bf16.mxu0 0
  %288 = vmatpush1.bf16.msra.mxu0 0
  %289 = vmatprep.subr.bf16.mxu0 %v259
  %290 = vmatpush1.bf16.msra.mxu0 %v256
  %291 = vmatprep.subr.bf16.mxu0 %v229
  %292 = vmatpush1.bf16.msra.mxu0 %v228
  %293 = vmatprep.subr.bf16.mxu0 %v221
  %294 = vmatpush1.bf16.msra.mxu0 %v220
  %295 = vmatprep.subr.bf16.mxu0 0
  %296 = vmatpush2.bf16.msra.mxu0 0
  %297 = vmatprep.subr.bf16.mxu0 0
  %298 = vmatpush2.bf16.msra.mxu0 0
  %299 = vmatprep.subr.bf16.mxu0 0
  %300 = vmatpush2.bf16.msra.mxu0 0
  %301 = vmatprep.subr.bf16.mxu0 0
  %302 = vmatpush2.bf16.msra.mxu0 0
  %303 = vmatprep.subr.bf16.mxu0 0
  %304 = vmatpush2.bf16.msra.mxu0 0
  %305 = vmatprep.subr.bf16.mxu0 0
  %306 = vmatpush2.bf16.msra.mxu0 0
  %307 = vmatprep.subr.bf16.mxu0 0
  %308 = vmatpush2.bf16.msra.mxu0 0
  %309 = vmatprep.subr.bf16.mxu0 0
  %310 = vmatpush2.bf16.msra.mxu0 0
  %311 = vmatprep.mubr.bf16.mxu0 0
  %312 = vmatmul.mubr.bf16.gmra.mxu0 %v249
  %v313 = vpop.f32.mrf.mxu0
  %v314 = vadd.f32 0.0, %v313
  %v315 = vpop.f32.mrf.mxu0
  %v316 = vadd.f32 0.0, %v315
  %v317 = vpop.f32.mrf.mxu0
  %v318 = vpop.f32.mrf.mxu0
  %319 = vdwg.mxu0
  %320 = vmatprep.subr.bf16.mxu0 0
  %321 = vmatpush1.bf16.msra.mxu0 0
  %322 = vmatprep.subr.bf16.mxu0 0
  %323 = vmatpush1.bf16.msra.mxu0 0
  %324 = vmatprep.subr.bf16.mxu0 0
  %325 = vmatpush1.bf16.msra.mxu0 0
  %326 = vmatprep.subr.bf16.mxu0 0
  %327 = vmatpush1.bf16.msra.mxu0 0
  %328 = vmatprep.subr.bf16.mxu0 0
  %329 = vmatpush1.bf16.msra.mxu0 0
  %330 = vmatprep.subr.bf16.mxu0 %v265
  %331 = vmatpush1.bf16.msra.mxu0 %v262
  %332 = vmatprep.subr.bf16.mxu0 %v231
  %333 = vmatpush1.bf16.msra.mxu0 %v230
  %334 = vmatprep.subr.bf16.mxu0 %v223
  %335 = vmatpush1.bf16.msra.mxu0 %v222
  %336 = vmatprep.subr.bf16.mxu0 0
  %337 = vmatpush2.bf16.msra.mxu0 0
  %338 = vmatprep.subr.bf16.mxu0 0
  %339 = vmatpush2.bf16.msra.mxu0 0
  %340 = vmatprep.subr.bf16.mxu0 0
  %341 = vmatpush2.bf16.msra.mxu0 0
  %342 = vmatprep.subr.bf16.mxu0 0
  %343 = vmatpush2.bf16.msra.mxu0 0
  %344 = vmatprep.subr.bf16.mxu0 0
  %345 = vmatpush2.bf16.msra.mxu0 0
  %346 = vmatprep.subr.bf16.mxu0 0
  %347 = vmatpush2.bf16.msra.mxu0 0
  %348 = vmatprep.subr.bf16.mxu0 0
  %349 = vmatpush2.bf16.msra.mxu0 0
  %350 = vmatprep.subr.bf16.mxu0 0
  %351 = vmatpush2.bf16.msra.mxu0 0
  %352 = vmatprep.mubr.bf16.mxu0 0
  %353 = vmatmul.mubr.bf16.gmra.mxu0 %v249
  %v354 = vpop.f32.mrf.mxu0
  %v355 = vadd.f32 0.0, %v354
  %v356 = vpop.f32.mrf.mxu0
  %v357 = vadd.f32 0.0, %v356
  %v358 = vpop.f32.mrf.mxu0
  %v359 = vpop.f32.mrf.mxu0
  %360 = vdwg.mxu0
  %361 = vmatprep.subr.bf16.mxu0 0
  %362 = vmatpush1.bf16.msra.mxu0 0
  %363 = vmatprep.subr.bf16.mxu0 0
  %364 = vmatpush1.bf16.msra.mxu0 0
  %365 = vmatprep.subr.bf16.mxu0 0
  %366 = vmatpush1.bf16.msra.mxu0 0
  %367 = vmatprep.subr.bf16.mxu0 0
  %368 = vmatpush1.bf16.msra.mxu0 0
  %369 = vmatprep.subr.bf16.mxu0 0
  %370 = vmatpush1.bf16.msra.mxu0 0
  %371 = vmatprep.subr.bf16.mxu0 %v271
  %372 = vmatpush1.bf16.msra.mxu0 %v268
  %373 = vmatprep.subr.bf16.mxu0 %v233
  %374 = vmatpush1.bf16.msra.mxu0 %v232
  %375 = vmatprep.subr.bf16.mxu0 %v225
  %376 = vmatpush1.bf16.msra.mxu0 %v224
  %377 = vmatprep.subr.bf16.mxu0 0
  %378 = vmatpush2.bf16.msra.mxu0 0
  %379 = vmatprep.subr.bf16.mxu0 0
  %380 = vmatpush2.bf16.msra.mxu0 0
  %381 = vmatprep.subr.bf16.mxu0 0
  %382 = vmatpush2.bf16.msra.mxu0 0
  %383 = vmatprep.subr.bf16.mxu0 0
  %384 = vmatpush2.bf16.msra.mxu0 0
  %385 = vmatprep.subr.bf16.mxu0 0
  %386 = vmatpush2.bf16.msra.mxu0 0
  %387 = vmatprep.subr.bf16.mxu0 0
  %388 = vmatpush2.bf16.msra.mxu0 0
  %389 = vmatprep.subr.bf16.mxu0 0
  %390 = vmatpush2.bf16.msra.mxu0 0
  %391 = vmatprep.subr.bf16.mxu0 0
  %392 = vmatpush2.bf16.msra.mxu0 0
  %393 = vmatprep.mubr.bf16.mxu0 0
  %394 = vmatmul.mubr.bf16.gmra.mxu0 %v249
  %v395 = vpop.f32.mrf.mxu0
  %v396 = vadd.f32 0.0, %v395
  %v397 = vpop.f32.mrf.mxu0
  %v398 = vadd.f32 0.0, %v397
  %v399 = vpop.f32.mrf.mxu0
  %v400 = vpop.f32.mrf.mxu0
  %401 = vdwg.mxu0
  %402 = vmatprep.subr.bf16.mxu0 0
  %403 = vmatpush1.bf16.msra.mxu0 0
  %404 = vmatprep.subr.bf16.mxu0 0
  %405 = vmatpush1.bf16.msra.mxu0 0
  %406 = vmatprep.subr.bf16.mxu0 0
  %407 = vmatpush1.bf16.msra.mxu0 0
  %408 = vmatprep.subr.bf16.mxu0 0
  %409 = vmatpush1.bf16.msra.mxu0 0
  %410 = vmatprep.subr.bf16.mxu0 0
  %411 = vmatpush1.bf16.msra.mxu0 0
  %412 = vmatprep.subr.bf16.mxu0 %v277
  %413 = vmatpush1.bf16.msra.mxu0 %v274
  %414 = vmatprep.subr.bf16.mxu0 %v235
  %415 = vmatpush1.bf16.msra.mxu0 %v234
  %416 = vmatprep.subr.bf16.mxu0 %v227
  %417 = vmatpush1.bf16.msra.mxu0 %v226
  %418 = vmatprep.subr.bf16.mxu0 0
  %419 = vmatpush2.bf16.msra.mxu0 0
  %420 = vmatprep.subr.bf16.mxu0 0
  %421 = vmatpush2.bf16.msra.mxu0 0
  %422 = vmatprep.subr.bf16.mxu0 0
  %423 = vmatpush2.bf16.msra.mxu0 0
  %424 = vmatprep.subr.bf16.mxu0 0
  %425 = vmatpush2.bf16.msra.mxu0 0
  %426 = vmatprep.subr.bf16.mxu0 0
  %427 = vmatpush2.bf16.msra.mxu0 0
  %428 = vmatprep.subr.bf16.mxu0 0
  %429 = vmatpush2.bf16.msra.mxu0 0
  %430 = vmatprep.subr.bf16.mxu0 0
  %431 = vmatpush2.bf16.msra.mxu0 0
  %432 = vmatprep.subr.bf16.mxu0 0
  %433 = vmatpush2.bf16.msra.mxu0 0
  %434 = vmatprep.mubr.bf16.mxu0 0
  %435 = vmatmul.mubr.bf16.gmra.mxu0 %v249
  %v436 = vpop.f32.mrf.mxu0
  %v437 = vadd.f32 0.0, %v436
  %v438 = vpop.f32.mrf.mxu0
  %v439 = vadd.f32 0.0, %v438
  %v440 = vpop.f32.mrf.mxu0
  %v441 = vpop.f32.mrf.mxu0
  %442 = vdwg.mxu0
  %443 = vrot.lane.b32.xlu0 %v314, 127
  %v444 = vpop.permute.xlu0 %443
  %445 = vrot.lane.b32.xlu0 %v316, 127
  %v446 = vpop.permute.xlu0 %445
  %447 = vrot.lane.b32.xlu0 %v355, 127
  %v448 = vpop.permute.xlu0 %447
  %449 = vrot.lane.b32.xlu0 %v357, 127
  %v450 = vpop.permute.xlu0 %449
  %451 = vrot.lane.b32.xlu0 %v396, 127
  %v452 = vpop.permute.xlu0 %451
  %453 = vrot.lane.b32.xlu0 %v398, 127
  %v454 = vpop.permute.xlu0 %453
  %455 = vrot.lane.b32.xlu0 %v437, 127
  %v456 = vpop.permute.xlu0 %455
  %457 = vrot.lane.b32.xlu0 %v439, 127
  %v458 = vpop.permute.xlu0 %457
  %v459 = vlaneseq
  %v460 = vand.u32 %v459, 127
  %vm461 = vcmp.lt.s32.totalorder %v460, 127
  %v462 = vsel %vm461, %v456, %v458
  %v463 = vsel %vm461, %v454, %v456
  %v464 = vsel %vm461, %v452, %v454
  %v465 = vsel %vm461, %v450, %v452
  %v466 = vsel %vm461, %v448, %v450
  %v467 = vsel %vm461, %v446, %v448
  %v468 = vsel %vm461, %v444, %v446
  %v469 = vsel %vm461, %v458, %v444
  %v471 = vsel %vm247, %v244, 0
  %473 = vmatprep.subr.bf16.mxu0 0
  %474 = vmatpush1.bf16.msra.mxu0 0
  %475 = vmatprep.subr.bf16.mxu0 0
  %476 = vmatpush1.bf16.msra.mxu0 0
  %477 = vmatprep.subr.bf16.mxu0 0
  %478 = vmatpush1.bf16.msra.mxu0 0
  %479 = vmatprep.subr.bf16.mxu0 0
  %480 = vmatpush1.bf16.msra.mxu0 0
  %481 = vmatprep.subr.bf16.mxu0 0
  %482 = vmatpush1.bf16.msra.mxu0 0
  %483 = vmatprep.subr.bf16.mxu0 %v259
  %484 = vmatpush1.bf16.msra.mxu0 %v256
  %485 = vmatprep.subr.bf16.mxu0 %v229
  %486 = vmatpush1.bf16.msra.mxu0 %v228
  %487 = vmatprep.subr.bf16.mxu0 %v221
  %488 = vmatpush1.bf16.msra.mxu0 %v220
  %489 = vmatprep.subr.bf16.mxu0 0
  %490 = vmatpush2.bf16.msra.mxu0 0
  %491 = vmatprep.subr.bf16.mxu0 0
  %492 = vmatpush2.bf16.msra.mxu0 0
  %493 = vmatprep.subr.bf16.mxu0 0
  %494 = vmatpush2.bf16.msra.mxu0 0
  %495 = vmatprep.subr.bf16.mxu0 0
  %496 = vmatpush2.bf16.msra.mxu0 0
  %497 = vmatprep.subr.bf16.mxu0 0
  %498 = vmatpush2.bf16.msra.mxu0 0
  %499 = vmatprep.subr.bf16.mxu0 0
  %500 = vmatpush2.bf16.msra.mxu0 0
  %501 = vmatprep.subr.bf16.mxu0 0
  %502 = vmatpush2.bf16.msra.mxu0 0
  %503 = vmatprep.subr.bf16.mxu0 0
  %504 = vmatpush2.bf16.msra.mxu0 0
  %505 = vmatprep.mubr.bf16.mxu0 0
  %506 = vmatmul.mubr.bf16.gmra.mxu0 %v471
  %v507 = vpop.f32.mrf.mxu0
  %v508 = vadd.f32 %v468, %v507
  %v509 = vpop.f32.mrf.mxu0
  %v510 = vadd.f32 %v467, %v509
  %v511 = vpop.f32.mrf.mxu0
  %v512 = vpop.f32.mrf.mxu0
  %513 = vdwg.mxu0
  %514 = vmatprep.subr.bf16.mxu0 0
  %515 = vmatpush1.bf16.msra.mxu0 0
  %516 = vmatprep.subr.bf16.mxu0 0
  %517 = vmatpush1.bf16.msra.mxu0 0
  %518 = vmatprep.subr.bf16.mxu0 0
  %519 = vmatpush1.bf16.msra.mxu0 0
  %520 = vmatprep.subr.bf16.mxu0 0
  %521 = vmatpush1.bf16.msra.mxu0 0
  %522 = vmatprep.subr.bf16.mxu0 0
  %523 = vmatpush1.bf16.msra.mxu0 0
  %524 = vmatprep.subr.bf16.mxu0 %v265
  %525 = vmatpush1.bf16.msra.mxu0 %v262
  %526 = vmatprep.subr.bf16.mxu0 %v231
  %527 = vmatpush1.bf16.msra.mxu0 %v230
  %528 = vmatprep.subr.bf16.mxu0 %v223
  %529 = vmatpush1.bf16.msra.mxu0 %v222
  %530 = vmatprep.subr.bf16.mxu0 0
  %531 = vmatpush2.bf16.msra.mxu0 0
  %532 = vmatprep.subr.bf16.mxu0 0
  %533 = vmatpush2.bf16.msra.mxu0 0
  %534 = vmatprep.subr.bf16.mxu0 0
  %535 = vmatpush2.bf16.msra.mxu0 0
  %536 = vmatprep.subr.bf16.mxu0 0
  %537 = vmatpush2.bf16.msra.mxu0 0
  %538 = vmatprep.subr.bf16.mxu0 0
  %539 = vmatpush2.bf16.msra.mxu0 0
  %540 = vmatprep.subr.bf16.mxu0 0
  %541 = vmatpush2.bf16.msra.mxu0 0
  %542 = vmatprep.subr.bf16.mxu0 0
  %543 = vmatpush2.bf16.msra.mxu0 0
  %544 = vmatprep.subr.bf16.mxu0 0
  %545 = vmatpush2.bf16.msra.mxu0 0
  %546 = vmatprep.mubr.bf16.mxu0 0
  %547 = vmatmul.mubr.bf16.gmra.mxu0 %v471
  %v548 = vpop.f32.mrf.mxu0
  %v549 = vadd.f32 %v466, %v548
  %v550 = vpop.f32.mrf.mxu0
  %v551 = vadd.f32 %v465, %v550
  %v552 = vpop.f32.mrf.mxu0
  %v553 = vpop.f32.mrf.mxu0
  %554 = vdwg.mxu0
  %555 = vmatprep.subr.bf16.mxu0 0
  %556 = vmatpush1.bf16.msra.mxu0 0
  %557 = vmatprep.subr.bf16.mxu0 0
  %558 = vmatpush1.bf16.msra.mxu0 0
  %559 = vmatprep.subr.bf16.mxu0 0
  %560 = vmatpush1.bf16.msra.mxu0 0
  %561 = vmatprep.subr.bf16.mxu0 0
  %562 = vmatpush1.bf16.msra.mxu0 0
  %563 = vmatprep.subr.bf16.mxu0 0
  %564 = vmatpush1.bf16.msra.mxu0 0
  %565 = vmatprep.subr.bf16.mxu0 %v271
  %566 = vmatpush1.bf16.msra.mxu0 %v268
  %567 = vmatprep.subr.bf16.mxu0 %v233
  %568 = vmatpush1.bf16.msra.mxu0 %v232
  %569 = vmatprep.subr.bf16.mxu0 %v225
  %570 = vmatpush1.bf16.msra.mxu0 %v224
  %571 = vmatprep.subr.bf16.mxu0 0
  %572 = vmatpush2.bf16.msra.mxu0 0
  %573 = vmatprep.subr.bf16.mxu0 0
  %574 = vmatpush2.bf16.msra.mxu0 0
  %575 = vmatprep.subr.bf16.mxu0 0
  %576 = vmatpush2.bf16.msra.mxu0 0
  %577 = vmatprep.subr.bf16.mxu0 0
  %578 = vmatpush2.bf16.msra.mxu0 0
  %579 = vmatprep.subr.bf16.mxu0 0
  %580 = vmatpush2.bf16.msra.mxu0 0
  %581 = vmatprep.subr.bf16.mxu0 0
  %582 = vmatpush2.bf16.msra.mxu0 0
  %583 = vmatprep.subr.bf16.mxu0 0
  %584 = vmatpush2.bf16.msra.mxu0 0
  %585 = vmatprep.subr.bf16.mxu0 0
  %586 = vmatpush2.bf16.msra.mxu0 0
  %587 = vmatprep.mubr.bf16.mxu0 0
  %588 = vmatmul.mubr.bf16.gmra.mxu0 %v471
  %v589 = vpop.f32.mrf.mxu0
  %v590 = vadd.f32 %v464, %v589
  %v591 = vpop.f32.mrf.mxu0
  %v592 = vadd.f32 %v463, %v591
  %v593 = vpop.f32.mrf.mxu0
  %v594 = vpop.f32.mrf.mxu0
  %595 = vdwg.mxu0
  %596 = vmatprep.subr.bf16.mxu0 0
  %597 = vmatpush1.bf16.msra.mxu0 0
  %598 = vmatprep.subr.bf16.mxu0 0
  %599 = vmatpush1.bf16.msra.mxu0 0
  %600 = vmatprep.subr.bf16.mxu0 0
  %601 = vmatpush1.bf16.msra.mxu0 0
  %602 = vmatprep.subr.bf16.mxu0 0
  %603 = vmatpush1.bf16.msra.mxu0 0
  %604 = vmatprep.subr.bf16.mxu0 0
  %605 = vmatpush1.bf16.msra.mxu0 0
  %606 = vmatprep.subr.bf16.mxu0 %v277
  %607 = vmatpush1.bf16.msra.mxu0 %v274
  %608 = vmatprep.subr.bf16.mxu0 %v235
  %609 = vmatpush1.bf16.msra.mxu0 %v234
  %610 = vmatprep.subr.bf16.mxu0 %v227
  %611 = vmatpush1.bf16.msra.mxu0 %v226
  %612 = vmatprep.subr.bf16.mxu0 0
  %613 = vmatpush2.bf16.msra.mxu0 0
  %614 = vmatprep.subr.bf16.mxu0 0
  %615 = vmatpush2.bf16.msra.mxu0 0
  %616 = vmatprep.subr.bf16.mxu0 0
  %617 = vmatpush2.bf16.msra.mxu0 0
  %618 = vmatprep.subr.bf16.mxu0 0
  %619 = vmatpush2.bf16.msra.mxu0 0
  %620 = vmatprep.subr.bf16.mxu0 0
  %621 = vmatpush2.bf16.msra.mxu0 0
  %622 = vmatprep.subr.bf16.mxu0 0
  %623 = vmatpush2.bf16.msra.mxu0 0
  %624 = vmatprep.subr.bf16.mxu0 0
  %625 = vmatpush2.bf16.msra.mxu0 0
  %626 = vmatprep.subr.bf16.mxu0 0
  %627 = vmatpush2.bf16.msra.mxu0 0
  %628 = vmatprep.mubr.bf16.mxu0 0
  %629 = vmatmul.mubr.bf16.gmra.mxu0 %v471
  %v630 = vpop.f32.mrf.mxu0
  %v631 = vadd.f32 %v462, %v630
  %v632 = vpop.f32.mrf.mxu0
  %v633 = vadd.f32 %v469, %v632
  %v634 = vpop.f32.mrf.mxu0
  %v635 = vpop.f32.mrf.mxu0
  %636 = vdwg.mxu0
  %s637 = scalar_lea.vmem %s1, 8
  %v638 = vld [vmem:[%s637] sm:$0xf]
  %v640 = vsel %vm247, %v638, 0
  %642 = vmatprep.subr.bf16.mxu0 0
  %643 = vmatpush1.bf16.msra.mxu0 0
  %644 = vmatprep.subr.bf16.mxu0 0
  %645 = vmatpush1.bf16.msra.mxu0 0
  %646 = vmatprep.subr.bf16.mxu0 0
  %647 = vmatpush1.bf16.msra.mxu0 0
  %648 = vmatprep.subr.bf16.mxu0 0
  %649 = vmatpush1.bf16.msra.mxu0 0
  %650 = vmatprep.subr.bf16.mxu0 0
  %651 = vmatpush1.bf16.msra.mxu0 0
  %652 = vmatprep.subr.bf16.mxu0 %v259
  %653 = vmatpush1.bf16.msra.mxu0 %v256
  %654 = vmatprep.subr.bf16.mxu0 %v229
  %655 = vmatpush1.bf16.msra.mxu0 %v228
  %656 = vmatprep.subr.bf16.mxu0 %v221
  %657 = vmatpush1.bf16.msra.mxu0 %v220
  %658 = vmatprep.subr.bf16.mxu0 0
  %659 = vmatpush2.bf16.msra.mxu0 0
  %660 = vmatprep.subr.bf16.mxu0 0
  %661 = vmatpush2.bf16.msra.mxu0 0
  %662 = vmatprep.subr.bf16.mxu0 0
  %663 = vmatpush2.bf16.msra.mxu0 0
  %664 = vmatprep.subr.bf16.mxu0 0
  %665 = vmatpush2.bf16.msra.mxu0 0
  %666 = vmatprep.subr.bf16.mxu0 0
  %667 = vmatpush2.bf16.msra.mxu0 0
  %668 = vmatprep.subr.bf16.mxu0 0
  %669 = vmatpush2.bf16.msra.mxu0 0
  %670 = vmatprep.subr.bf16.mxu0 0
  %671 = vmatpush2.bf16.msra.mxu0 0
  %672 = vmatprep.subr.bf16.mxu0 0
  %673 = vmatpush2.bf16.msra.mxu0 0
  %674 = vmatprep.mubr.bf16.mxu0 0
  %675 = vmatmul.mubr.bf16.gmra.mxu0 %v640
  %v676 = vpop.f32.mrf.mxu0
  %v677 = vadd.f32 0.0, %v676
  %v678 = vpop.f32.mrf.mxu0
  %v679 = vadd.f32 0.0, %v678
  %v680 = vpop.f32.mrf.mxu0
  %v681 = vpop.f32.mrf.mxu0
  %682 = vdwg.mxu0
  %683 = vmatprep.subr.bf16.mxu0 0
  %684 = vmatpush1.bf16.msra.mxu0 0
  %685 = vmatprep.subr.bf16.mxu0 0
  %686 = vmatpush1.bf16.msra.mxu0 0
  %687 = vmatprep.subr.bf16.mxu0 0
  %688 = vmatpush1.bf16.msra.mxu0 0
  %689 = vmatprep.subr.bf16.mxu0 0
  %690 = vmatpush1.bf16.msra.mxu0 0
  %691 = vmatprep.subr.bf16.mxu0 0
  %692 = vmatpush1.bf16.msra.mxu0 0
  %693 = vmatprep.subr.bf16.mxu0 %v265
  %694 = vmatpush1.bf16.msra.mxu0 %v262
  %695 = vmatprep.subr.bf16.mxu0 %v231
  %696 = vmatpush1.bf16.msra.mxu0 %v230
  %697 = vmatprep.subr.bf16.mxu0 %v223
  %698 = vmatpush1.bf16.msra.mxu0 %v222
  %699 = vmatprep.subr.bf16.mxu0 0
  %700 = vmatpush2.bf16.msra.mxu0 0
  %701 = vmatprep.subr.bf16.mxu0 0
  %702 = vmatpush2.bf16.msra.mxu0 0
  %703 = vmatprep.subr.bf16.mxu0 0
  %704 = vmatpush2.bf16.msra.mxu0 0
  %705 = vmatprep.subr.bf16.mxu0 0
  %706 = vmatpush2.bf16.msra.mxu0 0
  %707 = vmatprep.subr.bf16.mxu0 0
  %708 = vmatpush2.bf16.msra.mxu0 0
  %709 = vmatprep.subr.bf16.mxu0 0
  %710 = vmatpush2.bf16.msra.mxu0 0
  %711 = vmatprep.subr.bf16.mxu0 0
  %712 = vmatpush2.bf16.msra.mxu0 0
  %713 = vmatprep.subr.bf16.mxu0 0
  %714 = vmatpush2.bf16.msra.mxu0 0
  %715 = vmatprep.mubr.bf16.mxu0 0
  %716 = vmatmul.mubr.bf16.gmra.mxu0 %v640
  %v717 = vpop.f32.mrf.mxu0
  %v718 = vadd.f32 0.0, %v717
  %v719 = vpop.f32.mrf.mxu0
  %v720 = vadd.f32 0.0, %v719
  %v721 = vpop.f32.mrf.mxu0
  %v722 = vpop.f32.mrf.mxu0
  %723 = vdwg.mxu0
  %724 = vmatprep.subr.bf16.mxu0 0
  %725 = vmatpush1.bf16.msra.mxu0 0
  %726 = vmatprep.subr.bf16.mxu0 0
  %727 = vmatpush1.bf16.msra.mxu0 0
  %728 = vmatprep.subr.bf16.mxu0 0
  %729 = vmatpush1.bf16.msra.mxu0 0
  %730 = vmatprep.subr.bf16.mxu0 0
  %731 = vmatpush1.bf16.msra.mxu0 0
  %732 = vmatprep.subr.bf16.mxu0 0
  %733 = vmatpush1.bf16.msra.mxu0 0
  %734 = vmatprep.subr.bf16.mxu0 %v271
  %735 = vmatpush1.bf16.msra.mxu0 %v268
  %736 = vmatprep.subr.bf16.mxu0 %v233
  %737 = vmatpush1.bf16.msra.mxu0 %v232
  %738 = vmatprep.subr.bf16.mxu0 %v225
  %739 = vmatpush1.bf16.msra.mxu0 %v224
  %740 = vmatprep.subr.bf16.mxu0 0
  %741 = vmatpush2.bf16.msra.mxu0 0
  %742 = vmatprep.subr.bf16.mxu0 0
  %743 = vmatpush2.bf16.msra.mxu0 0
  %744 = vmatprep.subr.bf16.mxu0 0
  %745 = vmatpush2.bf16.msra.mxu0 0
  %746 = vmatprep.subr.bf16.mxu0 0
  %747 = vmatpush2.bf16.msra.mxu0 0
  %748 = vmatprep.subr.bf16.mxu0 0
  %749 = vmatpush2.bf16.msra.mxu0 0
  %750 = vmatprep.subr.bf16.mxu0 0
  %751 = vmatpush2.bf16.msra.mxu0 0
  %752 = vmatprep.subr.bf16.mxu0 0
  %753 = vmatpush2.bf16.msra.mxu0 0
  %754 = vmatprep.subr.bf16.mxu0 0
  %755 = vmatpush2.bf16.msra.mxu0 0
  %756 = vmatprep.mubr.bf16.mxu0 0
  %757 = vmatmul.mubr.bf16.gmra.mxu0 %v640
  %v758 = vpop.f32.mrf.mxu0
  %v759 = vadd.f32 0.0, %v758
  %v760 = vpop.f32.mrf.mxu0
  %v761 = vadd.f32 0.0, %v760
  %v762 = vpop.f32.mrf.mxu0
  %v763 = vpop.f32.mrf.mxu0
  %764 = vdwg.mxu0
  %765 = vmatprep.subr.bf16.mxu0 0
  %766 = vmatpush1.bf16.msra.mxu0 0
  %767 = vmatprep.subr.bf16.mxu0 0
  %768 = vmatpush1.bf16.msra.mxu0 0
  %769 = vmatprep.subr.bf16.mxu0 0
  %770 = vmatpush1.bf16.msra.mxu0 0
  %771 = vmatprep.subr.bf16.mxu0 0
  %772 = vmatpush1.bf16.msra.mxu0 0
  %773 = vmatprep.subr.bf16.mxu0 0
  %774 = vmatpush1.bf16.msra.mxu0 0
  %775 = vmatprep.subr.bf16.mxu0 %v277
  %776 = vmatpush1.bf16.msra.mxu0 %v274
  %777 = vmatprep.subr.bf16.mxu0 %v235
  %778 = vmatpush1.bf16.msra.mxu0 %v234
  %779 = vmatprep.subr.bf16.mxu0 %v227
  %780 = vmatpush1.bf16.msra.mxu0 %v226
  %781 = vmatprep.subr.bf16.mxu0 0
  %782 = vmatpush2.bf16.msra.mxu0 0
  %783 = vmatprep.subr.bf16.mxu0 0
  %784 = vmatpush2.bf16.msra.mxu0 0
  %785 = vmatprep.subr.bf16.mxu0 0
  %786 = vmatpush2.bf16.msra.mxu0 0
  %787 = vmatprep.subr.bf16.mxu0 0
  %788 = vmatpush2.bf16.msra.mxu0 0
  %789 = vmatprep.subr.bf16.mxu0 0
  %790 = vmatpush2.bf16.msra.mxu0 0
  %791 = vmatprep.subr.bf16.mxu0 0
  %792 = vmatpush2.bf16.msra.mxu0 0
  %793 = vmatprep.subr.bf16.mxu0 0
  %794 = vmatpush2.bf16.msra.mxu0 0
  %795 = vmatprep.subr.bf16.mxu0 0
  %796 = vmatpush2.bf16.msra.mxu0 0
  %797 = vmatprep.mubr.bf16.mxu0 0
  %798 = vmatmul.mubr.bf16.gmra.mxu0 %v640
  %v799 = vpop.f32.mrf.mxu0
  %v800 = vadd.f32 0.0, %v799
  %v801 = vpop.f32.mrf.mxu0
  %v802 = vadd.f32 0.0, %v801
  %v803 = vpop.f32.mrf.mxu0
  %v804 = vpop.f32.mrf.mxu0
  %805 = vdwg.mxu0
  %806 = vrot.lane.b32.xlu0 %v677, 126
  %v807 = vpop.permute.xlu0 %806
  %808 = vrot.lane.b32.xlu0 %v679, 126
  %v809 = vpop.permute.xlu0 %808
  %810 = vrot.lane.b32.xlu0 %v718, 126
  %v811 = vpop.permute.xlu0 %810
  %812 = vrot.lane.b32.xlu0 %v720, 126
  %v813 = vpop.permute.xlu0 %812
  %814 = vrot.lane.b32.xlu0 %v759, 126
  %v815 = vpop.permute.xlu0 %814
  %816 = vrot.lane.b32.xlu0 %v761, 126
  %v817 = vpop.permute.xlu0 %816
  %818 = vrot.lane.b32.xlu0 %v800, 126
  %v819 = vpop.permute.xlu0 %818
  %820 = vrot.lane.b32.xlu0 %v802, 126
  %v821 = vpop.permute.xlu0 %820
  %vm822 = vcmp.lt.s32.totalorder %v460, 126
  %v823 = vsel %vm822, %v819, %v821
  %v824 = vsel %vm822, %v817, %v819
  %v825 = vsel %vm822, %v815, %v817
  %v826 = vsel %vm822, %v813, %v815
  %v827 = vsel %vm822, %v811, %v813
  %v828 = vsel %vm822, %v809, %v811
  %v829 = vsel %vm822, %v807, %v809
  %v830 = vsel %vm822, %v821, %v807
  %v831 = vadd.f32 %v508, %v829
  %v832 = vadd.f32 %v510, %v828
  %v833 = vadd.f32 %v549, %v827
  %v834 = vadd.f32 %v551, %v826
  %v835 = vadd.f32 %v590, %v825
  %v836 = vadd.f32 %v592, %v824
  %v837 = vadd.f32 %v631, %v823
  %v838 = vadd.f32 %v633, %v830
  %v839 = vld [vmem:[%s2] sm:$0xff]
  %841 = vset.pattern.permute.xlu0 0
  %842 = vperm.xlu0 %841, %v839
  %v843 = vpop.permute.xlu0 %842
  %v845 = vadd.f32 %v831, %v843
  %v846 = vadd.f32 %v832, %v843
  %v847 = vadd.f32 %v833, %v843
  %v848 = vadd.f32 %v834, %v843
  %v849 = vadd.f32 %v835, %v843
  %v850 = vadd.f32 %v836, %v843
  %v851 = vadd.f32 %v837, %v843
  %v852 = vadd.f32 %v838, %v843
  %v853 = vmax.f32 %v845, 0.0
  %v854 = vmax.f32 %v846, 0.0
  %v855 = vmax.f32 %v847, 0.0
  %v856 = vmax.f32 %v848, 0.0
  %v857 = vmax.f32 %v849, 0.0
  %v858 = vmax.f32 %v850, 0.0
  %v859 = vmax.f32 %v851, 0.0
  %v860 = vmax.f32 %v852, 0.0
  %v861 = vpack.c.bf16 %v853, %v853
  %v862 = vpack.c.bf16 %v854, %v854
  %v863 = vpack.c.bf16 %v855, %v855
  %v864 = vpack.c.bf16 %v856, %v856
  %v865 = vpack.c.bf16 %v857, %v857
  %v866 = vpack.c.bf16 %v858, %v858
  %v867 = vpack.c.bf16 %v859, %v859
  %v868 = vpack.c.bf16 %v860, %v860
  %v869 = vld [vmem:[%s3] sm:$0xf]
  %s870 = scalar_lea.vmem %s3, 4
  %v871 = vld [vmem:[%s870] sm:$0xf]
  %vm872 = vcmask 64512
  %v874 = vsel %vm872, %v871, 0
  %v877 = vsel %vm252, %v861, 0
  %v880 = vsel %vm252, %v862, 0
  %v883 = vsel %vm252, %v863, 0
  %v886 = vsel %vm252, %v864, 0
  %v889 = vsel %vm252, %v865, 0
  %v892 = vsel %vm252, %v866, 0
  %v895 = vsel %vm252, %v867, 0
  %v898 = vsel %vm252, %v868, 0
  %900 = vmatprep.subr.bf16.mxu0 0
  %901 = vmatpush1.bf16.msra.mxu0 0
  %902 = vmatprep.subr.bf16.mxu0 0
  %903 = vmatpush1.bf16.msra.mxu0 0
  %904 = vmatprep.subr.bf16.mxu0 0
  %905 = vmatpush1.bf16.msra.mxu0 0
  %906 = vmatprep.subr.bf16.mxu0 0
  %907 = vmatpush1.bf16.msra.mxu0 0
  %908 = vmatprep.subr.bf16.mxu0 0
  %909 = vmatpush1.bf16.msra.mxu0 0
  %910 = vmatprep.subr.bf16.mxu0 0
  %911 = vmatpush1.bf16.msra.mxu0 0
  %912 = vmatprep.subr.bf16.mxu0 0
  %913 = vmatpush1.bf16.msra.mxu0 0
  %914 = vmatprep.subr.bf16.mxu0 %v880
  %915 = vmatpush1.bf16.msra.mxu0 %v877
  %916 = vmatprep.subr.bf16.mxu0 0
  %917 = vmatpush2.bf16.msra.mxu0 0
  %918 = vmatprep.subr.bf16.mxu0 0
  %919 = vmatpush2.bf16.msra.mxu0 0
  %920 = vmatprep.subr.bf16.mxu0 0
  %921 = vmatpush2.bf16.msra.mxu0 0
  %922 = vmatprep.subr.bf16.mxu0 0
  %923 = vmatpush2.bf16.msra.mxu0 0
  %924 = vmatprep.subr.bf16.mxu0 0
  %925 = vmatpush2.bf16.msra.mxu0 0
  %926 = vmatprep.subr.bf16.mxu0 0
  %927 = vmatpush2.bf16.msra.mxu0 0
  %928 = vmatprep.subr.bf16.mxu0 0
  %929 = vmatpush2.bf16.msra.mxu0 0
  %930 = vmatprep.subr.bf16.mxu0 0
  %931 = vmatpush2.bf16.msra.mxu0 0
  %932 = vmatprep.mubr.bf16.mxu0 0
  %933 = vmatmul.mubr.bf16.gmra.mxu0 %v874
  %v934 = vpop.f32.mrf.mxu0
  %v935 = vadd.f32 0.0, %v934
  %v936 = vpop.f32.mrf.mxu0
  %v937 = vadd.f32 0.0, %v936
  %v938 = vpop.f32.mrf.mxu0
  %v939 = vpop.f32.mrf.mxu0
  %940 = vdwg.mxu0
  %941 = vmatprep.subr.bf16.mxu0 0
  %942 = vmatpush1.bf16.msra.mxu0 0
  %943 = vmatprep.subr.bf16.mxu0 0
  %944 = vmatpush1.bf16.msra.mxu0 0
  %945 = vmatprep.subr.bf16.mxu0 0
  %946 = vmatpush1.bf16.msra.mxu0 0
  %947 = vmatprep.subr.bf16.mxu0 0
  %948 = vmatpush1.bf16.msra.mxu0 0
  %949 = vmatprep.subr.bf16.mxu0 0
  %950 = vmatpush1.bf16.msra.mxu0 0
  %951 = vmatprep.subr.bf16.mxu0 0
  %952 = vmatpush1.bf16.msra.mxu0 0
  %953 = vmatprep.subr.bf16.mxu0 0
  %954 = vmatpush1.bf16.msra.mxu0 0
  %955 = vmatprep.subr.bf16.mxu0 %v886
  %956 = vmatpush1.bf16.msra.mxu0 %v883
  %957 = vmatprep.subr.bf16.mxu0 0
  %958 = vmatpush2.bf16.msra.mxu0 0
  %959 = vmatprep.subr.bf16.mxu0 0
  %960 = vmatpush2.bf16.msra.mxu0 0
  %961 = vmatprep.subr.bf16.mxu0 0
  %962 = vmatpush2.bf16.msra.mxu0 0
  %963 = vmatprep.subr.bf16.mxu0 0
  %964 = vmatpush2.bf16.msra.mxu0 0
  %965 = vmatprep.subr.bf16.mxu0 0
  %966 = vmatpush2.bf16.msra.mxu0 0
  %967 = vmatprep.subr.bf16.mxu0 0
  %968 = vmatpush2.bf16.msra.mxu0 0
  %969 = vmatprep.subr.bf16.mxu0 0
  %970 = vmatpush2.bf16.msra.mxu0 0
  %971 = vmatprep.subr.bf16.mxu0 0
  %972 = vmatpush2.bf16.msra.mxu0 0
  %973 = vmatprep.mubr.bf16.mxu0 0
  %974 = vmatmul.mubr.bf16.gmra.mxu0 %v874
  %v975 = vpop.f32.mrf.mxu0
  %v976 = vadd.f32 0.0, %v975
  %v977 = vpop.f32.mrf.mxu0
  %v978 = vadd.f32 0.0, %v977
  %v979 = vpop.f32.mrf.mxu0
  %v980 = vpop.f32.mrf.mxu0
  %981 = vdwg.mxu0
  %982 = vmatprep.subr.bf16.mxu0 0
  %983 = vmatpush1.bf16.msra.mxu0 0
  %984 = vmatprep.subr.bf16.mxu0 0
  %985 = vmatpush1.bf16.msra.mxu0 0
  %986 = vmatprep.subr.bf16.mxu0 0
  %987 = vmatpush1.bf16.msra.mxu0 0
  %988 = vmatprep.subr.bf16.mxu0 0
  %989 = vmatpush1.bf16.msra.mxu0 0
  %990 = vmatprep.subr.bf16.mxu0 0
  %991 = vmatpush1.bf16.msra.mxu0 0
  %992 = vmatprep.subr.bf16.mxu0 0
  %993 = vmatpush1.bf16.msra.mxu0 0
  %994 = vmatprep.subr.bf16.mxu0 0
  %995 = vmatpush1.bf16.msra.mxu0 0
  %996 = vmatprep.subr.bf16.mxu0 %v892
  %997 = vmatpush1.bf16.msra.mxu0 %v889
  %998 = vmatprep.subr.bf16.mxu0 0
  %999 = vmatpush2.bf16.msra.mxu0 0
  %1000 = vmatprep.subr.bf16.mxu0 0
  %1001 = vmatpush2.bf16.msra.mxu0 0
  %1002 = vmatprep.subr.bf16.mxu0 0
  %1003 = vmatpush2.bf16.msra.mxu0 0
  %1004 = vmatprep.subr.bf16.mxu0 0
  %1005 = vmatpush2.bf16.msra.mxu0 0
  %1006 = vmatprep.subr.bf16.mxu0 0
  %1007 = vmatpush2.bf16.msra.mxu0 0
  %1008 = vmatprep.subr.bf16.mxu0 0
  %1009 = vmatpush2.bf16.msra.mxu0 0
  %1010 = vmatprep.subr.bf16.mxu0 0
  %1011 = vmatpush2.bf16.msra.mxu0 0
  %1012 = vmatprep.subr.bf16.mxu0 0
  %1013 = vmatpush2.bf16.msra.mxu0 0
  %1014 = vmatprep.mubr.bf16.mxu0 0
  %1015 = vmatmul.mubr.bf16.gmra.mxu0 %v874
  %v1016 = vpop.f32.mrf.mxu0
  %v1017 = vadd.f32 0.0, %v1016
  %v1018 = vpop.f32.mrf.mxu0
  %v1019 = vadd.f32 0.0, %v1018
  %v1020 = vpop.f32.mrf.mxu0
  %v1021 = vpop.f32.mrf.mxu0
  %1022 = vdwg.mxu0
  %1023 = vmatprep.subr.bf16.mxu0 0
  %1024 = vmatpush1.bf16.msra.mxu0 0
  %1025 = vmatprep.subr.bf16.mxu0 0
  %1026 = vmatpush1.bf16.msra.mxu0 0
  %1027 = vmatprep.subr.bf16.mxu0 0
  %1028 = vmatpush1.bf16.msra.mxu0 0
  %1029 = vmatprep.subr.bf16.mxu0 0
  %1030 = vmatpush1.bf16.msra.mxu0 0
  %1031 = vmatprep.subr.bf16.mxu0 0
  %1032 = vmatpush1.bf16.msra.mxu0 0
  %1033 = vmatprep.subr.bf16.mxu0 0
  %1034 = vmatpush1.bf16.msra.mxu0 0
  %1035 = vmatprep.subr.bf16.mxu0 0
  %1036 = vmatpush1.bf16.msra.mxu0 0
  %1037 = vmatprep.subr.bf16.mxu0 %v898
  %1038 = vmatpush1.bf16.msra.mxu0 %v895
  %1039 = vmatprep.subr.bf16.mxu0 0
  %1040 = vmatpush2.bf16.msra.mxu0 0
  %1041 = vmatprep.subr.bf16.mxu0 0
  %1042 = vmatpush2.bf16.msra.mxu0 0
  %1043 = vmatprep.subr.bf16.mxu0 0
  %1044 = vmatpush2.bf16.msra.mxu0 0
  %1045 = vmatprep.subr.bf16.mxu0 0
  %1046 = vmatpush2.bf16.msra.mxu0 0
  %1047 = vmatprep.subr.bf16.mxu0 0
  %1048 = vmatpush2.bf16.msra.mxu0 0
  %1049 = vmatprep.subr.bf16.mxu0 0
  %1050 = vmatpush2.bf16.msra.mxu0 0
  %1051 = vmatprep.subr.bf16.mxu0 0
  %1052 = vmatpush2.bf16.msra.mxu0 0
  %1053 = vmatprep.subr.bf16.mxu0 0
  %1054 = vmatpush2.bf16.msra.mxu0 0
  %1055 = vmatprep.mubr.bf16.mxu0 0
  %1056 = vmatmul.mubr.bf16.gmra.mxu0 %v874
  %v1057 = vpop.f32.mrf.mxu0
  %v1058 = vadd.f32 0.0, %v1057
  %v1059 = vpop.f32.mrf.mxu0
  %v1060 = vadd.f32 0.0, %v1059
  %v1061 = vpop.f32.mrf.mxu0
  %v1062 = vpop.f32.mrf.mxu0
  %1063 = vdwg.mxu0
  %1064 = vrot.lane.b32.xlu0 %v935, 127
  %v1065 = vpop.permute.xlu0 %1064
  %1066 = vrot.lane.b32.xlu0 %v937, 127
  %v1067 = vpop.permute.xlu0 %1066
  %1068 = vrot.lane.b32.xlu0 %v976, 127
  %v1069 = vpop.permute.xlu0 %1068
  %1070 = vrot.lane.b32.xlu0 %v978, 127
  %v1071 = vpop.permute.xlu0 %1070
  %1072 = vrot.lane.b32.xlu0 %v1017, 127
  %v1073 = vpop.permute.xlu0 %1072
  %1074 = vrot.lane.b32.xlu0 %v1019, 127
  %v1075 = vpop.permute.xlu0 %1074
  %1076 = vrot.lane.b32.xlu0 %v1058, 127
  %v1077 = vpop.permute.xlu0 %1076
  %1078 = vrot.lane.b32.xlu0 %v1060, 127
  %v1079 = vpop.permute.xlu0 %1078
  %v1080 = vsel %vm461, %v1077, %v1079
  %v1081 = vsel %vm461, %v1075, %v1077
  %v1082 = vsel %vm461, %v1073, %v1075
  %v1083 = vsel %vm461, %v1071, %v1073
  %v1084 = vsel %vm461, %v1069, %v1071
  %v1085 = vsel %vm461, %v1067, %v1069
  %v1086 = vsel %vm461, %v1065, %v1067
  %v1087 = vsel %vm461, %v1079, %v1065
  %v1089 = vsel %vm872, %v869, 0
  %1091 = vmatprep.subr.bf16.mxu0 0
  %1092 = vmatpush1.bf16.msra.mxu0 0
  %1093 = vmatprep.subr.bf16.mxu0 0
  %1094 = vmatpush1.bf16.msra.mxu0 0
  %1095 = vmatprep.subr.bf16.mxu0 0
  %1096 = vmatpush1.bf16.msra.mxu0 0
  %1097 = vmatprep.subr.bf16.mxu0 0
  %1098 = vmatpush1.bf16.msra.mxu0 0
  %1099 = vmatprep.subr.bf16.mxu0 0
  %1100 = vmatpush1.bf16.msra.mxu0 0
  %1101 = vmatprep.subr.bf16.mxu0 0
  %1102 = vmatpush1.bf16.msra.mxu0 0
  %1103 = vmatprep.subr.bf16.mxu0 0
  %1104 = vmatpush1.bf16.msra.mxu0 0
  %1105 = vmatprep.subr.bf16.mxu0 %v880
  %1106 = vmatpush1.bf16.msra.mxu0 %v877
  %1107 = vmatprep.subr.bf16.mxu0 0
  %1108 = vmatpush2.bf16.msra.mxu0 0
  %1109 = vmatprep.subr.bf16.mxu0 0
  %1110 = vmatpush2.bf16.msra.mxu0 0
  %1111 = vmatprep.subr.bf16.mxu0 0
  %1112 = vmatpush2.bf16.msra.mxu0 0
  %1113 = vmatprep.subr.bf16.mxu0 0
  %1114 = vmatpush2.bf16.msra.mxu0 0
  %1115 = vmatprep.subr.bf16.mxu0 0
  %1116 = vmatpush2.bf16.msra.mxu0 0
  %1117 = vmatprep.subr.bf16.mxu0 0
  %1118 = vmatpush2.bf16.msra.mxu0 0
  %1119 = vmatprep.subr.bf16.mxu0 0
  %1120 = vmatpush2.bf16.msra.mxu0 0
  %1121 = vmatprep.subr.bf16.mxu0 0
  %1122 = vmatpush2.bf16.msra.mxu0 0
  %1123 = vmatprep.mubr.bf16.mxu0 0
  %1124 = vmatmul.mubr.bf16.gmra.mxu0 %v1089
  %v1125 = vpop.f32.mrf.mxu0
  %v1126 = vadd.f32 %v1086, %v1125
  %v1127 = vpop.f32.mrf.mxu0
  %v1128 = vadd.f32 %v1085, %v1127
  %v1129 = vpop.f32.mrf.mxu0
  %v1130 = vpop.f32.mrf.mxu0
  %1131 = vdwg.mxu0
  %1132 = vmatprep.subr.bf16.mxu0 0
  %1133 = vmatpush1.bf16.msra.mxu0 0
  %1134 = vmatprep.subr.bf16.mxu0 0
  %1135 = vmatpush1.bf16.msra.mxu0 0
  %1136 = vmatprep.subr.bf16.mxu0 0
  %1137 = vmatpush1.bf16.msra.mxu0 0
  %1138 = vmatprep.subr.bf16.mxu0 0
  %1139 = vmatpush1.bf16.msra.mxu0 0
  %1140 = vmatprep.subr.bf16.mxu0 0
  %1141 = vmatpush1.bf16.msra.mxu0 0
  %1142 = vmatprep.subr.bf16.mxu0 0
  %1143 = vmatpush1.bf16.msra.mxu0 0
  %1144 = vmatprep.subr.bf16.mxu0 0
  %1145 = vmatpush1.bf16.msra.mxu0 0
  %1146 = vmatprep.subr.bf16.mxu0 %v886
  %1147 = vmatpush1.bf16.msra.mxu0 %v883
  %1148 = vmatprep.subr.bf16.mxu0 0
  %1149 = vmatpush2.bf16.msra.mxu0 0
  %1150 = vmatprep.subr.bf16.mxu0 0
  %1151 = vmatpush2.bf16.msra.mxu0 0
  %1152 = vmatprep.subr.bf16.mxu0 0
  %1153 = vmatpush2.bf16.msra.mxu0 0
  %1154 = vmatprep.subr.bf16.mxu0 0
  %1155 = vmatpush2.bf16.msra.mxu0 0
  %1156 = vmatprep.subr.bf16.mxu0 0
  %1157 = vmatpush2.bf16.msra.mxu0 0
  %1158 = vmatprep.subr.bf16.mxu0 0
  %1159 = vmatpush2.bf16.msra.mxu0 0
  %1160 = vmatprep.subr.bf16.mxu0 0
  %1161 = vmatpush2.bf16.msra.mxu0 0
  %1162 = vmatprep.subr.bf16.mxu0 0
  %1163 = vmatpush2.bf16.msra.mxu0 0
  %1164 = vmatprep.mubr.bf16.mxu0 0
  %1165 = vmatmul.mubr.bf16.gmra.mxu0 %v1089
  %v1166 = vpop.f32.mrf.mxu0
  %v1167 = vadd.f32 %v1084, %v1166
  %v1168 = vpop.f32.mrf.mxu0
  %v1169 = vadd.f32 %v1083, %v1168
  %v1170 = vpop.f32.mrf.mxu0
  %v1171 = vpop.f32.mrf.mxu0
  %1172 = vdwg.mxu0
  %1173 = vmatprep.subr.bf16.mxu0 0
  %1174 = vmatpush1.bf16.msra.mxu0 0
  %1175 = vmatprep.subr.bf16.mxu0 0
  %1176 = vmatpush1.bf16.msra.mxu0 0
  %1177 = vmatprep.subr.bf16.mxu0 0
  %1178 = vmatpush1.bf16.msra.mxu0 0
  %1179 = vmatprep.subr.bf16.mxu0 0
  %1180 = vmatpush1.bf16.msra.mxu0 0
  %1181 = vmatprep.subr.bf16.mxu0 0
  %1182 = vmatpush1.bf16.msra.mxu0 0
  %1183 = vmatprep.subr.bf16.mxu0 0
  %1184 = vmatpush1.bf16.msra.mxu0 0
  %1185 = vmatprep.subr.bf16.mxu0 0
  %1186 = vmatpush1.bf16.msra.mxu0 0
  %1187 = vmatprep.subr.bf16.mxu0 %v892
  %1188 = vmatpush1.bf16.msra.mxu0 %v889
  %1189 = vmatprep.subr.bf16.mxu0 0
  %1190 = vmatpush2.bf16.msra.mxu0 0
  %1191 = vmatprep.subr.bf16.mxu0 0
  %1192 = vmatpush2.bf16.msra.mxu0 0
  %1193 = vmatprep.subr.bf16.mxu0 0
  %1194 = vmatpush2.bf16.msra.mxu0 0
  %1195 = vmatprep.subr.bf16.mxu0 0
  %1196 = vmatpush2.bf16.msra.mxu0 0
  %1197 = vmatprep.subr.bf16.mxu0 0
  %1198 = vmatpush2.bf16.msra.mxu0 0
  %1199 = vmatprep.subr.bf16.mxu0 0
  %1200 = vmatpush2.bf16.msra.mxu0 0
  %1201 = vmatprep.subr.bf16.mxu0 0
  %1202 = vmatpush2.bf16.msra.mxu0 0
  %1203 = vmatprep.subr.bf16.mxu0 0
  %1204 = vmatpush2.bf16.msra.mxu0 0
  %1205 = vmatprep.mubr.bf16.mxu0 0
  %1206 = vmatmul.mubr.bf16.gmra.mxu0 %v1089
  %v1207 = vpop.f32.mrf.mxu0
  %v1208 = vadd.f32 %v1082, %v1207
  %v1209 = vpop.f32.mrf.mxu0
  %v1210 = vadd.f32 %v1081, %v1209
  %v1211 = vpop.f32.mrf.mxu0
  %v1212 = vpop.f32.mrf.mxu0
  %1213 = vdwg.mxu0
  %1214 = vmatprep.subr.bf16.mxu0 0
  %1215 = vmatpush1.bf16.msra.mxu0 0
  %1216 = vmatprep.subr.bf16.mxu0 0
  %1217 = vmatpush1.bf16.msra.mxu0 0
  %1218 = vmatprep.subr.bf16.mxu0 0
  %1219 = vmatpush1.bf16.msra.mxu0 0
  %1220 = vmatprep.subr.bf16.mxu0 0
  %1221 = vmatpush1.bf16.msra.mxu0 0
  %1222 = vmatprep.subr.bf16.mxu0 0
  %1223 = vmatpush1.bf16.msra.mxu0 0
  %1224 = vmatprep.subr.bf16.mxu0 0
  %1225 = vmatpush1.bf16.msra.mxu0 0
  %1226 = vmatprep.subr.bf16.mxu0 0
  %1227 = vmatpush1.bf16.msra.mxu0 0
  %1228 = vmatprep.subr.bf16.mxu0 %v898
  %1229 = vmatpush1.bf16.msra.mxu0 %v895
  %1230 = vmatprep.subr.bf16.mxu0 0
  %1231 = vmatpush2.bf16.msra.mxu0 0
  %1232 = vmatprep.subr.bf16.mxu0 0
  %1233 = vmatpush2.bf16.msra.mxu0 0
  %1234 = vmatprep.subr.bf16.mxu0 0
  %1235 = vmatpush2.bf16.msra.mxu0 0
  %1236 = vmatprep.subr.bf16.mxu0 0
  %1237 = vmatpush2.bf16.msra.mxu0 0
  %1238 = vmatprep.subr.bf16.mxu0 0
  %1239 = vmatpush2.bf16.msra.mxu0 0
  %1240 = vmatprep.subr.bf16.mxu0 0
  %1241 = vmatpush2.bf16.msra.mxu0 0
  %1242 = vmatprep.subr.bf16.mxu0 0
  %1243 = vmatpush2.bf16.msra.mxu0 0
  %1244 = vmatprep.subr.bf16.mxu0 0
  %1245 = vmatpush2.bf16.msra.mxu0 0
  %1246 = vmatprep.mubr.bf16.mxu0 0
  %1247 = vmatmul.mubr.bf16.gmra.mxu0 %v1089
  %v1248 = vpop.f32.mrf.mxu0
  %v1249 = vadd.f32 %v1080, %v1248
  %v1250 = vpop.f32.mrf.mxu0
  %v1251 = vadd.f32 %v1087, %v1250
  %v1252 = vpop.f32.mrf.mxu0
  %v1253 = vpop.f32.mrf.mxu0
  %1254 = vdwg.mxu0
  %s1255 = scalar_lea.vmem %s3, 8
  %v1256 = vld [vmem:[%s1255] sm:$0xf]
  %v1258 = vsel %vm872, %v1256, 0
  %1260 = vmatprep.subr.bf16.mxu0 0
  %1261 = vmatpush1.bf16.msra.mxu0 0
  %1262 = vmatprep.subr.bf16.mxu0 0
  %1263 = vmatpush1.bf16.msra.mxu0 0
  %1264 = vmatprep.subr.bf16.mxu0 0
  %1265 = vmatpush1.bf16.msra.mxu0 0
  %1266 = vmatprep.subr.bf16.mxu0 0
  %1267 = vmatpush1.bf16.msra.mxu0 0
  %1268 = vmatprep.subr.bf16.mxu0 0
  %1269 = vmatpush1.bf16.msra.mxu0 0
  %1270 = vmatprep.subr.bf16.mxu0 0
  %1271 = vmatpush1.bf16.msra.mxu0 0
  %1272 = vmatprep.subr.bf16.mxu0 0
  %1273 = vmatpush1.bf16.msra.mxu0 0
  %1274 = vmatprep.subr.bf16.mxu0 %v880
  %1275 = vmatpush1.bf16.msra.mxu0 %v877
  %1276 = vmatprep.subr.bf16.mxu0 0
  %1277 = vmatpush2.bf16.msra.mxu0 0
  %1278 = vmatprep.subr.bf16.mxu0 0
  %1279 = vmatpush2.bf16.msra.mxu0 0
  %1280 = vmatprep.subr.bf16.mxu0 0
  %1281 = vmatpush2.bf16.msra.mxu0 0
  %1282 = vmatprep.subr.bf16.mxu0 0
  %1283 = vmatpush2.bf16.msra.mxu0 0
  %1284 = vmatprep.subr.bf16.mxu0 0
  %1285 = vmatpush2.bf16.msra.mxu0 0
  %1286 = vmatprep.subr.bf16.mxu0 0
  %1287 = vmatpush2.bf16.msra.mxu0 0
  %1288 = vmatprep.subr.bf16.mxu0 0
  %1289 = vmatpush2.bf16.msra.mxu0 0
  %1290 = vmatprep.subr.bf16.mxu0 0
  %1291 = vmatpush2.bf16.msra.mxu0 0
  %1292 = vmatprep.mubr.bf16.mxu0 0
  %1293 = vmatmul.mubr.bf16.gmra.mxu0 %v1258
  %v1294 = vpop.f32.mrf.mxu0
  %v1295 = vadd.f32 0.0, %v1294
  %v1296 = vpop.f32.mrf.mxu0
  %v1297 = vadd.f32 0.0, %v1296
  %v1298 = vpop.f32.mrf.mxu0
  %v1299 = vpop.f32.mrf.mxu0
  %1300 = vdwg.mxu0
  %1301 = vmatprep.subr.bf16.mxu0 0
  %1302 = vmatpush1.bf16.msra.mxu0 0
  %1303 = vmatprep.subr.bf16.mxu0 0
  %1304 = vmatpush1.bf16.msra.mxu0 0
  %1305 = vmatprep.subr.bf16.mxu0 0
  %1306 = vmatpush1.bf16.msra.mxu0 0
  %1307 = vmatprep.subr.bf16.mxu0 0
  %1308 = vmatpush1.bf16.msra.mxu0 0
  %1309 = vmatprep.subr.bf16.mxu0 0
  %1310 = vmatpush1.bf16.msra.mxu0 0
  %1311 = vmatprep.subr.bf16.mxu0 0
  %1312 = vmatpush1.bf16.msra.mxu0 0
  %1313 = vmatprep.subr.bf16.mxu0 0
  %1314 = vmatpush1.bf16.msra.mxu0 0
  %1315 = vmatprep.subr.bf16.mxu0 %v886
  %1316 = vmatpush1.bf16.msra.mxu0 %v883
  %1317 = vmatprep.subr.bf16.mxu0 0
  %1318 = vmatpush2.bf16.msra.mxu0 0
  %1319 = vmatprep.subr.bf16.mxu0 0
  %1320 = vmatpush2.bf16.msra.mxu0 0
  %1321 = vmatprep.subr.bf16.mxu0 0
  %1322 = vmatpush2.bf16.msra.mxu0 0
  %1323 = vmatprep.subr.bf16.mxu0 0
  %1324 = vmatpush2.bf16.msra.mxu0 0
  %1325 = vmatprep.subr.bf16.mxu0 0
  %1326 = vmatpush2.bf16.msra.mxu0 0
  %1327 = vmatprep.subr.bf16.mxu0 0
  %1328 = vmatpush2.bf16.msra.mxu0 0
  %1329 = vmatprep.subr.bf16.mxu0 0
  %1330 = vmatpush2.bf16.msra.mxu0 0
  %1331 = vmatprep.subr.bf16.mxu0 0
  %1332 = vmatpush2.bf16.msra.mxu0 0
  %1333 = vmatprep.mubr.bf16.mxu0 0
  %1334 = vmatmul.mubr.bf16.gmra.mxu0 %v1258
  %v1335 = vpop.f32.mrf.mxu0
  %v1336 = vadd.f32 0.0, %v1335
  %v1337 = vpop.f32.mrf.mxu0
  %v1338 = vadd.f32 0.0, %v1337
  %v1339 = vpop.f32.mrf.mxu0
  %v1340 = vpop.f32.mrf.mxu0
  %1341 = vdwg.mxu0
  %1342 = vmatprep.subr.bf16.mxu0 0
  %1343 = vmatpush1.bf16.msra.mxu0 0
  %1344 = vmatprep.subr.bf16.mxu0 0
  %1345 = vmatpush1.bf16.msra.mxu0 0
  %1346 = vmatprep.subr.bf16.mxu0 0
  %1347 = vmatpush1.bf16.msra.mxu0 0
  %1348 = vmatprep.subr.bf16.mxu0 0
  %1349 = vmatpush1.bf16.msra.mxu0 0
  %1350 = vmatprep.subr.bf16.mxu0 0
  %1351 = vmatpush1.bf16.msra.mxu0 0
  %1352 = vmatprep.subr.bf16.mxu0 0
  %1353 = vmatpush1.bf16.msra.mxu0 0
  %1354 = vmatprep.subr.bf16.mxu0 0
  %1355 = vmatpush1.bf16.msra.mxu0 0
  %1356 = vmatprep.subr.bf16.mxu0 %v892
  %1357 = vmatpush1.bf16.msra.mxu0 %v889
  %1358 = vmatprep.subr.bf16.mxu0 0
  %1359 = vmatpush2.bf16.msra.mxu0 0
  %1360 = vmatprep.subr.bf16.mxu0 0
  %1361 = vmatpush2.bf16.msra.mxu0 0
  %1362 = vmatprep.subr.bf16.mxu0 0
  %1363 = vmatpush2.bf16.msra.mxu0 0
  %1364 = vmatprep.subr.bf16.mxu0 0
  %1365 = vmatpush2.bf16.msra.mxu0 0
  %1366 = vmatprep.subr.bf16.mxu0 0
  %1367 = vmatpush2.bf16.msra.mxu0 0
  %1368 = vmatprep.subr.bf16.mxu0 0
  %1369 = vmatpush2.bf16.msra.mxu0 0
  %1370 = vmatprep.subr.bf16.mxu0 0
  %1371 = vmatpush2.bf16.msra.mxu0 0
  %1372 = vmatprep.subr.bf16.mxu0 0
  %1373 = vmatpush2.bf16.msra.mxu0 0
  %1374 = vmatprep.mubr.bf16.mxu0 0
  %1375 = vmatmul.mubr.bf16.gmra.mxu0 %v1258
  %v1376 = vpop.f32.mrf.mxu0
  %v1377 = vadd.f32 0.0, %v1376
  %v1378 = vpop.f32.mrf.mxu0
  %v1379 = vadd.f32 0.0, %v1378
  %v1380 = vpop.f32.mrf.mxu0
  %v1381 = vpop.f32.mrf.mxu0
  %1382 = vdwg.mxu0
  %1383 = vmatprep.subr.bf16.mxu0 0
  %1384 = vmatpush1.bf16.msra.mxu0 0
  %1385 = vmatprep.subr.bf16.mxu0 0
  %1386 = vmatpush1.bf16.msra.mxu0 0
  %1387 = vmatprep.subr.bf16.mxu0 0
  %1388 = vmatpush1.bf16.msra.mxu0 0
  %1389 = vmatprep.subr.bf16.mxu0 0
  %1390 = vmatpush1.bf16.msra.mxu0 0
  %1391 = vmatprep.subr.bf16.mxu0 0
  %1392 = vmatpush1.bf16.msra.mxu0 0
  %1393 = vmatprep.subr.bf16.mxu0 0
  %1394 = vmatpush1.bf16.msra.mxu0 0
  %1395 = vmatprep.subr.bf16.mxu0 0
  %1396 = vmatpush1.bf16.msra.mxu0 0
  %1397 = vmatprep.subr.bf16.mxu0 %v898
  %1398 = vmatpush1.bf16.msra.mxu0 %v895
  %1399 = vmatprep.subr.bf16.mxu0 0
  %1400 = vmatpush2.bf16.msra.mxu0 0
  %1401 = vmatprep.subr.bf16.mxu0 0
  %1402 = vmatpush2.bf16.msra.mxu0 0
  %1403 = vmatprep.subr.bf16.mxu0 0
  %1404 = vmatpush2.bf16.msra.mxu0 0
  %1405 = vmatprep.subr.bf16.mxu0 0
  %1406 = vmatpush2.bf16.msra.mxu0 0
  %1407 = vmatprep.subr.bf16.mxu0 0
  %1408 = vmatpush2.bf16.msra.mxu0 0
  %1409 = vmatprep.subr.bf16.mxu0 0
  %1410 = vmatpush2.bf16.msra.mxu0 0
  %1411 = vmatprep.subr.bf16.mxu0 0
  %1412 = vmatpush2.bf16.msra.mxu0 0
  %1413 = vmatprep.subr.bf16.mxu0 0
  %1414 = vmatpush2.bf16.msra.mxu0 0
  %1415 = vmatprep.mubr.bf16.mxu0 0
  %1416 = vmatmul.mubr.bf16.gmra.mxu0 %v1258
  %v1417 = vpop.f32.mrf.mxu0
  %v1418 = vadd.f32 0.0, %v1417
  %v1419 = vpop.f32.mrf.mxu0
  %v1420 = vadd.f32 0.0, %v1419
  %v1421 = vpop.f32.mrf.mxu0
  %v1422 = vpop.f32.mrf.mxu0
  %1423 = vdwg.mxu0
  %1424 = vrot.lane.b32.xlu0 %v1295, 126
  %v1425 = vpop.permute.xlu0 %1424
  %1426 = vrot.lane.b32.xlu0 %v1297, 126
  %v1427 = vpop.permute.xlu0 %1426
  %1428 = vrot.lane.b32.xlu0 %v1336, 126
  %v1429 = vpop.permute.xlu0 %1428
  %1430 = vrot.lane.b32.xlu0 %v1338, 126
  %v1431 = vpop.permute.xlu0 %1430
  %1432 = vrot.lane.b32.xlu0 %v1377, 126
  %v1433 = vpop.permute.xlu0 %1432
  %1434 = vrot.lane.b32.xlu0 %v1379, 126
  %v1435 = vpop.permute.xlu0 %1434
  %1436 = vrot.lane.b32.xlu0 %v1418, 126
  %v1437 = vpop.permute.xlu0 %1436
  %1438 = vrot.lane.b32.xlu0 %v1420, 126
  %v1439 = vpop.permute.xlu0 %1438
  %v1440 = vsel %vm822, %v1437, %v1439
  %v1441 = vsel %vm822, %v1435, %v1437
  %v1442 = vsel %vm822, %v1433, %v1435
  %v1443 = vsel %vm822, %v1431, %v1433
  %v1444 = vsel %vm822, %v1429, %v1431
  %v1445 = vsel %vm822, %v1427, %v1429
  %v1446 = vsel %vm822, %v1425, %v1427
  %v1447 = vsel %vm822, %v1439, %v1425
  %v1448 = vadd.f32 %v1126, %v1446
  %v1449 = vadd.f32 %v1128, %v1445
  %v1450 = vadd.f32 %v1167, %v1444
  %v1451 = vadd.f32 %v1169, %v1443
  %v1452 = vadd.f32 %v1208, %v1442
  %v1453 = vadd.f32 %v1210, %v1441
  %v1454 = vadd.f32 %v1249, %v1440
  %v1455 = vadd.f32 %v1251, %v1447
  %v1456 = vld [vmem:[%s4] sm:$0xff]
  %1458 = vset.pattern.permute.xlu0 0
  %1459 = vperm.xlu0 %1458, %v1456
  %v1460 = vpop.permute.xlu0 %1459
  %v1462 = vadd.f32 %v1448, %v1460
  %v1463 = vadd.f32 %v1449, %v1460
  %v1464 = vadd.f32 %v1450, %v1460
  %v1465 = vadd.f32 %v1451, %v1460
  %v1466 = vadd.f32 %v1452, %v1460
  %v1467 = vadd.f32 %v1453, %v1460
  %v1468 = vadd.f32 %v1454, %v1460
  %v1469 = vadd.f32 %v1455, %v1460
  %v1470 = vmax.f32 %v1462, 0.0
  %v1471 = vmax.f32 %v1463, 0.0
  %v1472 = vmax.f32 %v1464, 0.0
  %v1473 = vmax.f32 %v1465, 0.0
  %v1474 = vmax.f32 %v1466, 0.0
  %v1475 = vmax.f32 %v1467, 0.0
  %v1476 = vmax.f32 %v1468, 0.0
  %v1477 = vmax.f32 %v1469, 0.0
  %v1478 = vpack.c.bf16 %v1470, %v1470
  %v1479 = vpack.c.bf16 %v1471, %v1471
  %v1480 = vpack.c.bf16 %v1472, %v1472
  %v1481 = vpack.c.bf16 %v1473, %v1473
  %v1482 = vpack.c.bf16 %v1474, %v1474
  %v1483 = vpack.c.bf16 %v1475, %v1475
  %v1484 = vpack.c.bf16 %v1476, %v1476
  %v1485 = vpack.c.bf16 %v1477, %v1477
  %v1486 = vld [vmem:[%s5] sm:$0xf]
  %s1487 = scalar_lea.vmem %s5, 4
  %v1488 = vld [vmem:[%s1487] sm:$0xf]
  %v1490 = vsel %vm872, %v1488, 0
  %v1493 = vsel %vm252, %v1478, 0
  %v1496 = vsel %vm252, %v1479, 0
  %v1499 = vsel %vm252, %v1480, 0
  %v1502 = vsel %vm252, %v1481, 0
  %v1505 = vsel %vm252, %v1482, 0
  %v1508 = vsel %vm252, %v1483, 0
  %v1511 = vsel %vm252, %v1484, 0
  %v1514 = vsel %vm252, %v1485, 0
  %1516 = vmatprep.subr.bf16.mxu0 0
  %1517 = vmatpush1.bf16.msra.mxu0 0
  %1518 = vmatprep.subr.bf16.mxu0 0
  %1519 = vmatpush1.bf16.msra.mxu0 0
  %1520 = vmatprep.subr.bf16.mxu0 0
  %1521 = vmatpush1.bf16.msra.mxu0 0
  %1522 = vmatprep.subr.bf16.mxu0 0
  %1523 = vmatpush1.bf16.msra.mxu0 0
  %1524 = vmatprep.subr.bf16.mxu0 0
  %1525 = vmatpush1.bf16.msra.mxu0 0
  %1526 = vmatprep.subr.bf16.mxu0 0
  %1527 = vmatpush1.bf16.msra.mxu0 0
  %1528 = vmatprep.subr.bf16.mxu0 0
  %1529 = vmatpush1.bf16.msra.mxu0 0
  %1530 = vmatprep.subr.bf16.mxu0 %v1496
  %1531 = vmatpush1.bf16.msra.mxu0 %v1493
  %1532 = vmatprep.subr.bf16.mxu0 0
  %1533 = vmatpush2.bf16.msra.mxu0 0
  %1534 = vmatprep.subr.bf16.mxu0 0
  %1535 = vmatpush2.bf16.msra.mxu0 0
  %1536 = vmatprep.subr.bf16.mxu0 0
  %1537 = vmatpush2.bf16.msra.mxu0 0
  %1538 = vmatprep.subr.bf16.mxu0 0
  %1539 = vmatpush2.bf16.msra.mxu0 0
  %1540 = vmatprep.subr.bf16.mxu0 0
  %1541 = vmatpush2.bf16.msra.mxu0 0
  %1542 = vmatprep.subr.bf16.mxu0 0
  %1543 = vmatpush2.bf16.msra.mxu0 0
  %1544 = vmatprep.subr.bf16.mxu0 0
  %1545 = vmatpush2.bf16.msra.mxu0 0
  %1546 = vmatprep.subr.bf16.mxu0 0
  %1547 = vmatpush2.bf16.msra.mxu0 0
  %1548 = vmatprep.mubr.bf16.mxu0 0
  %1549 = vmatmul.mubr.bf16.gmra.mxu0 %v1490
  %v1550 = vpop.f32.mrf.mxu0
  %v1551 = vadd.f32 0.0, %v1550
  %v1552 = vpop.f32.mrf.mxu0
  %v1553 = vadd.f32 0.0, %v1552
  %v1554 = vpop.f32.mrf.mxu0
  %v1555 = vpop.f32.mrf.mxu0
  %1556 = vdwg.mxu0
  %1557 = vmatprep.subr.bf16.mxu0 0
  %1558 = vmatpush1.bf16.msra.mxu0 0
  %1559 = vmatprep.subr.bf16.mxu0 0
  %1560 = vmatpush1.bf16.msra.mxu0 0
  %1561 = vmatprep.subr.bf16.mxu0 0
  %1562 = vmatpush1.bf16.msra.mxu0 0
  %1563 = vmatprep.subr.bf16.mxu0 0
  %1564 = vmatpush1.bf16.msra.mxu0 0
  %1565 = vmatprep.subr.bf16.mxu0 0
  %1566 = vmatpush1.bf16.msra.mxu0 0
  %1567 = vmatprep.subr.bf16.mxu0 0
  %1568 = vmatpush1.bf16.msra.mxu0 0
  %1569 = vmatprep.subr.bf16.mxu0 0
  %1570 = vmatpush1.bf16.msra.mxu0 0
  %1571 = vmatprep.subr.bf16.mxu0 %v1502
  %1572 = vmatpush1.bf16.msra.mxu0 %v1499
  %1573 = vmatprep.subr.bf16.mxu0 0
  %1574 = vmatpush2.bf16.msra.mxu0 0
  %1575 = vmatprep.subr.bf16.mxu0 0
  %1576 = vmatpush2.bf16.msra.mxu0 0
  %1577 = vmatprep.subr.bf16.mxu0 0
  %1578 = vmatpush2.bf16.msra.mxu0 0
  %1579 = vmatprep.subr.bf16.mxu0 0
  %1580 = vmatpush2.bf16.msra.mxu0 0
  %1581 = vmatprep.subr.bf16.mxu0 0
  %1582 = vmatpush2.bf16.msra.mxu0 0
  %1583 = vmatprep.subr.bf16.mxu0 0
  %1584 = vmatpush2.bf16.msra.mxu0 0
  %1585 = vmatprep.subr.bf16.mxu0 0
  %1586 = vmatpush2.bf16.msra.mxu0 0
  %1587 = vmatprep.subr.bf16.mxu0 0
  %1588 = vmatpush2.bf16.msra.mxu0 0
  %1589 = vmatprep.mubr.bf16.mxu0 0
  %1590 = vmatmul.mubr.bf16.gmra.mxu0 %v1490
  %v1591 = vpop.f32.mrf.mxu0
  %v1592 = vadd.f32 0.0, %v1591
  %v1593 = vpop.f32.mrf.mxu0
  %v1594 = vadd.f32 0.0, %v1593
  %v1595 = vpop.f32.mrf.mxu0
  %v1596 = vpop.f32.mrf.mxu0
  %1597 = vdwg.mxu0
  %1598 = vmatprep.subr.bf16.mxu0 0
  %1599 = vmatpush1.bf16.msra.mxu0 0
  %1600 = vmatprep.subr.bf16.mxu0 0
  %1601 = vmatpush1.bf16.msra.mxu0 0
  %1602 = vmatprep.subr.bf16.mxu0 0
  %1603 = vmatpush1.bf16.msra.mxu0 0
  %1604 = vmatprep.subr.bf16.mxu0 0
  %1605 = vmatpush1.bf16.msra.mxu0 0
  %1606 = vmatprep.subr.bf16.mxu0 0
  %1607 = vmatpush1.bf16.msra.mxu0 0
  %1608 = vmatprep.subr.bf16.mxu0 0
  %1609 = vmatpush1.bf16.msra.mxu0 0
  %1610 = vmatprep.subr.bf16.mxu0 0
  %1611 = vmatpush1.bf16.msra.mxu0 0
  %1612 = vmatprep.subr.bf16.mxu0 %v1508
  %1613 = vmatpush1.bf16.msra.mxu0 %v1505
  %1614 = vmatprep.subr.bf16.mxu0 0
  %1615 = vmatpush2.bf16.msra.mxu0 0
  %1616 = vmatprep.subr.bf16.mxu0 0
  %1617 = vmatpush2.bf16.msra.mxu0 0
  %1618 = vmatprep.subr.bf16.mxu0 0
  %1619 = vmatpush2.bf16.msra.mxu0 0
  %1620 = vmatprep.subr.bf16.mxu0 0
  %1621 = vmatpush2.bf16.msra.mxu0 0
  %1622 = vmatprep.subr.bf16.mxu0 0
  %1623 = vmatpush2.bf16.msra.mxu0 0
  %1624 = vmatprep.subr.bf16.mxu0 0
  %1625 = vmatpush2.bf16.msra.mxu0 0
  %1626 = vmatprep.subr.bf16.mxu0 0
  %1627 = vmatpush2.bf16.msra.mxu0 0
  %1628 = vmatprep.subr.bf16.mxu0 0
  %1629 = vmatpush2.bf16.msra.mxu0 0
  %1630 = vmatprep.mubr.bf16.mxu0 0
  %1631 = vmatmul.mubr.bf16.gmra.mxu0 %v1490
  %v1632 = vpop.f32.mrf.mxu0
  %v1633 = vadd.f32 0.0, %v1632
  %v1634 = vpop.f32.mrf.mxu0
  %v1635 = vadd.f32 0.0, %v1634
  %v1636 = vpop.f32.mrf.mxu0
  %v1637 = vpop.f32.mrf.mxu0
  %1638 = vdwg.mxu0
  %1639 = vmatprep.subr.bf16.mxu0 0
  %1640 = vmatpush1.bf16.msra.mxu0 0
  %1641 = vmatprep.subr.bf16.mxu0 0
  %1642 = vmatpush1.bf16.msra.mxu0 0
  %1643 = vmatprep.subr.bf16.mxu0 0
  %1644 = vmatpush1.bf16.msra.mxu0 0
  %1645 = vmatprep.subr.bf16.mxu0 0
  %1646 = vmatpush1.bf16.msra.mxu0 0
  %1647 = vmatprep.subr.bf16.mxu0 0
  %1648 = vmatpush1.bf16.msra.mxu0 0
  %1649 = vmatprep.subr.bf16.mxu0 0
  %1650 = vmatpush1.bf16.msra.mxu0 0
  %1651 = vmatprep.subr.bf16.mxu0 0
  %1652 = vmatpush1.bf16.msra.mxu0 0
  %1653 = vmatprep.subr.bf16.mxu0 %v1514
  %1654 = vmatpush1.bf16.msra.mxu0 %v1511
  %1655 = vmatprep.subr.bf16.mxu0 0
  %1656 = vmatpush2.bf16.msra.mxu0 0
  %1657 = vmatprep.subr.bf16.mxu0 0
  %1658 = vmatpush2.bf16.msra.mxu0 0
  %1659 = vmatprep.subr.bf16.mxu0 0
  %1660 = vmatpush2.bf16.msra.mxu0 0
  %1661 = vmatprep.subr.bf16.mxu0 0
  %1662 = vmatpush2.bf16.msra.mxu0 0
  %1663 = vmatprep.subr.bf16.mxu0 0
  %1664 = vmatpush2.bf16.msra.mxu0 0
  %1665 = vmatprep.subr.bf16.mxu0 0
  %1666 = vmatpush2.bf16.msra.mxu0 0
  %1667 = vmatprep.subr.bf16.mxu0 0
  %1668 = vmatpush2.bf16.msra.mxu0 0
  %1669 = vmatprep.subr.bf16.mxu0 0
  %1670 = vmatpush2.bf16.msra.mxu0 0
  %1671 = vmatprep.mubr.bf16.mxu0 0
  %1672 = vmatmul.mubr.bf16.gmra.mxu0 %v1490
  %v1673 = vpop.f32.mrf.mxu0
  %v1674 = vadd.f32 0.0, %v1673
  %v1675 = vpop.f32.mrf.mxu0
  %v1676 = vadd.f32 0.0, %v1675
  %v1677 = vpop.f32.mrf.mxu0
  %v1678 = vpop.f32.mrf.mxu0
  %1679 = vdwg.mxu0
  %1680 = vrot.lane.b32.xlu0 %v1551, 127
  %v1681 = vpop.permute.xlu0 %1680
  %1682 = vrot.lane.b32.xlu0 %v1553, 127
  %v1683 = vpop.permute.xlu0 %1682
  %1684 = vrot.lane.b32.xlu0 %v1592, 127
  %v1685 = vpop.permute.xlu0 %1684
  %1686 = vrot.lane.b32.xlu0 %v1594, 127
  %v1687 = vpop.permute.xlu0 %1686
  %1688 = vrot.lane.b32.xlu0 %v1633, 127
  %v1689 = vpop.permute.xlu0 %1688
  %1690 = vrot.lane.b32.xlu0 %v1635, 127
  %v1691 = vpop.permute.xlu0 %1690
  %1692 = vrot.lane.b32.xlu0 %v1674, 127
  %v1693 = vpop.permute.xlu0 %1692
  %1694 = vrot.lane.b32.xlu0 %v1676, 127
  %v1695 = vpop.permute.xlu0 %1694
  %v1696 = vsel %vm461, %v1693, %v1695
  %v1697 = vsel %vm461, %v1691, %v1693
  %v1698 = vsel %vm461, %v1689, %v1691
  %v1699 = vsel %vm461, %v1687, %v1689
  %v1700 = vsel %vm461, %v1685, %v1687
  %v1701 = vsel %vm461, %v1683, %v1685
  %v1702 = vsel %vm461, %v1681, %v1683
  %v1703 = vsel %vm461, %v1695, %v1681
  %v1705 = vsel %vm872, %v1486, 0
  %1707 = vmatprep.subr.bf16.mxu0 0
  %1708 = vmatpush1.bf16.msra.mxu0 0
  %1709 = vmatprep.subr.bf16.mxu0 0
  %1710 = vmatpush1.bf16.msra.mxu0 0
  %1711 = vmatprep.subr.bf16.mxu0 0
  %1712 = vmatpush1.bf16.msra.mxu0 0
  %1713 = vmatprep.subr.bf16.mxu0 0
  %1714 = vmatpush1.bf16.msra.mxu0 0
  %1715 = vmatprep.subr.bf16.mxu0 0
  %1716 = vmatpush1.bf16.msra.mxu0 0
  %1717 = vmatprep.subr.bf16.mxu0 0
  %1718 = vmatpush1.bf16.msra.mxu0 0
  %1719 = vmatprep.subr.bf16.mxu0 0
  %1720 = vmatpush1.bf16.msra.mxu0 0
  %1721 = vmatprep.subr.bf16.mxu0 %v1496
  %1722 = vmatpush1.bf16.msra.mxu0 %v1493
  %1723 = vmatprep.subr.bf16.mxu0 0
  %1724 = vmatpush2.bf16.msra.mxu0 0
  %1725 = vmatprep.subr.bf16.mxu0 0
  %1726 = vmatpush2.bf16.msra.mxu0 0
  %1727 = vmatprep.subr.bf16.mxu0 0
  %1728 = vmatpush2.bf16.msra.mxu0 0
  %1729 = vmatprep.subr.bf16.mxu0 0
  %1730 = vmatpush2.bf16.msra.mxu0 0
  %1731 = vmatprep.subr.bf16.mxu0 0
  %1732 = vmatpush2.bf16.msra.mxu0 0
  %1733 = vmatprep.subr.bf16.mxu0 0
  %1734 = vmatpush2.bf16.msra.mxu0 0
  %1735 = vmatprep.subr.bf16.mxu0 0
  %1736 = vmatpush2.bf16.msra.mxu0 0
  %1737 = vmatprep.subr.bf16.mxu0 0
  %1738 = vmatpush2.bf16.msra.mxu0 0
  %1739 = vmatprep.mubr.bf16.mxu0 0
  %1740 = vmatmul.mubr.bf16.gmra.mxu0 %v1705
  %v1741 = vpop.f32.mrf.mxu0
  %v1742 = vadd.f32 %v1702, %v1741
  %v1743 = vpop.f32.mrf.mxu0
  %v1744 = vadd.f32 %v1701, %v1743
  %v1745 = vpop.f32.mrf.mxu0
  %v1746 = vpop.f32.mrf.mxu0
  %1747 = vdwg.mxu0
  %1748 = vmatprep.subr.bf16.mxu0 0
  %1749 = vmatpush1.bf16.msra.mxu0 0
  %1750 = vmatprep.subr.bf16.mxu0 0
  %1751 = vmatpush1.bf16.msra.mxu0 0
  %1752 = vmatprep.subr.bf16.mxu0 0
  %1753 = vmatpush1.bf16.msra.mxu0 0
  %1754 = vmatprep.subr.bf16.mxu0 0
  %1755 = vmatpush1.bf16.msra.mxu0 0
  %1756 = vmatprep.subr.bf16.mxu0 0
  %1757 = vmatpush1.bf16.msra.mxu0 0
  %1758 = vmatprep.subr.bf16.mxu0 0
  %1759 = vmatpush1.bf16.msra.mxu0 0
  %1760 = vmatprep.subr.bf16.mxu0 0
  %1761 = vmatpush1.bf16.msra.mxu0 0
  %1762 = vmatprep.subr.bf16.mxu0 %v1502
  %1763 = vmatpush1.bf16.msra.mxu0 %v1499
  %1764 = vmatprep.subr.bf16.mxu0 0
  %1765 = vmatpush2.bf16.msra.mxu0 0
  %1766 = vmatprep.subr.bf16.mxu0 0
  %1767 = vmatpush2.bf16.msra.mxu0 0
  %1768 = vmatprep.subr.bf16.mxu0 0
  %1769 = vmatpush2.bf16.msra.mxu0 0
  %1770 = vmatprep.subr.bf16.mxu0 0
  %1771 = vmatpush2.bf16.msra.mxu0 0
  %1772 = vmatprep.subr.bf16.mxu0 0
  %1773 = vmatpush2.bf16.msra.mxu0 0
  %1774 = vmatprep.subr.bf16.mxu0 0
  %1775 = vmatpush2.bf16.msra.mxu0 0
  %1776 = vmatprep.subr.bf16.mxu0 0
  %1777 = vmatpush2.bf16.msra.mxu0 0
  %1778 = vmatprep.subr.bf16.mxu0 0
  %1779 = vmatpush2.bf16.msra.mxu0 0
  %1780 = vmatprep.mubr.bf16.mxu0 0
  %1781 = vmatmul.mubr.bf16.gmra.mxu0 %v1705
  %v1782 = vpop.f32.mrf.mxu0
  %v1783 = vadd.f32 %v1700, %v1782
  %v1784 = vpop.f32.mrf.mxu0
  %v1785 = vadd.f32 %v1699, %v1784
  %v1786 = vpop.f32.mrf.mxu0
  %v1787 = vpop.f32.mrf.mxu0
  %1788 = vdwg.mxu0
  %1789 = vmatprep.subr.bf16.mxu0 0
  %1790 = vmatpush1.bf16.msra.mxu0 0
  %1791 = vmatprep.subr.bf16.mxu0 0
  %1792 = vmatpush1.bf16.msra.mxu0 0
  %1793 = vmatprep.subr.bf16.mxu0 0
  %1794 = vmatpush1.bf16.msra.mxu0 0
  %1795 = vmatprep.subr.bf16.mxu0 0
  %1796 = vmatpush1.bf16.msra.mxu0 0
  %1797 = vmatprep.subr.bf16.mxu0 0
  %1798 = vmatpush1.bf16.msra.mxu0 0
  %1799 = vmatprep.subr.bf16.mxu0 0
  %1800 = vmatpush1.bf16.msra.mxu0 0
  %1801 = vmatprep.subr.bf16.mxu0 0
  %1802 = vmatpush1.bf16.msra.mxu0 0
  %1803 = vmatprep.subr.bf16.mxu0 %v1508
  %1804 = vmatpush1.bf16.msra.mxu0 %v1505
  %1805 = vmatprep.subr.bf16.mxu0 0
  %1806 = vmatpush2.bf16.msra.mxu0 0
  %1807 = vmatprep.subr.bf16.mxu0 0
  %1808 = vmatpush2.bf16.msra.mxu0 0
  %1809 = vmatprep.subr.bf16.mxu0 0
  %1810 = vmatpush2.bf16.msra.mxu0 0
  %1811 = vmatprep.subr.bf16.mxu0 0
  %1812 = vmatpush2.bf16.msra.mxu0 0
  %1813 = vmatprep.subr.bf16.mxu0 0
  %1814 = vmatpush2.bf16.msra.mxu0 0
  %1815 = vmatprep.subr.bf16.mxu0 0
  %1816 = vmatpush2.bf16.msra.mxu0 0
  %1817 = vmatprep.subr.bf16.mxu0 0
  %1818 = vmatpush2.bf16.msra.mxu0 0
  %1819 = vmatprep.subr.bf16.mxu0 0
  %1820 = vmatpush2.bf16.msra.mxu0 0
  %1821 = vmatprep.mubr.bf16.mxu0 0
  %1822 = vmatmul.mubr.bf16.gmra.mxu0 %v1705
  %v1823 = vpop.f32.mrf.mxu0
  %v1824 = vadd.f32 %v1698, %v1823
  %v1825 = vpop.f32.mrf.mxu0
  %v1826 = vadd.f32 %v1697, %v1825
  %v1827 = vpop.f32.mrf.mxu0
  %v1828 = vpop.f32.mrf.mxu0
  %1829 = vdwg.mxu0
  %1830 = vmatprep.subr.bf16.mxu0 0
  %1831 = vmatpush1.bf16.msra.mxu0 0
  %1832 = vmatprep.subr.bf16.mxu0 0
  %1833 = vmatpush1.bf16.msra.mxu0 0
  %1834 = vmatprep.subr.bf16.mxu0 0
  %1835 = vmatpush1.bf16.msra.mxu0 0
  %1836 = vmatprep.subr.bf16.mxu0 0
  %1837 = vmatpush1.bf16.msra.mxu0 0
  %1838 = vmatprep.subr.bf16.mxu0 0
  %1839 = vmatpush1.bf16.msra.mxu0 0
  %1840 = vmatprep.subr.bf16.mxu0 0
  %1841 = vmatpush1.bf16.msra.mxu0 0
  %1842 = vmatprep.subr.bf16.mxu0 0
  %1843 = vmatpush1.bf16.msra.mxu0 0
  %1844 = vmatprep.subr.bf16.mxu0 %v1514
  %1845 = vmatpush1.bf16.msra.mxu0 %v1511
  %1846 = vmatprep.subr.bf16.mxu0 0
  %1847 = vmatpush2.bf16.msra.mxu0 0
  %1848 = vmatprep.subr.bf16.mxu0 0
  %1849 = vmatpush2.bf16.msra.mxu0 0
  %1850 = vmatprep.subr.bf16.mxu0 0
  %1851 = vmatpush2.bf16.msra.mxu0 0
  %1852 = vmatprep.subr.bf16.mxu0 0
  %1853 = vmatpush2.bf16.msra.mxu0 0
  %1854 = vmatprep.subr.bf16.mxu0 0
  %1855 = vmatpush2.bf16.msra.mxu0 0
  %1856 = vmatprep.subr.bf16.mxu0 0
  %1857 = vmatpush2.bf16.msra.mxu0 0
  %1858 = vmatprep.subr.bf16.mxu0 0
  %1859 = vmatpush2.bf16.msra.mxu0 0
  %1860 = vmatprep.subr.bf16.mxu0 0
  %1861 = vmatpush2.bf16.msra.mxu0 0
  %1862 = vmatprep.mubr.bf16.mxu0 0
  %1863 = vmatmul.mubr.bf16.gmra.mxu0 %v1705
  %v1864 = vpop.f32.mrf.mxu0
  %v1865 = vadd.f32 %v1696, %v1864
  %v1866 = vpop.f32.mrf.mxu0
  %v1867 = vadd.f32 %v1703, %v1866
  %v1868 = vpop.f32.mrf.mxu0
  %v1869 = vpop.f32.mrf.mxu0
  %1870 = vdwg.mxu0
  %s1871 = scalar_lea.vmem %s5, 8
  %v1872 = vld [vmem:[%s1871] sm:$0xf]
  %v1874 = vsel %vm872, %v1872, 0
  %1876 = vmatprep.subr.bf16.mxu0 0
  %1877 = vmatpush1.bf16.msra.mxu0 0
  %1878 = vmatprep.subr.bf16.mxu0 0
  %1879 = vmatpush1.bf16.msra.mxu0 0
  %1880 = vmatprep.subr.bf16.mxu0 0
  %1881 = vmatpush1.bf16.msra.mxu0 0
  %1882 = vmatprep.subr.bf16.mxu0 0
  %1883 = vmatpush1.bf16.msra.mxu0 0
  %1884 = vmatprep.subr.bf16.mxu0 0
  %1885 = vmatpush1.bf16.msra.mxu0 0
  %1886 = vmatprep.subr.bf16.mxu0 0
  %1887 = vmatpush1.bf16.msra.mxu0 0
  %1888 = vmatprep.subr.bf16.mxu0 0
  %1889 = vmatpush1.bf16.msra.mxu0 0
  %1890 = vmatprep.subr.bf16.mxu0 %v1496
  %1891 = vmatpush1.bf16.msra.mxu0 %v1493
  %1892 = vmatprep.subr.bf16.mxu0 0
  %1893 = vmatpush2.bf16.msra.mxu0 0
  %1894 = vmatprep.subr.bf16.mxu0 0
  %1895 = vmatpush2.bf16.msra.mxu0 0
  %1896 = vmatprep.subr.bf16.mxu0 0
  %1897 = vmatpush2.bf16.msra.mxu0 0
  %1898 = vmatprep.subr.bf16.mxu0 0
  %1899 = vmatpush2.bf16.msra.mxu0 0
  %1900 = vmatprep.subr.bf16.mxu0 0
  %1901 = vmatpush2.bf16.msra.mxu0 0
  %1902 = vmatprep.subr.bf16.mxu0 0
  %1903 = vmatpush2.bf16.msra.mxu0 0
  %1904 = vmatprep.subr.bf16.mxu0 0
  %1905 = vmatpush2.bf16.msra.mxu0 0
  %1906 = vmatprep.subr.bf16.mxu0 0
  %1907 = vmatpush2.bf16.msra.mxu0 0
  %1908 = vmatprep.mubr.bf16.mxu0 0
  %1909 = vmatmul.mubr.bf16.gmra.mxu0 %v1874
  %v1910 = vpop.f32.mrf.mxu0
  %v1911 = vadd.f32 0.0, %v1910
  %v1912 = vpop.f32.mrf.mxu0
  %v1913 = vadd.f32 0.0, %v1912
  %v1914 = vpop.f32.mrf.mxu0
  %v1915 = vpop.f32.mrf.mxu0
  %1916 = vdwg.mxu0
  %1917 = vmatprep.subr.bf16.mxu0 0
  %1918 = vmatpush1.bf16.msra.mxu0 0
  %1919 = vmatprep.subr.bf16.mxu0 0
  %1920 = vmatpush1.bf16.msra.mxu0 0
  %1921 = vmatprep.subr.bf16.mxu0 0
  %1922 = vmatpush1.bf16.msra.mxu0 0
  %1923 = vmatprep.subr.bf16.mxu0 0
  %1924 = vmatpush1.bf16.msra.mxu0 0
  %1925 = vmatprep.subr.bf16.mxu0 0
  %1926 = vmatpush1.bf16.msra.mxu0 0
  %1927 = vmatprep.subr.bf16.mxu0 0
  %1928 = vmatpush1.bf16.msra.mxu0 0
  %1929 = vmatprep.subr.bf16.mxu0 0
  %1930 = vmatpush1.bf16.msra.mxu0 0
  %1931 = vmatprep.subr.bf16.mxu0 %v1502
  %1932 = vmatpush1.bf16.msra.mxu0 %v1499
  %1933 = vmatprep.subr.bf16.mxu0 0
  %1934 = vmatpush2.bf16.msra.mxu0 0
  %1935 = vmatprep.subr.bf16.mxu0 0
  %1936 = vmatpush2.bf16.msra.mxu0 0
  %1937 = vmatprep.subr.bf16.mxu0 0
  %1938 = vmatpush2.bf16.msra.mxu0 0
  %1939 = vmatprep.subr.bf16.mxu0 0
  %1940 = vmatpush2.bf16.msra.mxu0 0
  %1941 = vmatprep.subr.bf16.mxu0 0
  %1942 = vmatpush2.bf16.msra.mxu0 0
  %1943 = vmatprep.subr.bf16.mxu0 0
  %1944 = vmatpush2.bf16.msra.mxu0 0
  %1945 = vmatprep.subr.bf16.mxu0 0
  %1946 = vmatpush2.bf16.msra.mxu0 0
  %1947 = vmatprep.subr.bf16.mxu0 0
  %1948 = vmatpush2.bf16.msra.mxu0 0
  %1949 = vmatprep.mubr.bf16.mxu0 0
  %1950 = vmatmul.mubr.bf16.gmra.mxu0 %v1874
  %v1951 = vpop.f32.mrf.mxu0
  %v1952 = vadd.f32 0.0, %v1951
  %v1953 = vpop.f32.mrf.mxu0
  %v1954 = vadd.f32 0.0, %v1953
  %v1955 = vpop.f32.mrf.mxu0
  %v1956 = vpop.f32.mrf.mxu0
  %1957 = vdwg.mxu0
  %1958 = vmatprep.subr.bf16.mxu0 0
  %1959 = vmatpush1.bf16.msra.mxu0 0
  %1960 = vmatprep.subr.bf16.mxu0 0
  %1961 = vmatpush1.bf16.msra.mxu0 0
  %1962 = vmatprep.subr.bf16.mxu0 0
  %1963 = vmatpush1.bf16.msra.mxu0 0
  %1964 = vmatprep.subr.bf16.mxu0 0
  %1965 = vmatpush1.bf16.msra.mxu0 0
  %1966 = vmatprep.subr.bf16.mxu0 0
  %1967 = vmatpush1.bf16.msra.mxu0 0
  %1968 = vmatprep.subr.bf16.mxu0 0
  %1969 = vmatpush1.bf16.msra.mxu0 0
  %1970 = vmatprep.subr.bf16.mxu0 0
  %1971 = vmatpush1.bf16.msra.mxu0 0
  %1972 = vmatprep.subr.bf16.mxu0 %v1508
  %1973 = vmatpush1.bf16.msra.mxu0 %v1505
  %1974 = vmatprep.subr.bf16.mxu0 0
  %1975 = vmatpush2.bf16.msra.mxu0 0
  %1976 = vmatprep.subr.bf16.mxu0 0
  %1977 = vmatpush2.bf16.msra.mxu0 0
  %1978 = vmatprep.subr.bf16.mxu0 0
  %1979 = vmatpush2.bf16.msra.mxu0 0
  %1980 = vmatprep.subr.bf16.mxu0 0
  %1981 = vmatpush2.bf16.msra.mxu0 0
  %1982 = vmatprep.subr.bf16.mxu0 0
  %1983 = vmatpush2.bf16.msra.mxu0 0
  %1984 = vmatprep.subr.bf16.mxu0 0
  %1985 = vmatpush2.bf16.msra.mxu0 0
  %1986 = vmatprep.subr.bf16.mxu0 0
  %1987 = vmatpush2.bf16.msra.mxu0 0
  %1988 = vmatprep.subr.bf16.mxu0 0
  %1989 = vmatpush2.bf16.msra.mxu0 0
  %1990 = vmatprep.mubr.bf16.mxu0 0
  %1991 = vmatmul.mubr.bf16.gmra.mxu0 %v1874
  %v1992 = vpop.f32.mrf.mxu0
  %v1993 = vadd.f32 0.0, %v1992
  %v1994 = vpop.f32.mrf.mxu0
  %v1995 = vadd.f32 0.0, %v1994
  %v1996 = vpop.f32.mrf.mxu0
  %v1997 = vpop.f32.mrf.mxu0
  %1998 = vdwg.mxu0
  %1999 = vmatprep.subr.bf16.mxu0 0
  %2000 = vmatpush1.bf16.msra.mxu0 0
  %2001 = vmatprep.subr.bf16.mxu0 0
  %2002 = vmatpush1.bf16.msra.mxu0 0
  %2003 = vmatprep.subr.bf16.mxu0 0
  %2004 = vmatpush1.bf16.msra.mxu0 0
  %2005 = vmatprep.subr.bf16.mxu0 0
  %2006 = vmatpush1.bf16.msra.mxu0 0
  %2007 = vmatprep.subr.bf16.mxu0 0
  %2008 = vmatpush1.bf16.msra.mxu0 0
  %2009 = vmatprep.subr.bf16.mxu0 0
  %2010 = vmatpush1.bf16.msra.mxu0 0
  %2011 = vmatprep.subr.bf16.mxu0 0
  %2012 = vmatpush1.bf16.msra.mxu0 0
  %2013 = vmatprep.subr.bf16.mxu0 %v1514
  %2014 = vmatpush1.bf16.msra.mxu0 %v1511
  %2015 = vmatprep.subr.bf16.mxu0 0
  %2016 = vmatpush2.bf16.msra.mxu0 0
  %2017 = vmatprep.subr.bf16.mxu0 0
  %2018 = vmatpush2.bf16.msra.mxu0 0
  %2019 = vmatprep.subr.bf16.mxu0 0
  %2020 = vmatpush2.bf16.msra.mxu0 0
  %2021 = vmatprep.subr.bf16.mxu0 0
  %2022 = vmatpush2.bf16.msra.mxu0 0
  %2023 = vmatprep.subr.bf16.mxu0 0
  %2024 = vmatpush2.bf16.msra.mxu0 0
  %2025 = vmatprep.subr.bf16.mxu0 0
  %2026 = vmatpush2.bf16.msra.mxu0 0
  %2027 = vmatprep.subr.bf16.mxu0 0
  %2028 = vmatpush2.bf16.msra.mxu0 0
  %2029 = vmatprep.subr.bf16.mxu0 0
  %2030 = vmatpush2.bf16.msra.mxu0 0
  %2031 = vmatprep.mubr.bf16.mxu0 0
  %2032 = vmatmul.mubr.bf16.gmra.mxu0 %v1874
  %v2033 = vpop.f32.mrf.mxu0
  %v2034 = vadd.f32 0.0, %v2033
  %v2035 = vpop.f32.mrf.mxu0
  %v2036 = vadd.f32 0.0, %v2035
  %v2037 = vpop.f32.mrf.mxu0
  %v2038 = vpop.f32.mrf.mxu0
  %2039 = vdwg.mxu0
  %2040 = vrot.lane.b32.xlu0 %v1911, 126
  %v2041 = vpop.permute.xlu0 %2040
  %2042 = vrot.lane.b32.xlu0 %v1913, 126
  %v2043 = vpop.permute.xlu0 %2042
  %2044 = vrot.lane.b32.xlu0 %v1952, 126
  %v2045 = vpop.permute.xlu0 %2044
  %2046 = vrot.lane.b32.xlu0 %v1954, 126
  %v2047 = vpop.permute.xlu0 %2046
  %2048 = vrot.lane.b32.xlu0 %v1993, 126
  %v2049 = vpop.permute.xlu0 %2048
  %2050 = vrot.lane.b32.xlu0 %v1995, 126
  %v2051 = vpop.permute.xlu0 %2050
  %2052 = vrot.lane.b32.xlu0 %v2034, 126
  %v2053 = vpop.permute.xlu0 %2052
  %2054 = vrot.lane.b32.xlu0 %v2036, 126
  %v2055 = vpop.permute.xlu0 %2054
  %v2056 = vsel %vm822, %v2053, %v2055
  %v2057 = vsel %vm822, %v2051, %v2053
  %v2058 = vsel %vm822, %v2049, %v2051
  %v2059 = vsel %vm822, %v2047, %v2049
  %v2060 = vsel %vm822, %v2045, %v2047
  %v2061 = vsel %vm822, %v2043, %v2045
  %v2062 = vsel %vm822, %v2041, %v2043
  %v2063 = vsel %vm822, %v2055, %v2041
  %v2064 = vadd.f32 %v1742, %v2062
  %v2065 = vadd.f32 %v1744, %v2061
  %v2066 = vadd.f32 %v1783, %v2060
  %v2067 = vadd.f32 %v1785, %v2059
  %v2068 = vadd.f32 %v1824, %v2058
  %v2069 = vadd.f32 %v1826, %v2057
  %v2070 = vadd.f32 %v1865, %v2056
  %v2071 = vadd.f32 %v1867, %v2063
  %v2072 = vld [vmem:[%s6] sm:$0xff]
  %2074 = vset.pattern.permute.xlu0 0
  %2075 = vperm.xlu0 %2074, %v2072
  %v2076 = vpop.permute.xlu0 %2075
  %v2078 = vadd.f32 %v2064, %v2076
  %v2079 = vadd.f32 %v2065, %v2076
  %v2080 = vadd.f32 %v2066, %v2076
  %v2081 = vadd.f32 %v2067, %v2076
  %v2082 = vadd.f32 %v2068, %v2076
  %v2083 = vadd.f32 %v2069, %v2076
  %v2084 = vadd.f32 %v2070, %v2076
  %v2085 = vadd.f32 %v2071, %v2076
  %v2086 = vmax.f32 %v2078, 0.0
  %v2087 = vmax.f32 %v2079, 0.0
  %v2088 = vmax.f32 %v2080, 0.0
  %v2089 = vmax.f32 %v2081, 0.0
  %v2090 = vmax.f32 %v2082, 0.0
  %v2091 = vmax.f32 %v2083, 0.0
  %v2092 = vmax.f32 %v2084, 0.0
  %v2093 = vmax.f32 %v2085, 0.0
  %v2094 = vpack.c.bf16 %v2086, %v2086
  %v2095 = vpack.c.bf16 %v2087, %v2087
  %v2096 = vpack.c.bf16 %v2088, %v2088
  %v2097 = vpack.c.bf16 %v2089, %v2089
  %v2098 = vpack.c.bf16 %v2090, %v2090
  %v2099 = vpack.c.bf16 %v2091, %v2091
  %v2100 = vpack.c.bf16 %v2092, %v2092
  %v2101 = vpack.c.bf16 %v2093, %v2093
  %v2102 = vld [vmem:[%s7] sm:$0xf]
  %s2103 = scalar_lea.vmem %s7, 4
  %v2104 = vld [vmem:[%s2103] sm:$0xf]
  %v2106 = vsel %vm872, %v2104, 0
  %v2109 = vsel %vm252, %v2094, 0
  %v2112 = vsel %vm252, %v2095, 0
  %v2115 = vsel %vm252, %v2096, 0
  %v2118 = vsel %vm252, %v2097, 0
  %v2121 = vsel %vm252, %v2098, 0
  %v2124 = vsel %vm252, %v2099, 0
  %v2127 = vsel %vm252, %v2100, 0
  %v2130 = vsel %vm252, %v2101, 0
  %2132 = vmatprep.subr.bf16.mxu0 0
  %2133 = vmatpush1.bf16.msra.mxu0 0
  %2134 = vmatprep.subr.bf16.mxu0 0
  %2135 = vmatpush1.bf16.msra.mxu0 0
  %2136 = vmatprep.subr.bf16.mxu0 0
  %2137 = vmatpush1.bf16.msra.mxu0 0
  %2138 = vmatprep.subr.bf16.mxu0 0
  %2139 = vmatpush1.bf16.msra.mxu0 0
  %2140 = vmatprep.subr.bf16.mxu0 0
  %2141 = vmatpush1.bf16.msra.mxu0 0
  %2142 = vmatprep.subr.bf16.mxu0 0
  %2143 = vmatpush1.bf16.msra.mxu0 0
  %2144 = vmatprep.subr.bf16.mxu0 0
  %2145 = vmatpush1.bf16.msra.mxu0 0
  %2146 = vmatprep.subr.bf16.mxu0 %v2112
  %2147 = vmatpush1.bf16.msra.mxu0 %v2109
  %2148 = vmatprep.subr.bf16.mxu0 0
  %2149 = vmatpush2.bf16.msra.mxu0 0
  %2150 = vmatprep.subr.bf16.mxu0 0
  %2151 = vmatpush2.bf16.msra.mxu0 0
  %2152 = vmatprep.subr.bf16.mxu0 0
  %2153 = vmatpush2.bf16.msra.mxu0 0
  %2154 = vmatprep.subr.bf16.mxu0 0
  %2155 = vmatpush2.bf16.msra.mxu0 0
  %2156 = vmatprep.subr.bf16.mxu0 0
  %2157 = vmatpush2.bf16.msra.mxu0 0
  %2158 = vmatprep.subr.bf16.mxu0 0
  %2159 = vmatpush2.bf16.msra.mxu0 0
  %2160 = vmatprep.subr.bf16.mxu0 0
  %2161 = vmatpush2.bf16.msra.mxu0 0
  %2162 = vmatprep.subr.bf16.mxu0 0
  %2163 = vmatpush2.bf16.msra.mxu0 0
  %2164 = vmatprep.mubr.bf16.mxu0 0
  %2165 = vmatmul.mubr.bf16.gmra.mxu0 %v2106
  %v2166 = vpop.f32.mrf.mxu0
  %v2167 = vadd.f32 0.0, %v2166
  %v2168 = vpop.f32.mrf.mxu0
  %v2169 = vadd.f32 0.0, %v2168
  %v2170 = vpop.f32.mrf.mxu0
  %v2171 = vpop.f32.mrf.mxu0
  %2172 = vdwg.mxu0
  %2173 = vmatprep.subr.bf16.mxu0 0
  %2174 = vmatpush1.bf16.msra.mxu0 0
  %2175 = vmatprep.subr.bf16.mxu0 0
  %2176 = vmatpush1.bf16.msra.mxu0 0
  %2177 = vmatprep.subr.bf16.mxu0 0
  %2178 = vmatpush1.bf16.msra.mxu0 0
  %2179 = vmatprep.subr.bf16.mxu0 0
  %2180 = vmatpush1.bf16.msra.mxu0 0
  %2181 = vmatprep.subr.bf16.mxu0 0
  %2182 = vmatpush1.bf16.msra.mxu0 0
  %2183 = vmatprep.subr.bf16.mxu0 0
  %2184 = vmatpush1.bf16.msra.mxu0 0
  %2185 = vmatprep.subr.bf16.mxu0 0
  %2186 = vmatpush1.bf16.msra.mxu0 0
  %2187 = vmatprep.subr.bf16.mxu0 %v2118
  %2188 = vmatpush1.bf16.msra.mxu0 %v2115
  %2189 = vmatprep.subr.bf16.mxu0 0
  %2190 = vmatpush2.bf16.msra.mxu0 0
  %2191 = vmatprep.subr.bf16.mxu0 0
  %2192 = vmatpush2.bf16.msra.mxu0 0
  %2193 = vmatprep.subr.bf16.mxu0 0
  %2194 = vmatpush2.bf16.msra.mxu0 0
  %2195 = vmatprep.subr.bf16.mxu0 0
  %2196 = vmatpush2.bf16.msra.mxu0 0
  %2197 = vmatprep.subr.bf16.mxu0 0
  %2198 = vmatpush2.bf16.msra.mxu0 0
  %2199 = vmatprep.subr.bf16.mxu0 0
  %2200 = vmatpush2.bf16.msra.mxu0 0
  %2201 = vmatprep.subr.bf16.mxu0 0
  %2202 = vmatpush2.bf16.msra.mxu0 0
  %2203 = vmatprep.subr.bf16.mxu0 0
  %2204 = vmatpush2.bf16.msra.mxu0 0
  %2205 = vmatprep.mubr.bf16.mxu0 0
  %2206 = vmatmul.mubr.bf16.gmra.mxu0 %v2106
  %v2207 = vpop.f32.mrf.mxu0
  %v2208 = vadd.f32 0.0, %v2207
  %v2209 = vpop.f32.mrf.mxu0
  %v2210 = vadd.f32 0.0, %v2209
  %v2211 = vpop.f32.mrf.mxu0
  %v2212 = vpop.f32.mrf.mxu0
  %2213 = vdwg.mxu0
  %2214 = vmatprep.subr.bf16.mxu0 0
  %2215 = vmatpush1.bf16.msra.mxu0 0
  %2216 = vmatprep.subr.bf16.mxu0 0
  %2217 = vmatpush1.bf16.msra.mxu0 0
  %2218 = vmatprep.subr.bf16.mxu0 0
  %2219 = vmatpush1.bf16.msra.mxu0 0
  %2220 = vmatprep.subr.bf16.mxu0 0
  %2221 = vmatpush1.bf16.msra.mxu0 0
  %2222 = vmatprep.subr.bf16.mxu0 0
  %2223 = vmatpush1.bf16.msra.mxu0 0
  %2224 = vmatprep.subr.bf16.mxu0 0
  %2225 = vmatpush1.bf16.msra.mxu0 0
  %2226 = vmatprep.subr.bf16.mxu0 0
  %2227 = vmatpush1.bf16.msra.mxu0 0
  %2228 = vmatprep.subr.bf16.mxu0 %v2124
  %2229 = vmatpush1.bf16.msra.mxu0 %v2121
  %2230 = vmatprep.subr.bf16.mxu0 0
  %2231 = vmatpush2.bf16.msra.mxu0 0
  %2232 = vmatprep.subr.bf16.mxu0 0
  %2233 = vmatpush2.bf16.msra.mxu0 0
  %2234 = vmatprep.subr.bf16.mxu0 0
  %2235 = vmatpush2.bf16.msra.mxu0 0
  %2236 = vmatprep.subr.bf16.mxu0 0
  %2237 = vmatpush2.bf16.msra.mxu0 0
  %2238 = vmatprep.subr.bf16.mxu0 0
  %2239 = vmatpush2.bf16.msra.mxu0 0
  %2240 = vmatprep.subr.bf16.mxu0 0
  %2241 = vmatpush2.bf16.msra.mxu0 0
  %2242 = vmatprep.subr.bf16.mxu0 0
  %2243 = vmatpush2.bf16.msra.mxu0 0
  %2244 = vmatprep.subr.bf16.mxu0 0
  %2245 = vmatpush2.bf16.msra.mxu0 0
  %2246 = vmatprep.mubr.bf16.mxu0 0
  %2247 = vmatmul.mubr.bf16.gmra.mxu0 %v2106
  %v2248 = vpop.f32.mrf.mxu0
  %v2249 = vadd.f32 0.0, %v2248
  %v2250 = vpop.f32.mrf.mxu0
  %v2251 = vadd.f32 0.0, %v2250
  %v2252 = vpop.f32.mrf.mxu0
  %v2253 = vpop.f32.mrf.mxu0
  %2254 = vdwg.mxu0
  %2255 = vmatprep.subr.bf16.mxu0 0
  %2256 = vmatpush1.bf16.msra.mxu0 0
  %2257 = vmatprep.subr.bf16.mxu0 0
  %2258 = vmatpush1.bf16.msra.mxu0 0
  %2259 = vmatprep.subr.bf16.mxu0 0
  %2260 = vmatpush1.bf16.msra.mxu0 0
  %2261 = vmatprep.subr.bf16.mxu0 0
  %2262 = vmatpush1.bf16.msra.mxu0 0
  %2263 = vmatprep.subr.bf16.mxu0 0
  %2264 = vmatpush1.bf16.msra.mxu0 0
  %2265 = vmatprep.subr.bf16.mxu0 0
  %2266 = vmatpush1.bf16.msra.mxu0 0
  %2267 = vmatprep.subr.bf16.mxu0 0
  %2268 = vmatpush1.bf16.msra.mxu0 0
  %2269 = vmatprep.subr.bf16.mxu0 %v2130
  %2270 = vmatpush1.bf16.msra.mxu0 %v2127
  %2271 = vmatprep.subr.bf16.mxu0 0
  %2272 = vmatpush2.bf16.msra.mxu0 0
  %2273 = vmatprep.subr.bf16.mxu0 0
  %2274 = vmatpush2.bf16.msra.mxu0 0
  %2275 = vmatprep.subr.bf16.mxu0 0
  %2276 = vmatpush2.bf16.msra.mxu0 0
  %2277 = vmatprep.subr.bf16.mxu0 0
  %2278 = vmatpush2.bf16.msra.mxu0 0
  %2279 = vmatprep.subr.bf16.mxu0 0
  %2280 = vmatpush2.bf16.msra.mxu0 0
  %2281 = vmatprep.subr.bf16.mxu0 0
  %2282 = vmatpush2.bf16.msra.mxu0 0
  %2283 = vmatprep.subr.bf16.mxu0 0
  %2284 = vmatpush2.bf16.msra.mxu0 0
  %2285 = vmatprep.subr.bf16.mxu0 0
  %2286 = vmatpush2.bf16.msra.mxu0 0
  %2287 = vmatprep.mubr.bf16.mxu0 0
  %2288 = vmatmul.mubr.bf16.gmra.mxu0 %v2106
  %v2289 = vpop.f32.mrf.mxu0
  %v2290 = vadd.f32 0.0, %v2289
  %v2291 = vpop.f32.mrf.mxu0
  %v2292 = vadd.f32 0.0, %v2291
  %v2293 = vpop.f32.mrf.mxu0
  %v2294 = vpop.f32.mrf.mxu0
  %2295 = vdwg.mxu0
  %2296 = vrot.lane.b32.xlu0 %v2167, 127
  %v2297 = vpop.permute.xlu0 %2296
  %2298 = vrot.lane.b32.xlu0 %v2169, 127
  %v2299 = vpop.permute.xlu0 %2298
  %2300 = vrot.lane.b32.xlu0 %v2208, 127
  %v2301 = vpop.permute.xlu0 %2300
  %2302 = vrot.lane.b32.xlu0 %v2210, 127
  %v2303 = vpop.permute.xlu0 %2302
  %2304 = vrot.lane.b32.xlu0 %v2249, 127
  %v2305 = vpop.permute.xlu0 %2304
  %2306 = vrot.lane.b32.xlu0 %v2251, 127
  %v2307 = vpop.permute.xlu0 %2306
  %2308 = vrot.lane.b32.xlu0 %v2290, 127
  %v2309 = vpop.permute.xlu0 %2308
  %2310 = vrot.lane.b32.xlu0 %v2292, 127
  %v2311 = vpop.permute.xlu0 %2310
  %v2312 = vsel %vm461, %v2309, %v2311
  %v2313 = vsel %vm461, %v2307, %v2309
  %v2314 = vsel %vm461, %v2305, %v2307
  %v2315 = vsel %vm461, %v2303, %v2305
  %v2316 = vsel %vm461, %v2301, %v2303
  %v2317 = vsel %vm461, %v2299, %v2301
  %v2318 = vsel %vm461, %v2297, %v2299
  %v2319 = vsel %vm461, %v2311, %v2297
  %v2321 = vsel %vm872, %v2102, 0
  %2323 = vmatprep.subr.bf16.mxu0 0
  %2324 = vmatpush1.bf16.msra.mxu0 0
  %2325 = vmatprep.subr.bf16.mxu0 0
  %2326 = vmatpush1.bf16.msra.mxu0 0
  %2327 = vmatprep.subr.bf16.mxu0 0
  %2328 = vmatpush1.bf16.msra.mxu0 0
  %2329 = vmatprep.subr.bf16.mxu0 0
  %2330 = vmatpush1.bf16.msra.mxu0 0
  %2331 = vmatprep.subr.bf16.mxu0 0
  %2332 = vmatpush1.bf16.msra.mxu0 0
  %2333 = vmatprep.subr.bf16.mxu0 0
  %2334 = vmatpush1.bf16.msra.mxu0 0
  %2335 = vmatprep.subr.bf16.mxu0 0
  %2336 = vmatpush1.bf16.msra.mxu0 0
  %2337 = vmatprep.subr.bf16.mxu0 %v2112
  %2338 = vmatpush1.bf16.msra.mxu0 %v2109
  %2339 = vmatprep.subr.bf16.mxu0 0
  %2340 = vmatpush2.bf16.msra.mxu0 0
  %2341 = vmatprep.subr.bf16.mxu0 0
  %2342 = vmatpush2.bf16.msra.mxu0 0
  %2343 = vmatprep.subr.bf16.mxu0 0
  %2344 = vmatpush2.bf16.msra.mxu0 0
  %2345 = vmatprep.subr.bf16.mxu0 0
  %2346 = vmatpush2.bf16.msra.mxu0 0
  %2347 = vmatprep.subr.bf16.mxu0 0
  %2348 = vmatpush2.bf16.msra.mxu0 0
  %2349 = vmatprep.subr.bf16.mxu0 0
  %2350 = vmatpush2.bf16.msra.mxu0 0
  %2351 = vmatprep.subr.bf16.mxu0 0
  %2352 = vmatpush2.bf16.msra.mxu0 0
  %2353 = vmatprep.subr.bf16.mxu0 0
  %2354 = vmatpush2.bf16.msra.mxu0 0
  %2355 = vmatprep.mubr.bf16.mxu0 0
  %2356 = vmatmul.mubr.bf16.gmra.mxu0 %v2321
  %v2357 = vpop.f32.mrf.mxu0
  %v2358 = vadd.f32 %v2318, %v2357
  %v2359 = vpop.f32.mrf.mxu0
  %v2360 = vadd.f32 %v2317, %v2359
  %v2361 = vpop.f32.mrf.mxu0
  %v2362 = vpop.f32.mrf.mxu0
  %2363 = vdwg.mxu0
  %2364 = vmatprep.subr.bf16.mxu0 0
  %2365 = vmatpush1.bf16.msra.mxu0 0
  %2366 = vmatprep.subr.bf16.mxu0 0
  %2367 = vmatpush1.bf16.msra.mxu0 0
  %2368 = vmatprep.subr.bf16.mxu0 0
  %2369 = vmatpush1.bf16.msra.mxu0 0
  %2370 = vmatprep.subr.bf16.mxu0 0
  %2371 = vmatpush1.bf16.msra.mxu0 0
  %2372 = vmatprep.subr.bf16.mxu0 0
  %2373 = vmatpush1.bf16.msra.mxu0 0
  %2374 = vmatprep.subr.bf16.mxu0 0
  %2375 = vmatpush1.bf16.msra.mxu0 0
  %2376 = vmatprep.subr.bf16.mxu0 0
  %2377 = vmatpush1.bf16.msra.mxu0 0
  %2378 = vmatprep.subr.bf16.mxu0 %v2118
  %2379 = vmatpush1.bf16.msra.mxu0 %v2115
  %2380 = vmatprep.subr.bf16.mxu0 0
  %2381 = vmatpush2.bf16.msra.mxu0 0
  %2382 = vmatprep.subr.bf16.mxu0 0
  %2383 = vmatpush2.bf16.msra.mxu0 0
  %2384 = vmatprep.subr.bf16.mxu0 0
  %2385 = vmatpush2.bf16.msra.mxu0 0
  %2386 = vmatprep.subr.bf16.mxu0 0
  %2387 = vmatpush2.bf16.msra.mxu0 0
  %2388 = vmatprep.subr.bf16.mxu0 0
  %2389 = vmatpush2.bf16.msra.mxu0 0
  %2390 = vmatprep.subr.bf16.mxu0 0
  %2391 = vmatpush2.bf16.msra.mxu0 0
  %2392 = vmatprep.subr.bf16.mxu0 0
  %2393 = vmatpush2.bf16.msra.mxu0 0
  %2394 = vmatprep.subr.bf16.mxu0 0
  %2395 = vmatpush2.bf16.msra.mxu0 0
  %2396 = vmatprep.mubr.bf16.mxu0 0
  %2397 = vmatmul.mubr.bf16.gmra.mxu0 %v2321
  %v2398 = vpop.f32.mrf.mxu0
  %v2399 = vadd.f32 %v2316, %v2398
  %v2400 = vpop.f32.mrf.mxu0
  %v2401 = vadd.f32 %v2315, %v2400
  %v2402 = vpop.f32.mrf.mxu0
  %v2403 = vpop.f32.mrf.mxu0
  %2404 = vdwg.mxu0
  %2405 = vmatprep.subr.bf16.mxu0 0
  %2406 = vmatpush1.bf16.msra.mxu0 0
  %2407 = vmatprep.subr.bf16.mxu0 0
  %2408 = vmatpush1.bf16.msra.mxu0 0
  %2409 = vmatprep.subr.bf16.mxu0 0
  %2410 = vmatpush1.bf16.msra.mxu0 0
  %2411 = vmatprep.subr.bf16.mxu0 0
  %2412 = vmatpush1.bf16.msra.mxu0 0
  %2413 = vmatprep.subr.bf16.mxu0 0
  %2414 = vmatpush1.bf16.msra.mxu0 0
  %2415 = vmatprep.subr.bf16.mxu0 0
  %2416 = vmatpush1.bf16.msra.mxu0 0
  %2417 = vmatprep.subr.bf16.mxu0 0
  %2418 = vmatpush1.bf16.msra.mxu0 0
  %2419 = vmatprep.subr.bf16.mxu0 %v2124
  %2420 = vmatpush1.bf16.msra.mxu0 %v2121
  %2421 = vmatprep.subr.bf16.mxu0 0
  %2422 = vmatpush2.bf16.msra.mxu0 0
  %2423 = vmatprep.subr.bf16.mxu0 0
  %2424 = vmatpush2.bf16.msra.mxu0 0
  %2425 = vmatprep.subr.bf16.mxu0 0
  %2426 = vmatpush2.bf16.msra.mxu0 0
  %2427 = vmatprep.subr.bf16.mxu0 0
  %2428 = vmatpush2.bf16.msra.mxu0 0
  %2429 = vmatprep.subr.bf16.mxu0 0
  %2430 = vmatpush2.bf16.msra.mxu0 0
  %2431 = vmatprep.subr.bf16.mxu0 0
  %2432 = vmatpush2.bf16.msra.mxu0 0
  %2433 = vmatprep.subr.bf16.mxu0 0
  %2434 = vmatpush2.bf16.msra.mxu0 0
  %2435 = vmatprep.subr.bf16.mxu0 0
  %2436 = vmatpush2.bf16.msra.mxu0 0
  %2437 = vmatprep.mubr.bf16.mxu0 0
  %2438 = vmatmul.mubr.bf16.gmra.mxu0 %v2321
  %v2439 = vpop.f32.mrf.mxu0
  %v2440 = vadd.f32 %v2314, %v2439
  %v2441 = vpop.f32.mrf.mxu0
  %v2442 = vadd.f32 %v2313, %v2441
  %v2443 = vpop.f32.mrf.mxu0
  %v2444 = vpop.f32.mrf.mxu0
  %2445 = vdwg.mxu0
  %2446 = vmatprep.subr.bf16.mxu0 0
  %2447 = vmatpush1.bf16.msra.mxu0 0
  %2448 = vmatprep.subr.bf16.mxu0 0
  %2449 = vmatpush1.bf16.msra.mxu0 0
  %2450 = vmatprep.subr.bf16.mxu0 0
  %2451 = vmatpush1.bf16.msra.mxu0 0
  %2452 = vmatprep.subr.bf16.mxu0 0
  %2453 = vmatpush1.bf16.msra.mxu0 0
  %2454 = vmatprep.subr.bf16.mxu0 0
  %2455 = vmatpush1.bf16.msra.mxu0 0
  %2456 = vmatprep.subr.bf16.mxu0 0
  %2457 = vmatpush1.bf16.msra.mxu0 0
  %2458 = vmatprep.subr.bf16.mxu0 0
  %2459 = vmatpush1.bf16.msra.mxu0 0
  %2460 = vmatprep.subr.bf16.mxu0 %v2130
  %2461 = vmatpush1.bf16.msra.mxu0 %v2127
  %2462 = vmatprep.subr.bf16.mxu0 0
  %2463 = vmatpush2.bf16.msra.mxu0 0
  %2464 = vmatprep.subr.bf16.mxu0 0
  %2465 = vmatpush2.bf16.msra.mxu0 0
  %2466 = vmatprep.subr.bf16.mxu0 0
  %2467 = vmatpush2.bf16.msra.mxu0 0
  %2468 = vmatprep.subr.bf16.mxu0 0
  %2469 = vmatpush2.bf16.msra.mxu0 0
  %2470 = vmatprep.subr.bf16.mxu0 0
  %2471 = vmatpush2.bf16.msra.mxu0 0
  %2472 = vmatprep.subr.bf16.mxu0 0
  %2473 = vmatpush2.bf16.msra.mxu0 0
  %2474 = vmatprep.subr.bf16.mxu0 0
  %2475 = vmatpush2.bf16.msra.mxu0 0
  %2476 = vmatprep.subr.bf16.mxu0 0
  %2477 = vmatpush2.bf16.msra.mxu0 0
  %2478 = vmatprep.mubr.bf16.mxu0 0
  %2479 = vmatmul.mubr.bf16.gmra.mxu0 %v2321
  %v2480 = vpop.f32.mrf.mxu0
  %v2481 = vadd.f32 %v2312, %v2480
  %v2482 = vpop.f32.mrf.mxu0
  %v2483 = vadd.f32 %v2319, %v2482
  %v2484 = vpop.f32.mrf.mxu0
  %v2485 = vpop.f32.mrf.mxu0
  %2486 = vdwg.mxu0
  %s2487 = scalar_lea.vmem %s7, 8
  %v2488 = vld [vmem:[%s2487] sm:$0xf]
  %v2490 = vsel %vm872, %v2488, 0
  %2492 = vmatprep.subr.bf16.mxu0 0
  %2493 = vmatpush1.bf16.msra.mxu0 0
  %2494 = vmatprep.subr.bf16.mxu0 0
  %2495 = vmatpush1.bf16.msra.mxu0 0
  %2496 = vmatprep.subr.bf16.mxu0 0
  %2497 = vmatpush1.bf16.msra.mxu0 0
  %2498 = vmatprep.subr.bf16.mxu0 0
  %2499 = vmatpush1.bf16.msra.mxu0 0
  %2500 = vmatprep.subr.bf16.mxu0 0
  %2501 = vmatpush1.bf16.msra.mxu0 0
  %2502 = vmatprep.subr.bf16.mxu0 0
  %2503 = vmatpush1.bf16.msra.mxu0 0
  %2504 = vmatprep.subr.bf16.mxu0 0
  %2505 = vmatpush1.bf16.msra.mxu0 0
  %2506 = vmatprep.subr.bf16.mxu0 %v2112
  %2507 = vmatpush1.bf16.msra.mxu0 %v2109
  %2508 = vmatprep.subr.bf16.mxu0 0
  %2509 = vmatpush2.bf16.msra.mxu0 0
  %2510 = vmatprep.subr.bf16.mxu0 0
  %2511 = vmatpush2.bf16.msra.mxu0 0
  %2512 = vmatprep.subr.bf16.mxu0 0
  %2513 = vmatpush2.bf16.msra.mxu0 0
  %2514 = vmatprep.subr.bf16.mxu0 0
  %2515 = vmatpush2.bf16.msra.mxu0 0
  %2516 = vmatprep.subr.bf16.mxu0 0
  %2517 = vmatpush2.bf16.msra.mxu0 0
  %2518 = vmatprep.subr.bf16.mxu0 0
  %2519 = vmatpush2.bf16.msra.mxu0 0
  %2520 = vmatprep.subr.bf16.mxu0 0
  %2521 = vmatpush2.bf16.msra.mxu0 0
  %2522 = vmatprep.subr.bf16.mxu0 0
  %2523 = vmatpush2.bf16.msra.mxu0 0
  %2524 = vmatprep.mubr.bf16.mxu0 0
  %2525 = vmatmul.mubr.bf16.gmra.mxu0 %v2490
  %v2526 = vpop.f32.mrf.mxu0
  %v2527 = vadd.f32 0.0, %v2526
  %v2528 = vpop.f32.mrf.mxu0
  %v2529 = vadd.f32 0.0, %v2528
  %v2530 = vpop.f32.mrf.mxu0
  %v2531 = vpop.f32.mrf.mxu0
  %2532 = vdwg.mxu0
  %2533 = vmatprep.subr.bf16.mxu0 0
  %2534 = vmatpush1.bf16.msra.mxu0 0
  %2535 = vmatprep.subr.bf16.mxu0 0
  %2536 = vmatpush1.bf16.msra.mxu0 0
  %2537 = vmatprep.subr.bf16.mxu0 0
  %2538 = vmatpush1.bf16.msra.mxu0 0
  %2539 = vmatprep.subr.bf16.mxu0 0
  %2540 = vmatpush1.bf16.msra.mxu0 0
  %2541 = vmatprep.subr.bf16.mxu0 0
  %2542 = vmatpush1.bf16.msra.mxu0 0
  %2543 = vmatprep.subr.bf16.mxu0 0
  %2544 = vmatpush1.bf16.msra.mxu0 0
  %2545 = vmatprep.subr.bf16.mxu0 0
  %2546 = vmatpush1.bf16.msra.mxu0 0
  %2547 = vmatprep.subr.bf16.mxu0 %v2118
  %2548 = vmatpush1.bf16.msra.mxu0 %v2115
  %2549 = vmatprep.subr.bf16.mxu0 0
  %2550 = vmatpush2.bf16.msra.mxu0 0
  %2551 = vmatprep.subr.bf16.mxu0 0
  %2552 = vmatpush2.bf16.msra.mxu0 0
  %2553 = vmatprep.subr.bf16.mxu0 0
  %2554 = vmatpush2.bf16.msra.mxu0 0
  %2555 = vmatprep.subr.bf16.mxu0 0
  %2556 = vmatpush2.bf16.msra.mxu0 0
  %2557 = vmatprep.subr.bf16.mxu0 0
  %2558 = vmatpush2.bf16.msra.mxu0 0
  %2559 = vmatprep.subr.bf16.mxu0 0
  %2560 = vmatpush2.bf16.msra.mxu0 0
  %2561 = vmatprep.subr.bf16.mxu0 0
  %2562 = vmatpush2.bf16.msra.mxu0 0
  %2563 = vmatprep.subr.bf16.mxu0 0
  %2564 = vmatpush2.bf16.msra.mxu0 0
  %2565 = vmatprep.mubr.bf16.mxu0 0
  %2566 = vmatmul.mubr.bf16.gmra.mxu0 %v2490
  %v2567 = vpop.f32.mrf.mxu0
  %v2568 = vadd.f32 0.0, %v2567
  %v2569 = vpop.f32.mrf.mxu0
  %v2570 = vadd.f32 0.0, %v2569
  %v2571 = vpop.f32.mrf.mxu0
  %v2572 = vpop.f32.mrf.mxu0
  %2573 = vdwg.mxu0
  %2574 = vmatprep.subr.bf16.mxu0 0
  %2575 = vmatpush1.bf16.msra.mxu0 0
  %2576 = vmatprep.subr.bf16.mxu0 0
  %2577 = vmatpush1.bf16.msra.mxu0 0
  %2578 = vmatprep.subr.bf16.mxu0 0
  %2579 = vmatpush1.bf16.msra.mxu0 0
  %2580 = vmatprep.subr.bf16.mxu0 0
  %2581 = vmatpush1.bf16.msra.mxu0 0
  %2582 = vmatprep.subr.bf16.mxu0 0
  %2583 = vmatpush1.bf16.msra.mxu0 0
  %2584 = vmatprep.subr.bf16.mxu0 0
  %2585 = vmatpush1.bf16.msra.mxu0 0
  %2586 = vmatprep.subr.bf16.mxu0 0
  %2587 = vmatpush1.bf16.msra.mxu0 0
  %2588 = vmatprep.subr.bf16.mxu0 %v2124
  %2589 = vmatpush1.bf16.msra.mxu0 %v2121
  %2590 = vmatprep.subr.bf16.mxu0 0
  %2591 = vmatpush2.bf16.msra.mxu0 0
  %2592 = vmatprep.subr.bf16.mxu0 0
  %2593 = vmatpush2.bf16.msra.mxu0 0
  %2594 = vmatprep.subr.bf16.mxu0 0
  %2595 = vmatpush2.bf16.msra.mxu0 0
  %2596 = vmatprep.subr.bf16.mxu0 0
  %2597 = vmatpush2.bf16.msra.mxu0 0
  %2598 = vmatprep.subr.bf16.mxu0 0
  %2599 = vmatpush2.bf16.msra.mxu0 0
  %2600 = vmatprep.subr.bf16.mxu0 0
  %2601 = vmatpush2.bf16.msra.mxu0 0
  %2602 = vmatprep.subr.bf16.mxu0 0
  %2603 = vmatpush2.bf16.msra.mxu0 0
  %2604 = vmatprep.subr.bf16.mxu0 0
  %2605 = vmatpush2.bf16.msra.mxu0 0
  %2606 = vmatprep.mubr.bf16.mxu0 0
  %2607 = vmatmul.mubr.bf16.gmra.mxu0 %v2490
  %v2608 = vpop.f32.mrf.mxu0
  %v2609 = vadd.f32 0.0, %v2608
  %v2610 = vpop.f32.mrf.mxu0
  %v2611 = vadd.f32 0.0, %v2610
  %v2612 = vpop.f32.mrf.mxu0
  %v2613 = vpop.f32.mrf.mxu0
  %2614 = vdwg.mxu0
  %2615 = vmatprep.subr.bf16.mxu0 0
  %2616 = vmatpush1.bf16.msra.mxu0 0
  %2617 = vmatprep.subr.bf16.mxu0 0
  %2618 = vmatpush1.bf16.msra.mxu0 0
  %2619 = vmatprep.subr.bf16.mxu0 0
  %2620 = vmatpush1.bf16.msra.mxu0 0
  %2621 = vmatprep.subr.bf16.mxu0 0
  %2622 = vmatpush1.bf16.msra.mxu0 0
  %2623 = vmatprep.subr.bf16.mxu0 0
  %2624 = vmatpush1.bf16.msra.mxu0 0
  %2625 = vmatprep.subr.bf16.mxu0 0
  %2626 = vmatpush1.bf16.msra.mxu0 0
  %2627 = vmatprep.subr.bf16.mxu0 0
  %2628 = vmatpush1.bf16.msra.mxu0 0
  %2629 = vmatprep.subr.bf16.mxu0 %v2130
  %2630 = vmatpush1.bf16.msra.mxu0 %v2127
  %2631 = vmatprep.subr.bf16.mxu0 0
  %2632 = vmatpush2.bf16.msra.mxu0 0
  %2633 = vmatprep.subr.bf16.mxu0 0
  %2634 = vmatpush2.bf16.msra.mxu0 0
  %2635 = vmatprep.subr.bf16.mxu0 0
  %2636 = vmatpush2.bf16.msra.mxu0 0
  %2637 = vmatprep.subr.bf16.mxu0 0
  %2638 = vmatpush2.bf16.msra.mxu0 0
  %2639 = vmatprep.subr.bf16.mxu0 0
  %2640 = vmatpush2.bf16.msra.mxu0 0
  %2641 = vmatprep.subr.bf16.mxu0 0
  %2642 = vmatpush2.bf16.msra.mxu0 0
  %2643 = vmatprep.subr.bf16.mxu0 0
  %2644 = vmatpush2.bf16.msra.mxu0 0
  %2645 = vmatprep.subr.bf16.mxu0 0
  %2646 = vmatpush2.bf16.msra.mxu0 0
  %2647 = vmatprep.mubr.bf16.mxu0 0
  %2648 = vmatmul.mubr.bf16.gmra.mxu0 %v2490
  %v2649 = vpop.f32.mrf.mxu0
  %v2650 = vadd.f32 0.0, %v2649
  %v2651 = vpop.f32.mrf.mxu0
  %v2652 = vadd.f32 0.0, %v2651
  %v2653 = vpop.f32.mrf.mxu0
  %v2654 = vpop.f32.mrf.mxu0
  %2655 = vdwg.mxu0
  %2656 = vrot.lane.b32.xlu0 %v2527, 126
  %v2657 = vpop.permute.xlu0 %2656
  %2658 = vrot.lane.b32.xlu0 %v2529, 126
  %v2659 = vpop.permute.xlu0 %2658
  %2660 = vrot.lane.b32.xlu0 %v2568, 126
  %v2661 = vpop.permute.xlu0 %2660
  %2662 = vrot.lane.b32.xlu0 %v2570, 126
  %v2663 = vpop.permute.xlu0 %2662
  %2664 = vrot.lane.b32.xlu0 %v2609, 126
  %v2665 = vpop.permute.xlu0 %2664
  %2666 = vrot.lane.b32.xlu0 %v2611, 126
  %v2667 = vpop.permute.xlu0 %2666
  %2668 = vrot.lane.b32.xlu0 %v2650, 126
  %v2669 = vpop.permute.xlu0 %2668
  %2670 = vrot.lane.b32.xlu0 %v2652, 126
  %v2671 = vpop.permute.xlu0 %2670
  %v2672 = vsel %vm822, %v2669, %v2671
  %v2673 = vsel %vm822, %v2667, %v2669
  %v2674 = vsel %vm822, %v2665, %v2667
  %v2675 = vsel %vm822, %v2663, %v2665
  %v2676 = vsel %vm822, %v2661, %v2663
  %v2677 = vsel %vm822, %v2659, %v2661
  %v2678 = vsel %vm822, %v2657, %v2659
  %v2679 = vsel %vm822, %v2671, %v2657
  %v2680 = vadd.f32 %v2358, %v2678
  %v2681 = vadd.f32 %v2360, %v2677
  %v2682 = vadd.f32 %v2399, %v2676
  %v2683 = vadd.f32 %v2401, %v2675
  %v2684 = vadd.f32 %v2440, %v2674
  %v2685 = vadd.f32 %v2442, %v2673
  %v2686 = vadd.f32 %v2481, %v2672
  %v2687 = vadd.f32 %v2483, %v2679
  %v2688 = vld [vmem:[%s8] sm:$0xff]
  %2690 = vset.pattern.permute.xlu0 0
  %2691 = vperm.xlu0 %2690, %v2688
  %v2692 = vpop.permute.xlu0 %2691
  %v2694 = vadd.f32 %v2680, %v2692
  %v2695 = vadd.f32 %v2681, %v2692
  %v2696 = vadd.f32 %v2682, %v2692
  %v2697 = vadd.f32 %v2683, %v2692
  %v2698 = vadd.f32 %v2684, %v2692
  %v2699 = vadd.f32 %v2685, %v2692
  %v2700 = vadd.f32 %v2686, %v2692
  %v2701 = vadd.f32 %v2687, %v2692
  %v2702 = vmax.f32 %v2694, 0.0
  %v2703 = vmax.f32 %v2695, 0.0
  %v2704 = vmax.f32 %v2696, 0.0
  %v2705 = vmax.f32 %v2697, 0.0
  %v2706 = vmax.f32 %v2698, 0.0
  %v2707 = vmax.f32 %v2699, 0.0
  %v2708 = vmax.f32 %v2700, 0.0
  %v2709 = vmax.f32 %v2701, 0.0
  %v2710 = vpack.c.bf16 %v2702, %v2702
  %v2711 = vpack.c.bf16 %v2703, %v2703
  %v2712 = vpack.c.bf16 %v2704, %v2704
  %v2713 = vpack.c.bf16 %v2705, %v2705
  %v2714 = vpack.c.bf16 %v2706, %v2706
  %v2715 = vpack.c.bf16 %v2707, %v2707
  %v2716 = vpack.c.bf16 %v2708, %v2708
  %v2717 = vpack.c.bf16 %v2709, %v2709
  %v2718 = vld [vmem:[%s9] sm:$0xf]
  %s2719 = scalar_lea.vmem %s9, 4
  %v2720 = vld [vmem:[%s2719] sm:$0xf]
  %v2722 = vsel %vm872, %v2720, 0
  %v2725 = vsel %vm252, %v2710, 0
  %v2728 = vsel %vm252, %v2711, 0
  %v2731 = vsel %vm252, %v2712, 0
  %v2734 = vsel %vm252, %v2713, 0
  %v2737 = vsel %vm252, %v2714, 0
  %v2740 = vsel %vm252, %v2715, 0
  %v2743 = vsel %vm252, %v2716, 0
  %v2746 = vsel %vm252, %v2717, 0
  %2748 = vmatprep.subr.bf16.mxu0 0
  %2749 = vmatpush1.bf16.msra.mxu0 0
  %2750 = vmatprep.subr.bf16.mxu0 0
  %2751 = vmatpush1.bf16.msra.mxu0 0
  %2752 = vmatprep.subr.bf16.mxu0 0
  %2753 = vmatpush1.bf16.msra.mxu0 0
  %2754 = vmatprep.subr.bf16.mxu0 0
  %2755 = vmatpush1.bf16.msra.mxu0 0
  %2756 = vmatprep.subr.bf16.mxu0 0
  %2757 = vmatpush1.bf16.msra.mxu0 0
  %2758 = vmatprep.subr.bf16.mxu0 0
  %2759 = vmatpush1.bf16.msra.mxu0 0
  %2760 = vmatprep.subr.bf16.mxu0 0
  %2761 = vmatpush1.bf16.msra.mxu0 0
  %2762 = vmatprep.subr.bf16.mxu0 %v2728
  %2763 = vmatpush1.bf16.msra.mxu0 %v2725
  %2764 = vmatprep.subr.bf16.mxu0 0
  %2765 = vmatpush2.bf16.msra.mxu0 0
  %2766 = vmatprep.subr.bf16.mxu0 0
  %2767 = vmatpush2.bf16.msra.mxu0 0
  %2768 = vmatprep.subr.bf16.mxu0 0
  %2769 = vmatpush2.bf16.msra.mxu0 0
  %2770 = vmatprep.subr.bf16.mxu0 0
  %2771 = vmatpush2.bf16.msra.mxu0 0
  %2772 = vmatprep.subr.bf16.mxu0 0
  %2773 = vmatpush2.bf16.msra.mxu0 0
  %2774 = vmatprep.subr.bf16.mxu0 0
  %2775 = vmatpush2.bf16.msra.mxu0 0
  %2776 = vmatprep.subr.bf16.mxu0 0
  %2777 = vmatpush2.bf16.msra.mxu0 0
  %2778 = vmatprep.subr.bf16.mxu0 0
  %2779 = vmatpush2.bf16.msra.mxu0 0
  %2780 = vmatprep.mubr.bf16.mxu0 0
  %2781 = vmatmul.mubr.bf16.gmra.mxu0 %v2722
  %v2782 = vpop.f32.mrf.mxu0
  %v2783 = vadd.f32 0.0, %v2782
  %v2784 = vpop.f32.mrf.mxu0
  %v2785 = vadd.f32 0.0, %v2784
  %v2786 = vpop.f32.mrf.mxu0
  %v2787 = vpop.f32.mrf.mxu0
  %2788 = vdwg.mxu0
  %2789 = vmatprep.subr.bf16.mxu0 0
  %2790 = vmatpush1.bf16.msra.mxu0 0
  %2791 = vmatprep.subr.bf16.mxu0 0
  %2792 = vmatpush1.bf16.msra.mxu0 0
  %2793 = vmatprep.subr.bf16.mxu0 0
  %2794 = vmatpush1.bf16.msra.mxu0 0
  %2795 = vmatprep.subr.bf16.mxu0 0
  %2796 = vmatpush1.bf16.msra.mxu0 0
  %2797 = vmatprep.subr.bf16.mxu0 0
  %2798 = vmatpush1.bf16.msra.mxu0 0
  %2799 = vmatprep.subr.bf16.mxu0 0
  %2800 = vmatpush1.bf16.msra.mxu0 0
  %2801 = vmatprep.subr.bf16.mxu0 0
  %2802 = vmatpush1.bf16.msra.mxu0 0
  %2803 = vmatprep.subr.bf16.mxu0 %v2734
  %2804 = vmatpush1.bf16.msra.mxu0 %v2731
  %2805 = vmatprep.subr.bf16.mxu0 0
  %2806 = vmatpush2.bf16.msra.mxu0 0
  %2807 = vmatprep.subr.bf16.mxu0 0
  %2808 = vmatpush2.bf16.msra.mxu0 0
  %2809 = vmatprep.subr.bf16.mxu0 0
  %2810 = vmatpush2.bf16.msra.mxu0 0
  %2811 = vmatprep.subr.bf16.mxu0 0
  %2812 = vmatpush2.bf16.msra.mxu0 0
  %2813 = vmatprep.subr.bf16.mxu0 0
  %2814 = vmatpush2.bf16.msra.mxu0 0
  %2815 = vmatprep.subr.bf16.mxu0 0
  %2816 = vmatpush2.bf16.msra.mxu0 0
  %2817 = vmatprep.subr.bf16.mxu0 0
  %2818 = vmatpush2.bf16.msra.mxu0 0
  %2819 = vmatprep.subr.bf16.mxu0 0
  %2820 = vmatpush2.bf16.msra.mxu0 0
  %2821 = vmatprep.mubr.bf16.mxu0 0
  %2822 = vmatmul.mubr.bf16.gmra.mxu0 %v2722
  %v2823 = vpop.f32.mrf.mxu0
  %v2824 = vadd.f32 0.0, %v2823
  %v2825 = vpop.f32.mrf.mxu0
  %v2826 = vadd.f32 0.0, %v2825
  %v2827 = vpop.f32.mrf.mxu0
  %v2828 = vpop.f32.mrf.mxu0
  %2829 = vdwg.mxu0
  %2830 = vmatprep.subr.bf16.mxu0 0
  %2831 = vmatpush1.bf16.msra.mxu0 0
  %2832 = vmatprep.subr.bf16.mxu0 0
  %2833 = vmatpush1.bf16.msra.mxu0 0
  %2834 = vmatprep.subr.bf16.mxu0 0
  %2835 = vmatpush1.bf16.msra.mxu0 0
  %2836 = vmatprep.subr.bf16.mxu0 0
  %2837 = vmatpush1.bf16.msra.mxu0 0
  %2838 = vmatprep.subr.bf16.mxu0 0
  %2839 = vmatpush1.bf16.msra.mxu0 0
  %2840 = vmatprep.subr.bf16.mxu0 0
  %2841 = vmatpush1.bf16.msra.mxu0 0
  %2842 = vmatprep.subr.bf16.mxu0 0
  %2843 = vmatpush1.bf16.msra.mxu0 0
  %2844 = vmatprep.subr.bf16.mxu0 %v2740
  %2845 = vmatpush1.bf16.msra.mxu0 %v2737
  %2846 = vmatprep.subr.bf16.mxu0 0
  %2847 = vmatpush2.bf16.msra.mxu0 0
  %2848 = vmatprep.subr.bf16.mxu0 0
  %2849 = vmatpush2.bf16.msra.mxu0 0
  %2850 = vmatprep.subr.bf16.mxu0 0
  %2851 = vmatpush2.bf16.msra.mxu0 0
  %2852 = vmatprep.subr.bf16.mxu0 0
  %2853 = vmatpush2.bf16.msra.mxu0 0
  %2854 = vmatprep.subr.bf16.mxu0 0
  %2855 = vmatpush2.bf16.msra.mxu0 0
  %2856 = vmatprep.subr.bf16.mxu0 0
  %2857 = vmatpush2.bf16.msra.mxu0 0
  %2858 = vmatprep.subr.bf16.mxu0 0
  %2859 = vmatpush2.bf16.msra.mxu0 0
  %2860 = vmatprep.subr.bf16.mxu0 0
  %2861 = vmatpush2.bf16.msra.mxu0 0
  %2862 = vmatprep.mubr.bf16.mxu0 0
  %2863 = vmatmul.mubr.bf16.gmra.mxu0 %v2722
  %v2864 = vpop.f32.mrf.mxu0
  %v2865 = vadd.f32 0.0, %v2864
  %v2866 = vpop.f32.mrf.mxu0
  %v2867 = vadd.f32 0.0, %v2866
  %v2868 = vpop.f32.mrf.mxu0
  %v2869 = vpop.f32.mrf.mxu0
  %2870 = vdwg.mxu0
  %2871 = vmatprep.subr.bf16.mxu0 0
  %2872 = vmatpush1.bf16.msra.mxu0 0
  %2873 = vmatprep.subr.bf16.mxu0 0
  %2874 = vmatpush1.bf16.msra.mxu0 0
  %2875 = vmatprep.subr.bf16.mxu0 0
  %2876 = vmatpush1.bf16.msra.mxu0 0
  %2877 = vmatprep.subr.bf16.mxu0 0
  %2878 = vmatpush1.bf16.msra.mxu0 0
  %2879 = vmatprep.subr.bf16.mxu0 0
  %2880 = vmatpush1.bf16.msra.mxu0 0
  %2881 = vmatprep.subr.bf16.mxu0 0
  %2882 = vmatpush1.bf16.msra.mxu0 0
  %2883 = vmatprep.subr.bf16.mxu0 0
  %2884 = vmatpush1.bf16.msra.mxu0 0
  %2885 = vmatprep.subr.bf16.mxu0 %v2746
  %2886 = vmatpush1.bf16.msra.mxu0 %v2743
  %2887 = vmatprep.subr.bf16.mxu0 0
  %2888 = vmatpush2.bf16.msra.mxu0 0
  %2889 = vmatprep.subr.bf16.mxu0 0
  %2890 = vmatpush2.bf16.msra.mxu0 0
  %2891 = vmatprep.subr.bf16.mxu0 0
  %2892 = vmatpush2.bf16.msra.mxu0 0
  %2893 = vmatprep.subr.bf16.mxu0 0
  %2894 = vmatpush2.bf16.msra.mxu0 0
  %2895 = vmatprep.subr.bf16.mxu0 0
  %2896 = vmatpush2.bf16.msra.mxu0 0
  %2897 = vmatprep.subr.bf16.mxu0 0
  %2898 = vmatpush2.bf16.msra.mxu0 0
  %2899 = vmatprep.subr.bf16.mxu0 0
  %2900 = vmatpush2.bf16.msra.mxu0 0
  %2901 = vmatprep.subr.bf16.mxu0 0
  %2902 = vmatpush2.bf16.msra.mxu0 0
  %2903 = vmatprep.mubr.bf16.mxu0 0
  %2904 = vmatmul.mubr.bf16.gmra.mxu0 %v2722
  %v2905 = vpop.f32.mrf.mxu0
  %v2906 = vadd.f32 0.0, %v2905
  %v2907 = vpop.f32.mrf.mxu0
  %v2908 = vadd.f32 0.0, %v2907
  %v2909 = vpop.f32.mrf.mxu0
  %v2910 = vpop.f32.mrf.mxu0
  %2911 = vdwg.mxu0
  %2912 = vrot.lane.b32.xlu0 %v2783, 127
  %v2913 = vpop.permute.xlu0 %2912
  %2914 = vrot.lane.b32.xlu0 %v2785, 127
  %v2915 = vpop.permute.xlu0 %2914
  %2916 = vrot.lane.b32.xlu0 %v2824, 127
  %v2917 = vpop.permute.xlu0 %2916
  %2918 = vrot.lane.b32.xlu0 %v2826, 127
  %v2919 = vpop.permute.xlu0 %2918
  %2920 = vrot.lane.b32.xlu0 %v2865, 127
  %v2921 = vpop.permute.xlu0 %2920
  %2922 = vrot.lane.b32.xlu0 %v2867, 127
  %v2923 = vpop.permute.xlu0 %2922
  %2924 = vrot.lane.b32.xlu0 %v2906, 127
  %v2925 = vpop.permute.xlu0 %2924
  %2926 = vrot.lane.b32.xlu0 %v2908, 127
  %v2927 = vpop.permute.xlu0 %2926
  %v2928 = vsel %vm461, %v2925, %v2927
  %v2929 = vsel %vm461, %v2923, %v2925
  %v2930 = vsel %vm461, %v2921, %v2923
  %v2931 = vsel %vm461, %v2919, %v2921
  %v2932 = vsel %vm461, %v2917, %v2919
  %v2933 = vsel %vm461, %v2915, %v2917
  %v2934 = vsel %vm461, %v2913, %v2915
  %v2935 = vsel %vm461, %v2927, %v2913
  %v2937 = vsel %vm872, %v2718, 0
  %2939 = vmatprep.subr.bf16.mxu0 0
  %2940 = vmatpush1.bf16.msra.mxu0 0
  %2941 = vmatprep.subr.bf16.mxu0 0
  %2942 = vmatpush1.bf16.msra.mxu0 0
  %2943 = vmatprep.subr.bf16.mxu0 0
  %2944 = vmatpush1.bf16.msra.mxu0 0
  %2945 = vmatprep.subr.bf16.mxu0 0
  %2946 = vmatpush1.bf16.msra.mxu0 0
  %2947 = vmatprep.subr.bf16.mxu0 0
  %2948 = vmatpush1.bf16.msra.mxu0 0
  %2949 = vmatprep.subr.bf16.mxu0 0
  %2950 = vmatpush1.bf16.msra.mxu0 0
  %2951 = vmatprep.subr.bf16.mxu0 0
  %2952 = vmatpush1.bf16.msra.mxu0 0
  %2953 = vmatprep.subr.bf16.mxu0 %v2728
  %2954 = vmatpush1.bf16.msra.mxu0 %v2725
  %2955 = vmatprep.subr.bf16.mxu0 0
  %2956 = vmatpush2.bf16.msra.mxu0 0
  %2957 = vmatprep.subr.bf16.mxu0 0
  %2958 = vmatpush2.bf16.msra.mxu0 0
  %2959 = vmatprep.subr.bf16.mxu0 0
  %2960 = vmatpush2.bf16.msra.mxu0 0
  %2961 = vmatprep.subr.bf16.mxu0 0
  %2962 = vmatpush2.bf16.msra.mxu0 0
  %2963 = vmatprep.subr.bf16.mxu0 0
  %2964 = vmatpush2.bf16.msra.mxu0 0
  %2965 = vmatprep.subr.bf16.mxu0 0
  %2966 = vmatpush2.bf16.msra.mxu0 0
  %2967 = vmatprep.subr.bf16.mxu0 0
  %2968 = vmatpush2.bf16.msra.mxu0 0
  %2969 = vmatprep.subr.bf16.mxu0 0
  %2970 = vmatpush2.bf16.msra.mxu0 0
  %2971 = vmatprep.mubr.bf16.mxu0 0
  %2972 = vmatmul.mubr.bf16.gmra.mxu0 %v2937
  %v2973 = vpop.f32.mrf.mxu0
  %v2974 = vadd.f32 %v2934, %v2973
  %v2975 = vpop.f32.mrf.mxu0
  %v2976 = vadd.f32 %v2933, %v2975
  %v2977 = vpop.f32.mrf.mxu0
  %v2978 = vpop.f32.mrf.mxu0
  %2979 = vdwg.mxu0
  %2980 = vmatprep.subr.bf16.mxu0 0
  %2981 = vmatpush1.bf16.msra.mxu0 0
  %2982 = vmatprep.subr.bf16.mxu0 0
  %2983 = vmatpush1.bf16.msra.mxu0 0
  %2984 = vmatprep.subr.bf16.mxu0 0
  %2985 = vmatpush1.bf16.msra.mxu0 0
  %2986 = vmatprep.subr.bf16.mxu0 0
  %2987 = vmatpush1.bf16.msra.mxu0 0
  %2988 = vmatprep.subr.bf16.mxu0 0
  %2989 = vmatpush1.bf16.msra.mxu0 0
  %2990 = vmatprep.subr.bf16.mxu0 0
  %2991 = vmatpush1.bf16.msra.mxu0 0
  %2992 = vmatprep.subr.bf16.mxu0 0
  %2993 = vmatpush1.bf16.msra.mxu0 0
  %2994 = vmatprep.subr.bf16.mxu0 %v2734
  %2995 = vmatpush1.bf16.msra.mxu0 %v2731
  %2996 = vmatprep.subr.bf16.mxu0 0
  %2997 = vmatpush2.bf16.msra.mxu0 0
  %2998 = vmatprep.subr.bf16.mxu0 0
  %2999 = vmatpush2.bf16.msra.mxu0 0
  %3000 = vmatprep.subr.bf16.mxu0 0
  %3001 = vmatpush2.bf16.msra.mxu0 0
  %3002 = vmatprep.subr.bf16.mxu0 0
  %3003 = vmatpush2.bf16.msra.mxu0 0
  %3004 = vmatprep.subr.bf16.mxu0 0
  %3005 = vmatpush2.bf16.msra.mxu0 0
  %3006 = vmatprep.subr.bf16.mxu0 0
  %3007 = vmatpush2.bf16.msra.mxu0 0
  %3008 = vmatprep.subr.bf16.mxu0 0
  %3009 = vmatpush2.bf16.msra.mxu0 0
  %3010 = vmatprep.subr.bf16.mxu0 0
  %3011 = vmatpush2.bf16.msra.mxu0 0
  %3012 = vmatprep.mubr.bf16.mxu0 0
  %3013 = vmatmul.mubr.bf16.gmra.mxu0 %v2937
  %v3014 = vpop.f32.mrf.mxu0
  %v3015 = vadd.f32 %v2932, %v3014
  %v3016 = vpop.f32.mrf.mxu0
  %v3017 = vadd.f32 %v2931, %v3016
  %v3018 = vpop.f32.mrf.mxu0
  %v3019 = vpop.f32.mrf.mxu0
  %3020 = vdwg.mxu0
  %3021 = vmatprep.subr.bf16.mxu0 0
  %3022 = vmatpush1.bf16.msra.mxu0 0
  %3023 = vmatprep.subr.bf16.mxu0 0
  %3024 = vmatpush1.bf16.msra.mxu0 0
  %3025 = vmatprep.subr.bf16.mxu0 0
  %3026 = vmatpush1.bf16.msra.mxu0 0
  %3027 = vmatprep.subr.bf16.mxu0 0
  %3028 = vmatpush1.bf16.msra.mxu0 0
  %3029 = vmatprep.subr.bf16.mxu0 0
  %3030 = vmatpush1.bf16.msra.mxu0 0
  %3031 = vmatprep.subr.bf16.mxu0 0
  %3032 = vmatpush1.bf16.msra.mxu0 0
  %3033 = vmatprep.subr.bf16.mxu0 0
  %3034 = vmatpush1.bf16.msra.mxu0 0
  %3035 = vmatprep.subr.bf16.mxu0 %v2740
  %3036 = vmatpush1.bf16.msra.mxu0 %v2737
  %3037 = vmatprep.subr.bf16.mxu0 0
  %3038 = vmatpush2.bf16.msra.mxu0 0
  %3039 = vmatprep.subr.bf16.mxu0 0
  %3040 = vmatpush2.bf16.msra.mxu0 0
  %3041 = vmatprep.subr.bf16.mxu0 0
  %3042 = vmatpush2.bf16.msra.mxu0 0
  %3043 = vmatprep.subr.bf16.mxu0 0
  %3044 = vmatpush2.bf16.msra.mxu0 0
  %3045 = vmatprep.subr.bf16.mxu0 0
  %3046 = vmatpush2.bf16.msra.mxu0 0
  %3047 = vmatprep.subr.bf16.mxu0 0
  %3048 = vmatpush2.bf16.msra.mxu0 0
  %3049 = vmatprep.subr.bf16.mxu0 0
  %3050 = vmatpush2.bf16.msra.mxu0 0
  %3051 = vmatprep.subr.bf16.mxu0 0
  %3052 = vmatpush2.bf16.msra.mxu0 0
  %3053 = vmatprep.mubr.bf16.mxu0 0
  %3054 = vmatmul.mubr.bf16.gmra.mxu0 %v2937
  %v3055 = vpop.f32.mrf.mxu0
  %v3056 = vadd.f32 %v2930, %v3055
  %v3057 = vpop.f32.mrf.mxu0
  %v3058 = vadd.f32 %v2929, %v3057
  %v3059 = vpop.f32.mrf.mxu0
  %v3060 = vpop.f32.mrf.mxu0
  %3061 = vdwg.mxu0
  %3062 = vmatprep.subr.bf16.mxu0 0
  %3063 = vmatpush1.bf16.msra.mxu0 0
  %3064 = vmatprep.subr.bf16.mxu0 0
  %3065 = vmatpush1.bf16.msra.mxu0 0
  %3066 = vmatprep.subr.bf16.mxu0 0
  %3067 = vmatpush1.bf16.msra.mxu0 0
  %3068 = vmatprep.subr.bf16.mxu0 0
  %3069 = vmatpush1.bf16.msra.mxu0 0
  %3070 = vmatprep.subr.bf16.mxu0 0
  %3071 = vmatpush1.bf16.msra.mxu0 0
  %3072 = vmatprep.subr.bf16.mxu0 0
  %3073 = vmatpush1.bf16.msra.mxu0 0
  %3074 = vmatprep.subr.bf16.mxu0 0
  %3075 = vmatpush1.bf16.msra.mxu0 0
  %3076 = vmatprep.subr.bf16.mxu0 %v2746
  %3077 = vmatpush1.bf16.msra.mxu0 %v2743
  %3078 = vmatprep.subr.bf16.mxu0 0
  %3079 = vmatpush2.bf16.msra.mxu0 0
  %3080 = vmatprep.subr.bf16.mxu0 0
  %3081 = vmatpush2.bf16.msra.mxu0 0
  %3082 = vmatprep.subr.bf16.mxu0 0
  %3083 = vmatpush2.bf16.msra.mxu0 0
  %3084 = vmatprep.subr.bf16.mxu0 0
  %3085 = vmatpush2.bf16.msra.mxu0 0
  %3086 = vmatprep.subr.bf16.mxu0 0
  %3087 = vmatpush2.bf16.msra.mxu0 0
  %3088 = vmatprep.subr.bf16.mxu0 0
  %3089 = vmatpush2.bf16.msra.mxu0 0
  %3090 = vmatprep.subr.bf16.mxu0 0
  %3091 = vmatpush2.bf16.msra.mxu0 0
  %3092 = vmatprep.subr.bf16.mxu0 0
  %3093 = vmatpush2.bf16.msra.mxu0 0
  %3094 = vmatprep.mubr.bf16.mxu0 0
  %3095 = vmatmul.mubr.bf16.gmra.mxu0 %v2937
  %v3096 = vpop.f32.mrf.mxu0
  %v3097 = vadd.f32 %v2928, %v3096
  %v3098 = vpop.f32.mrf.mxu0
  %v3099 = vadd.f32 %v2935, %v3098
  %v3100 = vpop.f32.mrf.mxu0
  %v3101 = vpop.f32.mrf.mxu0
  %3102 = vdwg.mxu0
  %s3103 = scalar_lea.vmem %s9, 8
  %v3104 = vld [vmem:[%s3103] sm:$0xf]
  %v3106 = vsel %vm872, %v3104, 0
  %3108 = vmatprep.subr.bf16.mxu0 0
  %3109 = vmatpush1.bf16.msra.mxu0 0
  %3110 = vmatprep.subr.bf16.mxu0 0
  %3111 = vmatpush1.bf16.msra.mxu0 0
  %3112 = vmatprep.subr.bf16.mxu0 0
  %3113 = vmatpush1.bf16.msra.mxu0 0
  %3114 = vmatprep.subr.bf16.mxu0 0
  %3115 = vmatpush1.bf16.msra.mxu0 0
  %3116 = vmatprep.subr.bf16.mxu0 0
  %3117 = vmatpush1.bf16.msra.mxu0 0
  %3118 = vmatprep.subr.bf16.mxu0 0
  %3119 = vmatpush1.bf16.msra.mxu0 0
  %3120 = vmatprep.subr.bf16.mxu0 0
  %3121 = vmatpush1.bf16.msra.mxu0 0
  %3122 = vmatprep.subr.bf16.mxu0 %v2728
  %3123 = vmatpush1.bf16.msra.mxu0 %v2725
  %3124 = vmatprep.subr.bf16.mxu0 0
  %3125 = vmatpush2.bf16.msra.mxu0 0
  %3126 = vmatprep.subr.bf16.mxu0 0
  %3127 = vmatpush2.bf16.msra.mxu0 0
  %3128 = vmatprep.subr.bf16.mxu0 0
  %3129 = vmatpush2.bf16.msra.mxu0 0
  %3130 = vmatprep.subr.bf16.mxu0 0
  %3131 = vmatpush2.bf16.msra.mxu0 0
  %3132 = vmatprep.subr.bf16.mxu0 0
  %3133 = vmatpush2.bf16.msra.mxu0 0
  %3134 = vmatprep.subr.bf16.mxu0 0
  %3135 = vmatpush2.bf16.msra.mxu0 0
  %3136 = vmatprep.subr.bf16.mxu0 0
  %3137 = vmatpush2.bf16.msra.mxu0 0
  %3138 = vmatprep.subr.bf16.mxu0 0
  %3139 = vmatpush2.bf16.msra.mxu0 0
  %3140 = vmatprep.mubr.bf16.mxu0 0
  %3141 = vmatmul.mubr.bf16.gmra.mxu0 %v3106
  %v3142 = vpop.f32.mrf.mxu0
  %v3143 = vadd.f32 0.0, %v3142
  %v3144 = vpop.f32.mrf.mxu0
  %v3145 = vadd.f32 0.0, %v3144
  %v3146 = vpop.f32.mrf.mxu0
  %v3147 = vpop.f32.mrf.mxu0
  %3148 = vdwg.mxu0
  %3149 = vmatprep.subr.bf16.mxu0 0
  %3150 = vmatpush1.bf16.msra.mxu0 0
  %3151 = vmatprep.subr.bf16.mxu0 0
  %3152 = vmatpush1.bf16.msra.mxu0 0
  %3153 = vmatprep.subr.bf16.mxu0 0
  %3154 = vmatpush1.bf16.msra.mxu0 0
  %3155 = vmatprep.subr.bf16.mxu0 0
  %3156 = vmatpush1.bf16.msra.mxu0 0
  %3157 = vmatprep.subr.bf16.mxu0 0
  %3158 = vmatpush1.bf16.msra.mxu0 0
  %3159 = vmatprep.subr.bf16.mxu0 0
  %3160 = vmatpush1.bf16.msra.mxu0 0
  %3161 = vmatprep.subr.bf16.mxu0 0
  %3162 = vmatpush1.bf16.msra.mxu0 0
  %3163 = vmatprep.subr.bf16.mxu0 %v2734
  %3164 = vmatpush1.bf16.msra.mxu0 %v2731
  %3165 = vmatprep.subr.bf16.mxu0 0
  %3166 = vmatpush2.bf16.msra.mxu0 0
  %3167 = vmatprep.subr.bf16.mxu0 0
  %3168 = vmatpush2.bf16.msra.mxu0 0
  %3169 = vmatprep.subr.bf16.mxu0 0
  %3170 = vmatpush2.bf16.msra.mxu0 0
  %3171 = vmatprep.subr.bf16.mxu0 0
  %3172 = vmatpush2.bf16.msra.mxu0 0
  %3173 = vmatprep.subr.bf16.mxu0 0
  %3174 = vmatpush2.bf16.msra.mxu0 0
  %3175 = vmatprep.subr.bf16.mxu0 0
  %3176 = vmatpush2.bf16.msra.mxu0 0
  %3177 = vmatprep.subr.bf16.mxu0 0
  %3178 = vmatpush2.bf16.msra.mxu0 0
  %3179 = vmatprep.subr.bf16.mxu0 0
  %3180 = vmatpush2.bf16.msra.mxu0 0
  %3181 = vmatprep.mubr.bf16.mxu0 0
  %3182 = vmatmul.mubr.bf16.gmra.mxu0 %v3106
  %v3183 = vpop.f32.mrf.mxu0
  %v3184 = vadd.f32 0.0, %v3183
  %v3185 = vpop.f32.mrf.mxu0
  %v3186 = vadd.f32 0.0, %v3185
  %v3187 = vpop.f32.mrf.mxu0
  %v3188 = vpop.f32.mrf.mxu0
  %3189 = vdwg.mxu0
  %3190 = vmatprep.subr.bf16.mxu0 0
  %3191 = vmatpush1.bf16.msra.mxu0 0
  %3192 = vmatprep.subr.bf16.mxu0 0
  %3193 = vmatpush1.bf16.msra.mxu0 0
  %3194 = vmatprep.subr.bf16.mxu0 0
  %3195 = vmatpush1.bf16.msra.mxu0 0
  %3196 = vmatprep.subr.bf16.mxu0 0
  %3197 = vmatpush1.bf16.msra.mxu0 0
  %3198 = vmatprep.subr.bf16.mxu0 0
  %3199 = vmatpush1.bf16.msra.mxu0 0
  %3200 = vmatprep.subr.bf16.mxu0 0
  %3201 = vmatpush1.bf16.msra.mxu0 0
  %3202 = vmatprep.subr.bf16.mxu0 0
  %3203 = vmatpush1.bf16.msra.mxu0 0
  %3204 = vmatprep.subr.bf16.mxu0 %v2740
  %3205 = vmatpush1.bf16.msra.mxu0 %v2737
  %3206 = vmatprep.subr.bf16.mxu0 0
  %3207 = vmatpush2.bf16.msra.mxu0 0
  %3208 = vmatprep.subr.bf16.mxu0 0
  %3209 = vmatpush2.bf16.msra.mxu0 0
  %3210 = vmatprep.subr.bf16.mxu0 0
  %3211 = vmatpush2.bf16.msra.mxu0 0
  %3212 = vmatprep.subr.bf16.mxu0 0
  %3213 = vmatpush2.bf16.msra.mxu0 0
  %3214 = vmatprep.subr.bf16.mxu0 0
  %3215 = vmatpush2.bf16.msra.mxu0 0
  %3216 = vmatprep.subr.bf16.mxu0 0
  %3217 = vmatpush2.bf16.msra.mxu0 0
  %3218 = vmatprep.subr.bf16.mxu0 0
  %3219 = vmatpush2.bf16.msra.mxu0 0
  %3220 = vmatprep.subr.bf16.mxu0 0
  %3221 = vmatpush2.bf16.msra.mxu0 0
  %3222 = vmatprep.mubr.bf16.mxu0 0
  %3223 = vmatmul.mubr.bf16.gmra.mxu0 %v3106
  %v3224 = vpop.f32.mrf.mxu0
  %v3225 = vadd.f32 0.0, %v3224
  %v3226 = vpop.f32.mrf.mxu0
  %v3227 = vadd.f32 0.0, %v3226
  %v3228 = vpop.f32.mrf.mxu0
  %v3229 = vpop.f32.mrf.mxu0
  %3230 = vdwg.mxu0
  %3231 = vmatprep.subr.bf16.mxu0 0
  %3232 = vmatpush1.bf16.msra.mxu0 0
  %3233 = vmatprep.subr.bf16.mxu0 0
  %3234 = vmatpush1.bf16.msra.mxu0 0
  %3235 = vmatprep.subr.bf16.mxu0 0
  %3236 = vmatpush1.bf16.msra.mxu0 0
  %3237 = vmatprep.subr.bf16.mxu0 0
  %3238 = vmatpush1.bf16.msra.mxu0 0
  %3239 = vmatprep.subr.bf16.mxu0 0
  %3240 = vmatpush1.bf16.msra.mxu0 0
  %3241 = vmatprep.subr.bf16.mxu0 0
  %3242 = vmatpush1.bf16.msra.mxu0 0
  %3243 = vmatprep.subr.bf16.mxu0 0
  %3244 = vmatpush1.bf16.msra.mxu0 0
  %3245 = vmatprep.subr.bf16.mxu0 %v2746
  %3246 = vmatpush1.bf16.msra.mxu0 %v2743
  %3247 = vmatprep.subr.bf16.mxu0 0
  %3248 = vmatpush2.bf16.msra.mxu0 0
  %3249 = vmatprep.subr.bf16.mxu0 0
  %3250 = vmatpush2.bf16.msra.mxu0 0
  %3251 = vmatprep.subr.bf16.mxu0 0
  %3252 = vmatpush2.bf16.msra.mxu0 0
  %3253 = vmatprep.subr.bf16.mxu0 0
  %3254 = vmatpush2.bf16.msra.mxu0 0
  %3255 = vmatprep.subr.bf16.mxu0 0
  %3256 = vmatpush2.bf16.msra.mxu0 0
  %3257 = vmatprep.subr.bf16.mxu0 0
  %3258 = vmatpush2.bf16.msra.mxu0 0
  %3259 = vmatprep.subr.bf16.mxu0 0
  %3260 = vmatpush2.bf16.msra.mxu0 0
  %3261 = vmatprep.subr.bf16.mxu0 0
  %3262 = vmatpush2.bf16.msra.mxu0 0
  %3263 = vmatprep.mubr.bf16.mxu0 0
  %3264 = vmatmul.mubr.bf16.gmra.mxu0 %v3106
  %v3265 = vpop.f32.mrf.mxu0
  %v3266 = vadd.f32 0.0, %v3265
  %v3267 = vpop.f32.mrf.mxu0
  %v3268 = vadd.f32 0.0, %v3267
  %v3269 = vpop.f32.mrf.mxu0
  %v3270 = vpop.f32.mrf.mxu0
  %3271 = vdwg.mxu0
  %3272 = vrot.lane.b32.xlu0 %v3143, 126
  %v3273 = vpop.permute.xlu0 %3272
  %3274 = vrot.lane.b32.xlu0 %v3145, 126
  %v3275 = vpop.permute.xlu0 %3274
  %3276 = vrot.lane.b32.xlu0 %v3184, 126
  %v3277 = vpop.permute.xlu0 %3276
  %3278 = vrot.lane.b32.xlu0 %v3186, 126
  %v3279 = vpop.permute.xlu0 %3278
  %3280 = vrot.lane.b32.xlu0 %v3225, 126
  %v3281 = vpop.permute.xlu0 %3280
  %3282 = vrot.lane.b32.xlu0 %v3227, 126
  %v3283 = vpop.permute.xlu0 %3282
  %3284 = vrot.lane.b32.xlu0 %v3266, 126
  %v3285 = vpop.permute.xlu0 %3284
  %3286 = vrot.lane.b32.xlu0 %v3268, 126
  %v3287 = vpop.permute.xlu0 %3286
  %v3288 = vsel %vm822, %v3285, %v3287
  %v3289 = vsel %vm822, %v3283, %v3285
  %v3290 = vsel %vm822, %v3281, %v3283
  %v3291 = vsel %vm822, %v3279, %v3281
  %v3292 = vsel %vm822, %v3277, %v3279
  %v3293 = vsel %vm822, %v3275, %v3277
  %v3294 = vsel %vm822, %v3273, %v3275
  %v3295 = vsel %vm822, %v3287, %v3273
  %v3296 = vadd.f32 %v2974, %v3294
  %v3297 = vadd.f32 %v2976, %v3293
  %v3298 = vadd.f32 %v3015, %v3292
  %v3299 = vadd.f32 %v3017, %v3291
  %v3300 = vadd.f32 %v3056, %v3290
  %v3301 = vadd.f32 %v3058, %v3289
  %v3302 = vadd.f32 %v3097, %v3288
  %v3303 = vadd.f32 %v3099, %v3295
  %v3304 = vld [vmem:[%s10] sm:$0xff]
  %3306 = vset.pattern.permute.xlu0 0
  %3307 = vperm.xlu0 %3306, %v3304
  %v3308 = vpop.permute.xlu0 %3307
  %v3310 = vadd.f32 %v3296, %v3308
  %v3311 = vadd.f32 %v3297, %v3308
  %v3312 = vadd.f32 %v3298, %v3308
  %v3313 = vadd.f32 %v3299, %v3308
  %v3314 = vadd.f32 %v3300, %v3308
  %v3315 = vadd.f32 %v3301, %v3308
  %v3316 = vadd.f32 %v3302, %v3308
  %v3317 = vadd.f32 %v3303, %v3308
  %v3318 = vmax.f32 %v3310, 0.0
  %v3319 = vmax.f32 %v3311, 0.0
  %v3320 = vmax.f32 %v3312, 0.0
  %v3321 = vmax.f32 %v3313, 0.0
  %v3322 = vmax.f32 %v3314, 0.0
  %v3323 = vmax.f32 %v3315, 0.0
  %v3324 = vmax.f32 %v3316, 0.0
  %v3325 = vmax.f32 %v3317, 0.0
  %3326 = vst [vmem:[#allocation3] sm:$0xff] %v3318
  %s3327 = scalar_lea.vmem [#allocation3], 8
  %3328 = vst [vmem:[%s3327] sm:$0xff] %v3319
  %s3329 = scalar_lea.vmem [#allocation3], 16
  %3330 = vst [vmem:[%s3329] sm:$0xff] %v3320
  %s3331 = scalar_lea.vmem [#allocation3], 24
  %3332 = vst [vmem:[%s3331] sm:$0xff] %v3321
  %s3333 = scalar_lea.vmem [#allocation3], 32
  %3334 = vst [vmem:[%s3333] sm:$0xff] %v3322
  %s3335 = scalar_lea.vmem [#allocation3], 40
  %3336 = vst [vmem:[%s3335] sm:$0xff] %v3323
  %s3337 = scalar_lea.vmem [#allocation3], 48
  %3338 = vst [vmem:[%s3337] sm:$0xff] %v3324
  %s3339 = scalar_lea.vmem [#allocation3], 56
  %3340 = vst [vmem:[%s3339] sm:$0xff] %v3325
  %v3341 = vld [vmem:[#allocation3] sm:$0x1]
  %v3342 = vld [vmem:[#allocation3 + $0x8] sm:$0x1]
  %v3343 = vld [vmem:[#allocation3 + $0x10] sm:$0x1]
  %v3344 = vld [vmem:[#allocation3 + $0x18] sm:$0x1]
  %v3345 = vld [vmem:[#allocation3 + $0x20] sm:$0x1]
  %v3346 = vld [vmem:[#allocation3 + $0x28] sm:$0x1]
  %v3347 = vld [vmem:[#allocation3 + $0x30] sm:$0x1]
  %v3348 = vld [vmem:[#allocation3 + $0x38] sm:$0x1]
  %v3349 = vpack.c.bf16 %v3341, %v3341
  %v3350 = vpack.c.bf16 %v3342, %v3342
  %v3351 = vpack.c.bf16 %v3343, %v3343
  %v3352 = vpack.c.bf16 %v3344, %v3344
  %v3353 = vpack.c.bf16 %v3345, %v3345
  %v3354 = vpack.c.bf16 %v3346, %v3346
  %v3355 = vpack.c.bf16 %v3347, %v3347
  %v3356 = vpack.c.bf16 %v3348, %v3348
  %v3357 = vld [vmem:[%s11] sm:$0xf]
  %v3358 = vld [vmem:[%s11 + $0x4] sm:$0xf]
  %v3359 = vld [vmem:[%s11 + $0x8] sm:$0xf]
  %v3360 = vld [vmem:[%s11 + $0xc] sm:$0xf]
  %v3361 = vld [vmem:[%s11 + $0x10] sm:$0xf]
  %v3362 = vld [vmem:[%s11 + $0x14] sm:$0xf]
  %v3363 = vld [vmem:[%s11 + $0x18] sm:$0xf]
  %v3364 = vld [vmem:[%s11 + $0x1c] sm:$0xf]
  %v3365 = vld [vmem:[%s11 + $0x20] sm:$0xf]
  %v3366 = vld [vmem:[%s11 + $0x24] sm:$0xf]
  %v3367 = vld [vmem:[%s11 + $0x28] sm:$0xf]
  %v3368 = vld [vmem:[%s11 + $0x2c] sm:$0xf]
  %v3369 = vld [vmem:[%s11 + $0x30] sm:$0xf]
  %v3370 = vld [vmem:[%s11 + $0x34] sm:$0xf]
  %v3371 = vld [vmem:[%s11 + $0x38] sm:$0xf]
  %v3372 = vld [vmem:[%s11 + $0x3c] sm:$0xf]
  %v3373 = vld [vmem:[#allocation3 + $0x1] sm:$0x1]
  %v3374 = vld [vmem:[#allocation3 + $0x9] sm:$0x1]
  %v3375 = vld [vmem:[#allocation3 + $0x11] sm:$0x1]
  %v3376 = vld [vmem:[#allocation3 + $0x19] sm:$0x1]
  %v3377 = vld [vmem:[#allocation3 + $0x21] sm:$0x1]
  %v3378 = vld [vmem:[#allocation3 + $0x29] sm:$0x1]
  %v3379 = vld [vmem:[#allocation3 + $0x31] sm:$0x1]
  %v3380 = vld [vmem:[#allocation3 + $0x39] sm:$0x1]
  %v3381 = vpack.c.bf16 %v3373, %v3373
  %v3382 = vpack.c.bf16 %v3374, %v3374
  %v3383 = vpack.c.bf16 %v3375, %v3375
  %v3384 = vpack.c.bf16 %v3376, %v3376
  %v3385 = vpack.c.bf16 %v3377, %v3377
  %v3386 = vpack.c.bf16 %v3378, %v3378
  %v3387 = vpack.c.bf16 %v3379, %v3379
  %v3388 = vpack.c.bf16 %v3380, %v3380
  %s3389 = scalar_lea.vmem %s11, 64
  %v3390 = vld [vmem:[%s3389] sm:$0xf]
  %v3391 = vld [vmem:[%s3389 + $0x4] sm:$0xf]
  %v3392 = vld [vmem:[%s3389 + $0x8] sm:$0xf]
  %v3393 = vld [vmem:[%s3389 + $0xc] sm:$0xf]
  %v3394 = vld [vmem:[%s3389 + $0x10] sm:$0xf]
  %v3395 = vld [vmem:[%s3389 + $0x14] sm:$0xf]
  %v3396 = vld [vmem:[%s3389 + $0x18] sm:$0xf]
  %v3397 = vld [vmem:[%s3389 + $0x1c] sm:$0xf]
  %v3398 = vld [vmem:[%s3389 + $0x20] sm:$0xf]
  %v3399 = vld [vmem:[%s3389 + $0x24] sm:$0xf]
  %v3400 = vld [vmem:[%s3389 + $0x28] sm:$0xf]
  %v3401 = vld [vmem:[%s3389 + $0x2c] sm:$0xf]
  %v3402 = vld [vmem:[%s3389 + $0x30] sm:$0xf]
  %v3403 = vld [vmem:[%s3389 + $0x34] sm:$0xf]
  %v3404 = vld [vmem:[%s3389 + $0x38] sm:$0xf]
  %v3405 = vld [vmem:[%s3389 + $0x3c] sm:$0xf]
  %v3414 = vunpack.c.l.b16 %v3381
  %v3415 = vunpack.c.l.b16 %v3382
  %v3416 = vunpack.c.l.b16 %v3383
  %v3417 = vunpack.c.l.b16 %v3384
  %v3418 = vunpack.c.l.b16 %v3385
  %v3419 = vunpack.c.l.b16 %v3386
  %v3420 = vunpack.c.l.b16 %v3387
  %v3421 = vunpack.c.l.b16 %v3388
  %v3422 = vrot.slane %v3415, 7
  %vm3423 = vcmask 1041409
  %v3424 = vsel %vm3423, %v3422, %v3414
  %v3425 = vrot.slane %v3416, 6
  %vm3426 = vcmask 1042434
  %v3427 = vsel %vm3426, %v3425, %v3424
  %v3428 = vrot.slane %v3417, 5
  %vm3429 = vcmask 1043459
  %v3430 = vsel %vm3429, %v3428, %v3427
  %v3431 = vrot.slane %v3418, 4
  %vm3432 = vcmask 1044484
  %v3433 = vsel %vm3432, %v3431, %v3430
  %v3434 = vrot.slane %v3419, 3
  %vm3435 = vcmask 1045509
  %v3436 = vsel %vm3435, %v3434, %v3433
  %v3437 = vrot.slane %v3420, 2
  %vm3438 = vcmask 1046534
  %v3439 = vsel %vm3438, %v3437, %v3436
  %v3440 = vrot.slane %v3421, 1
  %vm3441 = vcmask 1047559
  %v3442 = vsel %vm3441, %v3440, %v3439
  %v3443 = vpack.c.b16 %v3442, %v3442
  %v3461 = vunpack.c.l.b16 %v3390
  %v3462 = vunpack.c.l.b16 %v3391
  %v3463 = vunpack.c.l.b16 %v3392
  %v3464 = vunpack.c.l.b16 %v3393
  %v3465 = vunpack.c.l.b16 %v3394
  %v3466 = vunpack.c.l.b16 %v3395
  %v3467 = vunpack.c.l.b16 %v3396
  %v3468 = vunpack.c.l.b16 %v3397
  %v3469 = vunpack.c.l.b16 %v3398
  %v3470 = vunpack.c.l.b16 %v3399
  %v3471 = vunpack.c.l.b16 %v3400
  %v3472 = vunpack.c.l.b16 %v3401
  %v3473 = vunpack.c.l.b16 %v3402
  %v3474 = vunpack.c.l.b16 %v3403
  %v3475 = vunpack.c.l.b16 %v3404
  %v3476 = vunpack.c.l.b16 %v3405
  %v3477 = vpack.c.b16 %v3462, %v3461
  %v3478 = vpack.c.b16 %v3464, %v3463
  %v3479 = vpack.c.b16 %v3466, %v3465
  %v3480 = vpack.c.b16 %v3468, %v3467
  %v3481 = vpack.c.b16 %v3470, %v3469
  %v3482 = vpack.c.b16 %v3472, %v3471
  %v3483 = vpack.c.b16 %v3474, %v3473
  %v3484 = vpack.c.b16 %v3476, %v3475
  %3493 = vmatprep.subr.bf16.mxu0 0
  %3494 = vmatpush1.bf16.msra.mxu0 %v3484
  %3495 = vmatprep.subr.bf16.mxu0 0
  %3496 = vmatpush1.bf16.msra.mxu0 %v3483
  %3497 = vmatprep.subr.bf16.mxu0 0
  %3498 = vmatpush1.bf16.msra.mxu0 %v3482
  %3499 = vmatprep.subr.bf16.mxu0 0
  %3500 = vmatpush1.bf16.msra.mxu0 %v3481
  %3501 = vmatprep.subr.bf16.mxu0 0
  %3502 = vmatpush1.bf16.msra.mxu0 %v3480
  %3503 = vmatprep.subr.bf16.mxu0 0
  %3504 = vmatpush1.bf16.msra.mxu0 %v3479
  %3505 = vmatprep.subr.bf16.mxu0 0
  %3506 = vmatpush1.bf16.msra.mxu0 %v3478
  %3507 = vmatprep.subr.bf16.mxu0 0
  %3508 = vmatpush1.bf16.msra.mxu0 %v3477
  %3509 = vmatprep.subr.bf16.mxu0 0
  %3510 = vmatpush2.bf16.msra.mxu0 0
  %3511 = vmatprep.subr.bf16.mxu0 0
  %3512 = vmatpush2.bf16.msra.mxu0 0
  %3513 = vmatprep.subr.bf16.mxu0 0
  %3514 = vmatpush2.bf16.msra.mxu0 0
  %3515 = vmatprep.subr.bf16.mxu0 0
  %3516 = vmatpush2.bf16.msra.mxu0 0
  %3517 = vmatprep.subr.bf16.mxu0 0
  %3518 = vmatpush2.bf16.msra.mxu0 0
  %3519 = vmatprep.subr.bf16.mxu0 0
  %3520 = vmatpush2.bf16.msra.mxu0 0
  %3521 = vmatprep.subr.bf16.mxu0 0
  %3522 = vmatpush2.bf16.msra.mxu0 0
  %3523 = vmatprep.subr.bf16.mxu0 0
  %3524 = vmatpush2.bf16.msra.mxu0 0
  %3525 = vmatprep.mubr.bf16.mxu0 0
  %3526 = vmatmul.mubr.bf16.gmra.mxu0 %v3443
  %v3527 = vpop.f32.mrf.mxu0
  %v3528 = vadd.f32 0.0, %v3527
  %v3529 = vpop.f32.mrf.mxu0
  %v3530 = vpop.f32.mrf.mxu0
  %v3531 = vpop.f32.mrf.mxu0
  %3532 = vdwg.mxu0
  %v3541 = vunpack.c.l.b16 %v3349
  %v3542 = vunpack.c.l.b16 %v3350
  %v3543 = vunpack.c.l.b16 %v3351
  %v3544 = vunpack.c.l.b16 %v3352
  %v3545 = vunpack.c.l.b16 %v3353
  %v3546 = vunpack.c.l.b16 %v3354
  %v3547 = vunpack.c.l.b16 %v3355
  %v3548 = vunpack.c.l.b16 %v3356
  %v3549 = vrot.slane %v3542, 7
  %v3550 = vsel %vm3423, %v3549, %v3541
  %v3551 = vrot.slane %v3543, 6
  %v3552 = vsel %vm3426, %v3551, %v3550
  %v3553 = vrot.slane %v3544, 5
  %v3554 = vsel %vm3429, %v3553, %v3552
  %v3555 = vrot.slane %v3545, 4
  %v3556 = vsel %vm3432, %v3555, %v3554
  %v3557 = vrot.slane %v3546, 3
  %v3558 = vsel %vm3435, %v3557, %v3556
  %v3559 = vrot.slane %v3547, 2
  %v3560 = vsel %vm3438, %v3559, %v3558
  %v3561 = vrot.slane %v3548, 1
  %v3562 = vsel %vm3441, %v3561, %v3560
  %v3563 = vpack.c.b16 %v3562, %v3562
  %v3581 = vunpack.c.l.b16 %v3357
  %v3582 = vunpack.c.l.b16 %v3358
  %v3583 = vunpack.c.l.b16 %v3359
  %v3584 = vunpack.c.l.b16 %v3360
  %v3585 = vunpack.c.l.b16 %v3361
  %v3586 = vunpack.c.l.b16 %v3362
  %v3587 = vunpack.c.l.b16 %v3363
  %v3588 = vunpack.c.l.b16 %v3364
  %v3589 = vunpack.c.l.b16 %v3365
  %v3590 = vunpack.c.l.b16 %v3366
  %v3591 = vunpack.c.l.b16 %v3367
  %v3592 = vunpack.c.l.b16 %v3368
  %v3593 = vunpack.c.l.b16 %v3369
  %v3594 = vunpack.c.l.b16 %v3370
  %v3595 = vunpack.c.l.b16 %v3371
  %v3596 = vunpack.c.l.b16 %v3372
  %v3597 = vpack.c.b16 %v3582, %v3581
  %v3598 = vpack.c.b16 %v3584, %v3583
  %v3599 = vpack.c.b16 %v3586, %v3585
  %v3600 = vpack.c.b16 %v3588, %v3587
  %v3601 = vpack.c.b16 %v3590, %v3589
  %v3602 = vpack.c.b16 %v3592, %v3591
  %v3603 = vpack.c.b16 %v3594, %v3593
  %v3604 = vpack.c.b16 %v3596, %v3595
  %3613 = vmatprep.subr.bf16.mxu0 0
  %3614 = vmatpush1.bf16.msra.mxu0 %v3604
  %3615 = vmatprep.subr.bf16.mxu0 0
  %3616 = vmatpush1.bf16.msra.mxu0 %v3603
  %3617 = vmatprep.subr.bf16.mxu0 0
  %3618 = vmatpush1.bf16.msra.mxu0 %v3602
  %3619 = vmatprep.subr.bf16.mxu0 0
  %3620 = vmatpush1.bf16.msra.mxu0 %v3601
  %3621 = vmatprep.subr.bf16.mxu0 0
  %3622 = vmatpush1.bf16.msra.mxu0 %v3600
  %3623 = vmatprep.subr.bf16.mxu0 0
  %3624 = vmatpush1.bf16.msra.mxu0 %v3599
  %3625 = vmatprep.subr.bf16.mxu0 0
  %3626 = vmatpush1.bf16.msra.mxu0 %v3598
  %3627 = vmatprep.subr.bf16.mxu0 0
  %3628 = vmatpush1.bf16.msra.mxu0 %v3597
  %3629 = vmatprep.subr.bf16.mxu0 0
  %3630 = vmatpush2.bf16.msra.mxu0 0
  %3631 = vmatprep.subr.bf16.mxu0 0
  %3632 = vmatpush2.bf16.msra.mxu0 0
  %3633 = vmatprep.subr.bf16.mxu0 0
  %3634 = vmatpush2.bf16.msra.mxu0 0
  %3635 = vmatprep.subr.bf16.mxu0 0
  %3636 = vmatpush2.bf16.msra.mxu0 0
  %3637 = vmatprep.subr.bf16.mxu0 0
  %3638 = vmatpush2.bf16.msra.mxu0 0
  %3639 = vmatprep.subr.bf16.mxu0 0
  %3640 = vmatpush2.bf16.msra.mxu0 0
  %3641 = vmatprep.subr.bf16.mxu0 0
  %3642 = vmatpush2.bf16.msra.mxu0 0
  %3643 = vmatprep.subr.bf16.mxu0 0
  %3644 = vmatpush2.bf16.msra.mxu0 0
  %3645 = vmatprep.mubr.bf16.mxu0 0
  %3646 = vmatmul.mubr.bf16.gmra.mxu0 %v3563
  %v3647 = vpop.f32.mrf.mxu0
  %v3648 = vadd.f32 %v3528, %v3647
  %v3649 = vpop.f32.mrf.mxu0
  %v3650 = vpop.f32.mrf.mxu0
  %v3651 = vpop.f32.mrf.mxu0
  %3652 = vdwg.mxu0
  %v3653 = vld [vmem:[#allocation3 + $0x2] sm:$0x1]
  %v3654 = vld [vmem:[#allocation3 + $0xa] sm:$0x1]
  %v3655 = vld [vmem:[#allocation3 + $0x12] sm:$0x1]
  %v3656 = vld [vmem:[#allocation3 + $0x1a] sm:$0x1]
  %v3657 = vld [vmem:[#allocation3 + $0x22] sm:$0x1]
  %v3658 = vld [vmem:[#allocation3 + $0x2a] sm:$0x1]
  %v3659 = vld [vmem:[#allocation3 + $0x32] sm:$0x1]
  %v3660 = vld [vmem:[#allocation3 + $0x3a] sm:$0x1]
  %v3661 = vpack.c.bf16 %v3653, %v3653
  %v3662 = vpack.c.bf16 %v3654, %v3654
  %v3663 = vpack.c.bf16 %v3655, %v3655
  %v3664 = vpack.c.bf16 %v3656, %v3656
  %v3665 = vpack.c.bf16 %v3657, %v3657
  %v3666 = vpack.c.bf16 %v3658, %v3658
  %v3667 = vpack.c.bf16 %v3659, %v3659
  %v3668 = vpack.c.bf16 %v3660, %v3660
  %s3669 = scalar_lea.vmem %s11, 128
  %v3670 = vld [vmem:[%s3669] sm:$0xf]
  %v3671 = vld [vmem:[%s3669 + $0x4] sm:$0xf]
  %v3672 = vld [vmem:[%s3669 + $0x8] sm:$0xf]
  %v3673 = vld [vmem:[%s3669 + $0xc] sm:$0xf]
  %v3674 = vld [vmem:[%s3669 + $0x10] sm:$0xf]
  %v3675 = vld [vmem:[%s3669 + $0x14] sm:$0xf]
  %v3676 = vld [vmem:[%s3669 + $0x18] sm:$0xf]
  %v3677 = vld [vmem:[%s3669 + $0x1c] sm:$0xf]
  %v3678 = vld [vmem:[%s3669 + $0x20] sm:$0xf]
  %v3679 = vld [vmem:[%s3669 + $0x24] sm:$0xf]
  %v3680 = vld [vmem:[%s3669 + $0x28] sm:$0xf]
  %v3681 = vld [vmem:[%s3669 + $0x2c] sm:$0xf]
  %v3682 = vld [vmem:[%s3669 + $0x30] sm:$0xf]
  %v3683 = vld [vmem:[%s3669 + $0x34] sm:$0xf]
  %v3684 = vld [vmem:[%s3669 + $0x38] sm:$0xf]
  %v3685 = vld [vmem:[%s3669 + $0x3c] sm:$0xf]
  %v3694 = vunpack.c.l.b16 %v3661
  %v3695 = vunpack.c.l.b16 %v3662
  %v3696 = vunpack.c.l.b16 %v3663
  %v3697 = vunpack.c.l.b16 %v3664
  %v3698 = vunpack.c.l.b16 %v3665
  %v3699 = vunpack.c.l.b16 %v3666
  %v3700 = vunpack.c.l.b16 %v3667
  %v3701 = vunpack.c.l.b16 %v3668
  %v3702 = vrot.slane %v3695, 7
  %v3703 = vsel %vm3423, %v3702, %v3694
  %v3704 = vrot.slane %v3696, 6
  %v3705 = vsel %vm3426, %v3704, %v3703
  %v3706 = vrot.slane %v3697, 5
  %v3707 = vsel %vm3429, %v3706, %v3705
  %v3708 = vrot.slane %v3698, 4
  %v3709 = vsel %vm3432, %v3708, %v3707
  %v3710 = vrot.slane %v3699, 3
  %v3711 = vsel %vm3435, %v3710, %v3709
  %v3712 = vrot.slane %v3700, 2
  %v3713 = vsel %vm3438, %v3712, %v3711
  %v3714 = vrot.slane %v3701, 1
  %v3715 = vsel %vm3441, %v3714, %v3713
  %v3716 = vpack.c.b16 %v3715, %v3715
  %v3734 = vunpack.c.l.b16 %v3670
  %v3735 = vunpack.c.l.b16 %v3671
  %v3736 = vunpack.c.l.b16 %v3672
  %v3737 = vunpack.c.l.b16 %v3673
  %v3738 = vunpack.c.l.b16 %v3674
  %v3739 = vunpack.c.l.b16 %v3675
  %v3740 = vunpack.c.l.b16 %v3676
  %v3741 = vunpack.c.l.b16 %v3677
  %v3742 = vunpack.c.l.b16 %v3678
  %v3743 = vunpack.c.l.b16 %v3679
  %v3744 = vunpack.c.l.b16 %v3680
  %v3745 = vunpack.c.l.b16 %v3681
  %v3746 = vunpack.c.l.b16 %v3682
  %v3747 = vunpack.c.l.b16 %v3683
  %v3748 = vunpack.c.l.b16 %v3684
  %v3749 = vunpack.c.l.b16 %v3685
  %v3750 = vpack.c.b16 %v3735, %v3734
  %v3751 = vpack.c.b16 %v3737, %v3736
  %v3752 = vpack.c.b16 %v3739, %v3738
  %v3753 = vpack.c.b16 %v3741, %v3740
  %v3754 = vpack.c.b16 %v3743, %v3742
  %v3755 = vpack.c.b16 %v3745, %v3744
  %v3756 = vpack.c.b16 %v3747, %v3746
  %v3757 = vpack.c.b16 %v3749, %v3748
  %3766 = vmatprep.subr.bf16.mxu0 0
  %3767 = vmatpush1.bf16.msra.mxu0 %v3757
  %3768 = vmatprep.subr.bf16.mxu0 0
  %3769 = vmatpush1.bf16.msra.mxu0 %v3756
  %3770 = vmatprep.subr.bf16.mxu0 0
  %3771 = vmatpush1.bf16.msra.mxu0 %v3755
  %3772 = vmatprep.subr.bf16.mxu0 0
  %3773 = vmatpush1.bf16.msra.mxu0 %v3754
  %3774 = vmatprep.subr.bf16.mxu0 0
  %3775 = vmatpush1.bf16.msra.mxu0 %v3753
  %3776 = vmatprep.subr.bf16.mxu0 0
  %3777 = vmatpush1.bf16.msra.mxu0 %v3752
  %3778 = vmatprep.subr.bf16.mxu0 0
  %3779 = vmatpush1.bf16.msra.mxu0 %v3751
  %3780 = vmatprep.subr.bf16.mxu0 0
  %3781 = vmatpush1.bf16.msra.mxu0 %v3750
  %3782 = vmatprep.subr.bf16.mxu0 0
  %3783 = vmatpush2.bf16.msra.mxu0 0
  %3784 = vmatprep.subr.bf16.mxu0 0
  %3785 = vmatpush2.bf16.msra.mxu0 0
  %3786 = vmatprep.subr.bf16.mxu0 0
  %3787 = vmatpush2.bf16.msra.mxu0 0
  %3788 = vmatprep.subr.bf16.mxu0 0
  %3789 = vmatpush2.bf16.msra.mxu0 0
  %3790 = vmatprep.subr.bf16.mxu0 0
  %3791 = vmatpush2.bf16.msra.mxu0 0
  %3792 = vmatprep.subr.bf16.mxu0 0
  %3793 = vmatpush2.bf16.msra.mxu0 0
  %3794 = vmatprep.subr.bf16.mxu0 0
  %3795 = vmatpush2.bf16.msra.mxu0 0
  %3796 = vmatprep.subr.bf16.mxu0 0
  %3797 = vmatpush2.bf16.msra.mxu0 0
  %3798 = vmatprep.mubr.bf16.mxu0 0
  %3799 = vmatmul.mubr.bf16.gmra.mxu0 %v3716
  %v3800 = vpop.f32.mrf.mxu0
  %v3801 = vadd.f32 0.0, %v3800
  %v3802 = vpop.f32.mrf.mxu0
  %v3803 = vpop.f32.mrf.mxu0
  %v3804 = vpop.f32.mrf.mxu0
  %3805 = vdwg.mxu0
  %v3806 = vadd.f32 %v3648, %v3801
  %v3807 = vld [vmem:[#allocation3 + $0x3] sm:$0x1]
  %v3808 = vld [vmem:[#allocation3 + $0xb] sm:$0x1]
  %v3809 = vld [vmem:[#allocation3 + $0x13] sm:$0x1]
  %v3810 = vld [vmem:[#allocation3 + $0x1b] sm:$0x1]
  %v3811 = vld [vmem:[#allocation3 + $0x23] sm:$0x1]
  %v3812 = vld [vmem:[#allocation3 + $0x2b] sm:$0x1]
  %v3813 = vld [vmem:[#allocation3 + $0x33] sm:$0x1]
  %v3814 = vld [vmem:[#allocation3 + $0x3b] sm:$0x1]
  %v3815 = vpack.c.bf16 %v3807, %v3807
  %v3816 = vpack.c.bf16 %v3808, %v3808
  %v3817 = vpack.c.bf16 %v3809, %v3809
  %v3818 = vpack.c.bf16 %v3810, %v3810
  %v3819 = vpack.c.bf16 %v3811, %v3811
  %v3820 = vpack.c.bf16 %v3812, %v3812
  %v3821 = vpack.c.bf16 %v3813, %v3813
  %v3822 = vpack.c.bf16 %v3814, %v3814
  %s3823 = scalar_lea.vmem %s11, 192
  %v3824 = vld [vmem:[%s3823] sm:$0xf]
  %v3825 = vld [vmem:[%s3823 + $0x4] sm:$0xf]
  %v3826 = vld [vmem:[%s3823 + $0x8] sm:$0xf]
  %v3827 = vld [vmem:[%s3823 + $0xc] sm:$0xf]
  %v3828 = vld [vmem:[%s3823 + $0x10] sm:$0xf]
  %v3829 = vld [vmem:[%s3823 + $0x14] sm:$0xf]
  %v3830 = vld [vmem:[%s3823 + $0x18] sm:$0xf]
  %v3831 = vld [vmem:[%s3823 + $0x1c] sm:$0xf]
  %v3832 = vld [vmem:[%s3823 + $0x20] sm:$0xf]
  %v3833 = vld [vmem:[%s3823 + $0x24] sm:$0xf]
  %v3834 = vld [vmem:[%s3823 + $0x28] sm:$0xf]
  %v3835 = vld [vmem:[%s3823 + $0x2c] sm:$0xf]
  %v3836 = vld [vmem:[%s3823 + $0x30] sm:$0xf]
  %v3837 = vld [vmem:[%s3823 + $0x34] sm:$0xf]
  %v3838 = vld [vmem:[%s3823 + $0x38] sm:$0xf]
  %v3839 = vld [vmem:[%s3823 + $0x3c] sm:$0xf]
  %v3848 = vunpack.c.l.b16 %v3815
  %v3849 = vunpack.c.l.b16 %v3816
  %v3850 = vunpack.c.l.b16 %v3817
  %v3851 = vunpack.c.l.b16 %v3818
  %v3852 = vunpack.c.l.b16 %v3819
  %v3853 = vunpack.c.l.b16 %v3820
  %v3854 = vunpack.c.l.b16 %v3821
  %v3855 = vunpack.c.l.b16 %v3822
  %v3856 = vrot.slane %v3849, 7
  %v3857 = vsel %vm3423, %v3856, %v3848
  %v3858 = vrot.slane %v3850, 6
  %v3859 = vsel %vm3426, %v3858, %v3857
  %v3860 = vrot.slane %v3851, 5
  %v3861 = vsel %vm3429, %v3860, %v3859
  %v3862 = vrot.slane %v3852, 4
  %v3863 = vsel %vm3432, %v3862, %v3861
  %v3864 = vrot.slane %v3853, 3
  %v3865 = vsel %vm3435, %v3864, %v3863
  %v3866 = vrot.slane %v3854, 2
  %v3867 = vsel %vm3438, %v3866, %v3865
  %v3868 = vrot.slane %v3855, 1
  %v3869 = vsel %vm3441, %v3868, %v3867
  %v3870 = vpack.c.b16 %v3869, %v3869
  %v3888 = vunpack.c.l.b16 %v3824
  %v3889 = vunpack.c.l.b16 %v3825
  %v3890 = vunpack.c.l.b16 %v3826
  %v3891 = vunpack.c.l.b16 %v3827
  %v3892 = vunpack.c.l.b16 %v3828
  %v3893 = vunpack.c.l.b16 %v3829
  %v3894 = vunpack.c.l.b16 %v3830
  %v3895 = vunpack.c.l.b16 %v3831
  %v3896 = vunpack.c.l.b16 %v3832
  %v3897 = vunpack.c.l.b16 %v3833
  %v3898 = vunpack.c.l.b16 %v3834
  %v3899 = vunpack.c.l.b16 %v3835
  %v3900 = vunpack.c.l.b16 %v3836
  %v3901 = vunpack.c.l.b16 %v3837
  %v3902 = vunpack.c.l.b16 %v3838
  %v3903 = vunpack.c.l.b16 %v3839
  %v3904 = vpack.c.b16 %v3889, %v3888
  %v3905 = vpack.c.b16 %v3891, %v3890
  %v3906 = vpack.c.b16 %v3893, %v3892
  %v3907 = vpack.c.b16 %v3895, %v3894
  %v3908 = vpack.c.b16 %v3897, %v3896
  %v3909 = vpack.c.b16 %v3899, %v3898
  %v3910 = vpack.c.b16 %v3901, %v3900
  %v3911 = vpack.c.b16 %v3903, %v3902
  %3920 = vmatprep.subr.bf16.mxu0 0
  %3921 = vmatpush1.bf16.msra.mxu0 %v3911
  %3922 = vmatprep.subr.bf16.mxu0 0
  %3923 = vmatpush1.bf16.msra.mxu0 %v3910
  %3924 = vmatprep.subr.bf16.mxu0 0
  %3925 = vmatpush1.bf16.msra.mxu0 %v3909
  %3926 = vmatprep.subr.bf16.mxu0 0
  %3927 = vmatpush1.bf16.msra.mxu0 %v3908
  %3928 = vmatprep.subr.bf16.mxu0 0
  %3929 = vmatpush1.bf16.msra.mxu0 %v3907
  %3930 = vmatprep.subr.bf16.mxu0 0
  %3931 = vmatpush1.bf16.msra.mxu0 %v3906
  %3932 = vmatprep.subr.bf16.mxu0 0
  %3933 = vmatpush1.bf16.msra.mxu0 %v3905
  %3934 = vmatprep.subr.bf16.mxu0 0
  %3935 = vmatpush1.bf16.msra.mxu0 %v3904
  %3936 = vmatprep.subr.bf16.mxu0 0
  %3937 = vmatpush2.bf16.msra.mxu0 0
  %3938 = vmatprep.subr.bf16.mxu0 0
  %3939 = vmatpush2.bf16.msra.mxu0 0
  %3940 = vmatprep.subr.bf16.mxu0 0
  %3941 = vmatpush2.bf16.msra.mxu0 0
  %3942 = vmatprep.subr.bf16.mxu0 0
  %3943 = vmatpush2.bf16.msra.mxu0 0
  %3944 = vmatprep.subr.bf16.mxu0 0
  %3945 = vmatpush2.bf16.msra.mxu0 0
  %3946 = vmatprep.subr.bf16.mxu0 0
  %3947 = vmatpush2.bf16.msra.mxu0 0
  %3948 = vmatprep.subr.bf16.mxu0 0
  %3949 = vmatpush2.bf16.msra.mxu0 0
  %3950 = vmatprep.subr.bf16.mxu0 0
  %3951 = vmatpush2.bf16.msra.mxu0 0
  %3952 = vmatprep.mubr.bf16.mxu0 0
  %3953 = vmatmul.mubr.bf16.gmra.mxu0 %v3870
  %v3954 = vpop.f32.mrf.mxu0
  %v3955 = vadd.f32 0.0, %v3954
  %v3956 = vpop.f32.mrf.mxu0
  %v3957 = vpop.f32.mrf.mxu0
  %v3958 = vpop.f32.mrf.mxu0
  %3959 = vdwg.mxu0
  %v3960 = vadd.f32 %v3806, %v3955
  %v3961 = vld [vmem:[#allocation3 + $0x4] sm:$0x1]
  %v3962 = vld [vmem:[#allocation3 + $0xc] sm:$0x1]
  %v3963 = vld [vmem:[#allocation3 + $0x14] sm:$0x1]
  %v3964 = vld [vmem:[#allocation3 + $0x1c] sm:$0x1]
  %v3965 = vld [vmem:[#allocation3 + $0x24] sm:$0x1]
  %v3966 = vld [vmem:[#allocation3 + $0x2c] sm:$0x1]
  %v3967 = vld [vmem:[#allocation3 + $0x34] sm:$0x1]
  %v3968 = vld [vmem:[#allocation3 + $0x3c] sm:$0x1]
  %v3969 = vpack.c.bf16 %v3961, %v3961
  %v3970 = vpack.c.bf16 %v3962, %v3962
  %v3971 = vpack.c.bf16 %v3963, %v3963
  %v3972 = vpack.c.bf16 %v3964, %v3964
  %v3973 = vpack.c.bf16 %v3965, %v3965
  %v3974 = vpack.c.bf16 %v3966, %v3966
  %v3975 = vpack.c.bf16 %v3967, %v3967
  %v3976 = vpack.c.bf16 %v3968, %v3968
  %s3977 = scalar_lea.vmem %s11, 256
  %v3978 = vld [vmem:[%s3977] sm:$0xf]
  %v3979 = vld [vmem:[%s3977 + $0x4] sm:$0xf]
  %v3980 = vld [vmem:[%s3977 + $0x8] sm:$0xf]
  %v3981 = vld [vmem:[%s3977 + $0xc] sm:$0xf]
  %v3982 = vld [vmem:[%s3977 + $0x10] sm:$0xf]
  %v3983 = vld [vmem:[%s3977 + $0x14] sm:$0xf]
  %v3984 = vld [vmem:[%s3977 + $0x18] sm:$0xf]
  %v3985 = vld [vmem:[%s3977 + $0x1c] sm:$0xf]
  %v3986 = vld [vmem:[%s3977 + $0x20] sm:$0xf]
  %v3987 = vld [vmem:[%s3977 + $0x24] sm:$0xf]
  %v3988 = vld [vmem:[%s3977 + $0x28] sm:$0xf]
  %v3989 = vld [vmem:[%s3977 + $0x2c] sm:$0xf]
  %v3990 = vld [vmem:[%s3977 + $0x30] sm:$0xf]
  %v3991 = vld [vmem:[%s3977 + $0x34] sm:$0xf]
  %v3992 = vld [vmem:[%s3977 + $0x38] sm:$0xf]
  %v3993 = vld [vmem:[%s3977 + $0x3c] sm:$0xf]
  %v4002 = vunpack.c.l.b16 %v3969
  %v4003 = vunpack.c.l.b16 %v3970
  %v4004 = vunpack.c.l.b16 %v3971
  %v4005 = vunpack.c.l.b16 %v3972
  %v4006 = vunpack.c.l.b16 %v3973
  %v4007 = vunpack.c.l.b16 %v3974
  %v4008 = vunpack.c.l.b16 %v3975
  %v4009 = vunpack.c.l.b16 %v3976
  %v4010 = vrot.slane %v4003, 7
  %v4011 = vsel %vm3423, %v4010, %v4002
  %v4012 = vrot.slane %v4004, 6
  %v4013 = vsel %vm3426, %v4012, %v4011
  %v4014 = vrot.slane %v4005, 5
  %v4015 = vsel %vm3429, %v4014, %v4013
  %v4016 = vrot.slane %v4006, 4
  %v4017 = vsel %vm3432, %v4016, %v4015
  %v4018 = vrot.slane %v4007, 3
  %v4019 = vsel %vm3435, %v4018, %v4017
  %v4020 = vrot.slane %v4008, 2
  %v4021 = vsel %vm3438, %v4020, %v4019
  %v4022 = vrot.slane %v4009, 1
  %v4023 = vsel %vm3441, %v4022, %v4021
  %v4024 = vpack.c.b16 %v4023, %v4023
  %v4042 = vunpack.c.l.b16 %v3978
  %v4043 = vunpack.c.l.b16 %v3979
  %v4044 = vunpack.c.l.b16 %v3980
  %v4045 = vunpack.c.l.b16 %v3981
  %v4046 = vunpack.c.l.b16 %v3982
  %v4047 = vunpack.c.l.b16 %v3983
  %v4048 = vunpack.c.l.b16 %v3984
  %v4049 = vunpack.c.l.b16 %v3985
  %v4050 = vunpack.c.l.b16 %v3986
  %v4051 = vunpack.c.l.b16 %v3987
  %v4052 = vunpack.c.l.b16 %v3988
  %v4053 = vunpack.c.l.b16 %v3989
  %v4054 = vunpack.c.l.b16 %v3990
  %v4055 = vunpack.c.l.b16 %v3991
  %v4056 = vunpack.c.l.b16 %v3992
  %v4057 = vunpack.c.l.b16 %v3993
  %v4058 = vpack.c.b16 %v4043, %v4042
  %v4059 = vpack.c.b16 %v4045, %v4044
  %v4060 = vpack.c.b16 %v4047, %v4046
  %v4061 = vpack.c.b16 %v4049, %v4048
  %v4062 = vpack.c.b16 %v4051, %v4050
  %v4063 = vpack.c.b16 %v4053, %v4052
  %v4064 = vpack.c.b16 %v4055, %v4054
  %v4065 = vpack.c.b16 %v4057, %v4056
  %4074 = vmatprep.subr.bf16.mxu0 0
  %4075 = vmatpush1.bf16.msra.mxu0 %v4065
  %4076 = vmatprep.subr.bf16.mxu0 0
  %4077 = vmatpush1.bf16.msra.mxu0 %v4064
  %4078 = vmatprep.subr.bf16.mxu0 0
  %4079 = vmatpush1.bf16.msra.mxu0 %v4063
  %4080 = vmatprep.subr.bf16.mxu0 0
  %4081 = vmatpush1.bf16.msra.mxu0 %v4062
  %4082 = vmatprep.subr.bf16.mxu0 0
  %4083 = vmatpush1.bf16.msra.mxu0 %v4061
  %4084 = vmatprep.subr.bf16.mxu0 0
  %4085 = vmatpush1.bf16.msra.mxu0 %v4060
  %4086 = vmatprep.subr.bf16.mxu0 0
  %4087 = vmatpush1.bf16.msra.mxu0 %v4059
  %4088 = vmatprep.subr.bf16.mxu0 0
  %4089 = vmatpush1.bf16.msra.mxu0 %v4058
  %4090 = vmatprep.subr.bf16.mxu0 0
  %4091 = vmatpush2.bf16.msra.mxu0 0
  %4092 = vmatprep.subr.bf16.mxu0 0
  %4093 = vmatpush2.bf16.msra.mxu0 0
  %4094 = vmatprep.subr.bf16.mxu0 0
  %4095 = vmatpush2.bf16.msra.mxu0 0
  %4096 = vmatprep.subr.bf16.mxu0 0
  %4097 = vmatpush2.bf16.msra.mxu0 0
  %4098 = vmatprep.subr.bf16.mxu0 0
  %4099 = vmatpush2.bf16.msra.mxu0 0
  %4100 = vmatprep.subr.bf16.mxu0 0
  %4101 = vmatpush2.bf16.msra.mxu0 0
  %4102 = vmatprep.subr.bf16.mxu0 0
  %4103 = vmatpush2.bf16.msra.mxu0 0
  %4104 = vmatprep.subr.bf16.mxu0 0
  %4105 = vmatpush2.bf16.msra.mxu0 0
  %4106 = vmatprep.mubr.bf16.mxu0 0
  %4107 = vmatmul.mubr.bf16.gmra.mxu0 %v4024
  %v4108 = vpop.f32.mrf.mxu0
  %v4109 = vadd.f32 0.0, %v4108
  %v4110 = vpop.f32.mrf.mxu0
  %v4111 = vpop.f32.mrf.mxu0
  %v4112 = vpop.f32.mrf.mxu0
  %4113 = vdwg.mxu0
  %v4114 = vadd.f32 %v3960, %v4109
  %v4115 = vld [vmem:[#allocation3 + $0x5] sm:$0x1]
  %v4116 = vld [vmem:[#allocation3 + $0xd] sm:$0x1]
  %v4117 = vld [vmem:[#allocation3 + $0x15] sm:$0x1]
  %v4118 = vld [vmem:[#allocation3 + $0x1d] sm:$0x1]
  %v4119 = vld [vmem:[#allocation3 + $0x25] sm:$0x1]
  %v4120 = vld [vmem:[#allocation3 + $0x2d] sm:$0x1]
  %v4121 = vld [vmem:[#allocation3 + $0x35] sm:$0x1]
  %v4122 = vld [vmem:[#allocation3 + $0x3d] sm:$0x1]
  %v4123 = vpack.c.bf16 %v4115, %v4115
  %v4124 = vpack.c.bf16 %v4116, %v4116
  %v4125 = vpack.c.bf16 %v4117, %v4117
  %v4126 = vpack.c.bf16 %v4118, %v4118
  %v4127 = vpack.c.bf16 %v4119, %v4119
  %v4128 = vpack.c.bf16 %v4120, %v4120
  %v4129 = vpack.c.bf16 %v4121, %v4121
  %v4130 = vpack.c.bf16 %v4122, %v4122
  %s4131 = scalar_lea.vmem %s11, 320
  %v4132 = vld [vmem:[%s4131] sm:$0xf]
  %v4133 = vld [vmem:[%s4131 + $0x4] sm:$0xf]
  %v4134 = vld [vmem:[%s4131 + $0x8] sm:$0xf]
  %v4135 = vld [vmem:[%s4131 + $0xc] sm:$0xf]
  %v4136 = vld [vmem:[%s4131 + $0x10] sm:$0xf]
  %v4137 = vld [vmem:[%s4131 + $0x14] sm:$0xf]
  %v4138 = vld [vmem:[%s4131 + $0x18] sm:$0xf]
  %v4139 = vld [vmem:[%s4131 + $0x1c] sm:$0xf]
  %v4140 = vld [vmem:[%s4131 + $0x20] sm:$0xf]
  %v4141 = vld [vmem:[%s4131 + $0x24] sm:$0xf]
  %v4142 = vld [vmem:[%s4131 + $0x28] sm:$0xf]
  %v4143 = vld [vmem:[%s4131 + $0x2c] sm:$0xf]
  %v4144 = vld [vmem:[%s4131 + $0x30] sm:$0xf]
  %v4145 = vld [vmem:[%s4131 + $0x34] sm:$0xf]
  %v4146 = vld [vmem:[%s4131 + $0x38] sm:$0xf]
  %v4147 = vld [vmem:[%s4131 + $0x3c] sm:$0xf]
  %v4156 = vunpack.c.l.b16 %v4123
  %v4157 = vunpack.c.l.b16 %v4124
  %v4158 = vunpack.c.l.b16 %v4125
  %v4159 = vunpack.c.l.b16 %v4126
  %v4160 = vunpack.c.l.b16 %v4127
  %v4161 = vunpack.c.l.b16 %v4128
  %v4162 = vunpack.c.l.b16 %v4129
  %v4163 = vunpack.c.l.b16 %v4130
  %v4164 = vrot.slane %v4157, 7
  %v4165 = vsel %vm3423, %v4164, %v4156
  %v4166 = vrot.slane %v4158, 6
  %v4167 = vsel %vm3426, %v4166, %v4165
  %v4168 = vrot.slane %v4159, 5
  %v4169 = vsel %vm3429, %v4168, %v4167
  %v4170 = vrot.slane %v4160, 4
  %v4171 = vsel %vm3432, %v4170, %v4169
  %v4172 = vrot.slane %v4161, 3
  %v4173 = vsel %vm3435, %v4172, %v4171
  %v4174 = vrot.slane %v4162, 2
  %v4175 = vsel %vm3438, %v4174, %v4173
  %v4176 = vrot.slane %v4163, 1
  %v4177 = vsel %vm3441, %v4176, %v4175
  %v4178 = vpack.c.b16 %v4177, %v4177
  %v4196 = vunpack.c.l.b16 %v4132
  %v4197 = vunpack.c.l.b16 %v4133
  %v4198 = vunpack.c.l.b16 %v4134
  %v4199 = vunpack.c.l.b16 %v4135
  %v4200 = vunpack.c.l.b16 %v4136
  %v4201 = vunpack.c.l.b16 %v4137
  %v4202 = vunpack.c.l.b16 %v4138
  %v4203 = vunpack.c.l.b16 %v4139
  %v4204 = vunpack.c.l.b16 %v4140
  %v4205 = vunpack.c.l.b16 %v4141
  %v4206 = vunpack.c.l.b16 %v4142
  %v4207 = vunpack.c.l.b16 %v4143
  %v4208 = vunpack.c.l.b16 %v4144
  %v4209 = vunpack.c.l.b16 %v4145
  %v4210 = vunpack.c.l.b16 %v4146
  %v4211 = vunpack.c.l.b16 %v4147
  %v4212 = vpack.c.b16 %v4197, %v4196
  %v4213 = vpack.c.b16 %v4199, %v4198
  %v4214 = vpack.c.b16 %v4201, %v4200
  %v4215 = vpack.c.b16 %v4203, %v4202
  %v4216 = vpack.c.b16 %v4205, %v4204
  %v4217 = vpack.c.b16 %v4207, %v4206
  %v4218 = vpack.c.b16 %v4209, %v4208
  %v4219 = vpack.c.b16 %v4211, %v4210
  %4228 = vmatprep.subr.bf16.mxu0 0
  %4229 = vmatpush1.bf16.msra.mxu0 %v4219
  %4230 = vmatprep.subr.bf16.mxu0 0
  %4231 = vmatpush1.bf16.msra.mxu0 %v4218
  %4232 = vmatprep.subr.bf16.mxu0 0
  %4233 = vmatpush1.bf16.msra.mxu0 %v4217
  %4234 = vmatprep.subr.bf16.mxu0 0
  %4235 = vmatpush1.bf16.msra.mxu0 %v4216
  %4236 = vmatprep.subr.bf16.mxu0 0
  %4237 = vmatpush1.bf16.msra.mxu0 %v4215
  %4238 = vmatprep.subr.bf16.mxu0 0
  %4239 = vmatpush1.bf16.msra.mxu0 %v4214
  %4240 = vmatprep.subr.bf16.mxu0 0
  %4241 = vmatpush1.bf16.msra.mxu0 %v4213
  %4242 = vmatprep.subr.bf16.mxu0 0
  %4243 = vmatpush1.bf16.msra.mxu0 %v4212
  %4244 = vmatprep.subr.bf16.mxu0 0
  %4245 = vmatpush2.bf16.msra.mxu0 0
  %4246 = vmatprep.subr.bf16.mxu0 0
  %4247 = vmatpush2.bf16.msra.mxu0 0
  %4248 = vmatprep.subr.bf16.mxu0 0
  %4249 = vmatpush2.bf16.msra.mxu0 0
  %4250 = vmatprep.subr.bf16.mxu0 0
  %4251 = vmatpush2.bf16.msra.mxu0 0
  %4252 = vmatprep.subr.bf16.mxu0 0
  %4253 = vmatpush2.bf16.msra.mxu0 0
  %4254 = vmatprep.subr.bf16.mxu0 0
  %4255 = vmatpush2.bf16.msra.mxu0 0
  %4256 = vmatprep.subr.bf16.mxu0 0
  %4257 = vmatpush2.bf16.msra.mxu0 0
  %4258 = vmatprep.subr.bf16.mxu0 0
  %4259 = vmatpush2.bf16.msra.mxu0 0
  %4260 = vmatprep.mubr.bf16.mxu0 0
  %4261 = vmatmul.mubr.bf16.gmra.mxu0 %v4178
  %v4262 = vpop.f32.mrf.mxu0
  %v4263 = vadd.f32 0.0, %v4262
  %v4264 = vpop.f32.mrf.mxu0
  %v4265 = vpop.f32.mrf.mxu0
  %v4266 = vpop.f32.mrf.mxu0
  %4267 = vdwg.mxu0
  %v4268 = vadd.f32 %v4114, %v4263
  %v4269 = vld [vmem:[#allocation3 + $0x6] sm:$0x1]
  %v4270 = vld [vmem:[#allocation3 + $0xe] sm:$0x1]
  %v4271 = vld [vmem:[#allocation3 + $0x16] sm:$0x1]
  %v4272 = vld [vmem:[#allocation3 + $0x1e] sm:$0x1]
  %v4273 = vld [vmem:[#allocation3 + $0x26] sm:$0x1]
  %v4274 = vld [vmem:[#allocation3 + $0x2e] sm:$0x1]
  %v4275 = vld [vmem:[#allocation3 + $0x36] sm:$0x1]
  %v4276 = vld [vmem:[#allocation3 + $0x3e] sm:$0x1]
  %v4277 = vpack.c.bf16 %v4269, %v4269
  %v4278 = vpack.c.bf16 %v4270, %v4270
  %v4279 = vpack.c.bf16 %v4271, %v4271
  %v4280 = vpack.c.bf16 %v4272, %v4272
  %v4281 = vpack.c.bf16 %v4273, %v4273
  %v4282 = vpack.c.bf16 %v4274, %v4274
  %v4283 = vpack.c.bf16 %v4275, %v4275
  %v4284 = vpack.c.bf16 %v4276, %v4276
  %s4285 = scalar_lea.vmem %s11, 384
  %v4286 = vld [vmem:[%s4285] sm:$0xf]
  %v4287 = vld [vmem:[%s4285 + $0x4] sm:$0xf]
  %v4288 = vld [vmem:[%s4285 + $0x8] sm:$0xf]
  %v4289 = vld [vmem:[%s4285 + $0xc] sm:$0xf]
  %v4290 = vld [vmem:[%s4285 + $0x10] sm:$0xf]
  %v4291 = vld [vmem:[%s4285 + $0x14] sm:$0xf]
  %v4292 = vld [vmem:[%s4285 + $0x18] sm:$0xf]
  %v4293 = vld [vmem:[%s4285 + $0x1c] sm:$0xf]
  %v4294 = vld [vmem:[%s4285 + $0x20] sm:$0xf]
  %v4295 = vld [vmem:[%s4285 + $0x24] sm:$0xf]
  %v4296 = vld [vmem:[%s4285 + $0x28] sm:$0xf]
  %v4297 = vld [vmem:[%s4285 + $0x2c] sm:$0xf]
  %v4298 = vld [vmem:[%s4285 + $0x30] sm:$0xf]
  %v4299 = vld [vmem:[%s4285 + $0x34] sm:$0xf]
  %v4300 = vld [vmem:[%s4285 + $0x38] sm:$0xf]
  %v4301 = vld [vmem:[%s4285 + $0x3c] sm:$0xf]
  %v4310 = vunpack.c.l.b16 %v4277
  %v4311 = vunpack.c.l.b16 %v4278
  %v4312 = vunpack.c.l.b16 %v4279
  %v4313 = vunpack.c.l.b16 %v4280
  %v4314 = vunpack.c.l.b16 %v4281
  %v4315 = vunpack.c.l.b16 %v4282
  %v4316 = vunpack.c.l.b16 %v4283
  %v4317 = vunpack.c.l.b16 %v4284
  %v4318 = vrot.slane %v4311, 7
  %v4319 = vsel %vm3423, %v4318, %v4310
  %v4320 = vrot.slane %v4312, 6
  %v4321 = vsel %vm3426, %v4320, %v4319
  %v4322 = vrot.slane %v4313, 5
  %v4323 = vsel %vm3429, %v4322, %v4321
  %v4324 = vrot.slane %v4314, 4
  %v4325 = vsel %vm3432, %v4324, %v4323
  %v4326 = vrot.slane %v4315, 3
  %v4327 = vsel %vm3435, %v4326, %v4325
  %v4328 = vrot.slane %v4316, 2
  %v4329 = vsel %vm3438, %v4328, %v4327
  %v4330 = vrot.slane %v4317, 1
  %v4331 = vsel %vm3441, %v4330, %v4329
  %v4332 = vpack.c.b16 %v4331, %v4331
  %v4350 = vunpack.c.l.b16 %v4286
  %v4351 = vunpack.c.l.b16 %v4287
  %v4352 = vunpack.c.l.b16 %v4288
  %v4353 = vunpack.c.l.b16 %v4289
  %v4354 = vunpack.c.l.b16 %v4290
  %v4355 = vunpack.c.l.b16 %v4291
  %v4356 = vunpack.c.l.b16 %v4292
  %v4357 = vunpack.c.l.b16 %v4293
  %v4358 = vunpack.c.l.b16 %v4294
  %v4359 = vunpack.c.l.b16 %v4295
  %v4360 = vunpack.c.l.b16 %v4296
  %v4361 = vunpack.c.l.b16 %v4297
  %v4362 = vunpack.c.l.b16 %v4298
  %v4363 = vunpack.c.l.b16 %v4299
  %v4364 = vunpack.c.l.b16 %v4300
  %v4365 = vunpack.c.l.b16 %v4301
  %v4366 = vpack.c.b16 %v4351, %v4350
  %v4367 = vpack.c.b16 %v4353, %v4352
  %v4368 = vpack.c.b16 %v4355, %v4354
  %v4369 = vpack.c.b16 %v4357, %v4356
  %v4370 = vpack.c.b16 %v4359, %v4358
  %v4371 = vpack.c.b16 %v4361, %v4360
  %v4372 = vpack.c.b16 %v4363, %v4362
  %v4373 = vpack.c.b16 %v4365, %v4364
  %4382 = vmatprep.subr.bf16.mxu0 0
  %4383 = vmatpush1.bf16.msra.mxu0 %v4373
  %4384 = vmatprep.subr.bf16.mxu0 0
  %4385 = vmatpush1.bf16.msra.mxu0 %v4372
  %4386 = vmatprep.subr.bf16.mxu0 0
  %4387 = vmatpush1.bf16.msra.mxu0 %v4371
  %4388 = vmatprep.subr.bf16.mxu0 0
  %4389 = vmatpush1.bf16.msra.mxu0 %v4370
  %4390 = vmatprep.subr.bf16.mxu0 0
  %4391 = vmatpush1.bf16.msra.mxu0 %v4369
  %4392 = vmatprep.subr.bf16.mxu0 0
  %4393 = vmatpush1.bf16.msra.mxu0 %v4368
  %4394 = vmatprep.subr.bf16.mxu0 0
  %4395 = vmatpush1.bf16.msra.mxu0 %v4367
  %4396 = vmatprep.subr.bf16.mxu0 0
  %4397 = vmatpush1.bf16.msra.mxu0 %v4366
  %4398 = vmatprep.subr.bf16.mxu0 0
  %4399 = vmatpush2.bf16.msra.mxu0 0
  %4400 = vmatprep.subr.bf16.mxu0 0
  %4401 = vmatpush2.bf16.msra.mxu0 0
  %4402 = vmatprep.subr.bf16.mxu0 0
  %4403 = vmatpush2.bf16.msra.mxu0 0
  %4404 = vmatprep.subr.bf16.mxu0 0
  %4405 = vmatpush2.bf16.msra.mxu0 0
  %4406 = vmatprep.subr.bf16.mxu0 0
  %4407 = vmatpush2.bf16.msra.mxu0 0
  %4408 = vmatprep.subr.bf16.mxu0 0
  %4409 = vmatpush2.bf16.msra.mxu0 0
  %4410 = vmatprep.subr.bf16.mxu0 0
  %4411 = vmatpush2.bf16.msra.mxu0 0
  %4412 = vmatprep.subr.bf16.mxu0 0
  %4413 = vmatpush2.bf16.msra.mxu0 0
  %4414 = vmatprep.mubr.bf16.mxu0 0
  %4415 = vmatmul.mubr.bf16.gmra.mxu0 %v4332
  %v4416 = vpop.f32.mrf.mxu0
  %v4417 = vadd.f32 0.0, %v4416
  %v4418 = vpop.f32.mrf.mxu0
  %v4419 = vpop.f32.mrf.mxu0
  %v4420 = vpop.f32.mrf.mxu0
  %4421 = vdwg.mxu0
  %v4422 = vadd.f32 %v4268, %v4417
  %v4423 = vld [vmem:[#allocation3 + $0x7] sm:$0x1]
  %v4424 = vld [vmem:[#allocation3 + $0xf] sm:$0x1]
  %v4425 = vld [vmem:[#allocation3 + $0x17] sm:$0x1]
  %v4426 = vld [vmem:[#allocation3 + $0x1f] sm:$0x1]
  %v4427 = vld [vmem:[#allocation3 + $0x27] sm:$0x1]
  %v4428 = vld [vmem:[#allocation3 + $0x2f] sm:$0x1]
  %v4429 = vld [vmem:[#allocation3 + $0x37] sm:$0x1]
  %v4430 = vld [vmem:[#allocation3 + $0x3f] sm:$0x1]
  %v4431 = vpack.c.bf16 %v4423, %v4423
  %v4432 = vpack.c.bf16 %v4424, %v4424
  %v4433 = vpack.c.bf16 %v4425, %v4425
  %v4434 = vpack.c.bf16 %v4426, %v4426
  %v4435 = vpack.c.bf16 %v4427, %v4427
  %v4436 = vpack.c.bf16 %v4428, %v4428
  %v4437 = vpack.c.bf16 %v4429, %v4429
  %v4438 = vpack.c.bf16 %v4430, %v4430
  %s4439 = scalar_lea.vmem %s11, 448
  %v4440 = vld [vmem:[%s4439] sm:$0xf]
  %v4441 = vld [vmem:[%s4439 + $0x4] sm:$0xf]
  %v4442 = vld [vmem:[%s4439 + $0x8] sm:$0xf]
  %v4443 = vld [vmem:[%s4439 + $0xc] sm:$0xf]
  %v4444 = vld [vmem:[%s4439 + $0x10] sm:$0xf]
  %v4445 = vld [vmem:[%s4439 + $0x14] sm:$0xf]
  %v4446 = vld [vmem:[%s4439 + $0x18] sm:$0xf]
  %v4447 = vld [vmem:[%s4439 + $0x1c] sm:$0xf]
  %v4448 = vld [vmem:[%s4439 + $0x20] sm:$0xf]
  %v4449 = vld [vmem:[%s4439 + $0x24] sm:$0xf]
  %v4450 = vld [vmem:[%s4439 + $0x28] sm:$0xf]
  %v4451 = vld [vmem:[%s4439 + $0x2c] sm:$0xf]
  %v4452 = vld [vmem:[%s4439 + $0x30] sm:$0xf]
  %v4453 = vld [vmem:[%s4439 + $0x34] sm:$0xf]
  %v4454 = vld [vmem:[%s4439 + $0x38] sm:$0xf]
  %v4455 = vld [vmem:[%s4439 + $0x3c] sm:$0xf]
  %v4464 = vunpack.c.l.b16 %v4431
  %v4465 = vunpack.c.l.b16 %v4432
  %v4466 = vunpack.c.l.b16 %v4433
  %v4467 = vunpack.c.l.b16 %v4434
  %v4468 = vunpack.c.l.b16 %v4435
  %v4469 = vunpack.c.l.b16 %v4436
  %v4470 = vunpack.c.l.b16 %v4437
  %v4471 = vunpack.c.l.b16 %v4438
  %v4472 = vrot.slane %v4465, 7
  %v4473 = vsel %vm3423, %v4472, %v4464
  %v4474 = vrot.slane %v4466, 6
  %v4475 = vsel %vm3426, %v4474, %v4473
  %v4476 = vrot.slane %v4467, 5
  %v4477 = vsel %vm3429, %v4476, %v4475
  %v4478 = vrot.slane %v4468, 4
  %v4479 = vsel %vm3432, %v4478, %v4477
  %v4480 = vrot.slane %v4469, 3
  %v4481 = vsel %vm3435, %v4480, %v4479
  %v4482 = vrot.slane %v4470, 2
  %v4483 = vsel %vm3438, %v4482, %v4481
  %v4484 = vrot.slane %v4471, 1
  %v4485 = vsel %vm3441, %v4484, %v4483
  %v4486 = vpack.c.b16 %v4485, %v4485
  %v4504 = vunpack.c.l.b16 %v4440
  %v4505 = vunpack.c.l.b16 %v4441
  %v4506 = vunpack.c.l.b16 %v4442
  %v4507 = vunpack.c.l.b16 %v4443
  %v4508 = vunpack.c.l.b16 %v4444
  %v4509 = vunpack.c.l.b16 %v4445
  %v4510 = vunpack.c.l.b16 %v4446
  %v4511 = vunpack.c.l.b16 %v4447
  %v4512 = vunpack.c.l.b16 %v4448
  %v4513 = vunpack.c.l.b16 %v4449
  %v4514 = vunpack.c.l.b16 %v4450
  %v4515 = vunpack.c.l.b16 %v4451
  %v4516 = vunpack.c.l.b16 %v4452
  %v4517 = vunpack.c.l.b16 %v4453
  %v4518 = vunpack.c.l.b16 %v4454
  %v4519 = vunpack.c.l.b16 %v4455
  %v4520 = vpack.c.b16 %v4505, %v4504
  %v4521 = vpack.c.b16 %v4507, %v4506
  %v4522 = vpack.c.b16 %v4509, %v4508
  %v4523 = vpack.c.b16 %v4511, %v4510
  %v4524 = vpack.c.b16 %v4513, %v4512
  %v4525 = vpack.c.b16 %v4515, %v4514
  %v4526 = vpack.c.b16 %v4517, %v4516
  %v4527 = vpack.c.b16 %v4519, %v4518
  %4536 = vmatprep.subr.bf16.mxu0 0
  %4537 = vmatpush1.bf16.msra.mxu0 %v4527
  %4538 = vmatprep.subr.bf16.mxu0 0
  %4539 = vmatpush1.bf16.msra.mxu0 %v4526
  %4540 = vmatprep.subr.bf16.mxu0 0
  %4541 = vmatpush1.bf16.msra.mxu0 %v4525
  %4542 = vmatprep.subr.bf16.mxu0 0
  %4543 = vmatpush1.bf16.msra.mxu0 %v4524
  %4544 = vmatprep.subr.bf16.mxu0 0
  %4545 = vmatpush1.bf16.msra.mxu0 %v4523
  %4546 = vmatprep.subr.bf16.mxu0 0
  %4547 = vmatpush1.bf16.msra.mxu0 %v4522
  %4548 = vmatprep.subr.bf16.mxu0 0
  %4549 = vmatpush1.bf16.msra.mxu0 %v4521
  %4550 = vmatprep.subr.bf16.mxu0 0
  %4551 = vmatpush1.bf16.msra.mxu0 %v4520
  %4552 = vmatprep.subr.bf16.mxu0 0
  %4553 = vmatpush2.bf16.msra.mxu0 0
  %4554 = vmatprep.subr.bf16.mxu0 0
  %4555 = vmatpush2.bf16.msra.mxu0 0
  %4556 = vmatprep.subr.bf16.mxu0 0
  %4557 = vmatpush2.bf16.msra.mxu0 0
  %4558 = vmatprep.subr.bf16.mxu0 0
  %4559 = vmatpush2.bf16.msra.mxu0 0
  %4560 = vmatprep.subr.bf16.mxu0 0
  %4561 = vmatpush2.bf16.msra.mxu0 0
  %4562 = vmatprep.subr.bf16.mxu0 0
  %4563 = vmatpush2.bf16.msra.mxu0 0
  %4564 = vmatprep.subr.bf16.mxu0 0
  %4565 = vmatpush2.bf16.msra.mxu0 0
  %4566 = vmatprep.subr.bf16.mxu0 0
  %4567 = vmatpush2.bf16.msra.mxu0 0
  %4568 = vmatprep.mubr.bf16.mxu0 0
  %4569 = vmatmul.mubr.bf16.gmra.mxu0 %v4486
  %v4570 = vpop.f32.mrf.mxu0
  %v4571 = vadd.f32 0.0, %v4570
  %v4572 = vpop.f32.mrf.mxu0
  %v4573 = vpop.f32.mrf.mxu0
  %v4574 = vpop.f32.mrf.mxu0
  %4575 = vdwg.mxu0
  %v4576 = vadd.f32 %v4422, %v4571
  %v4577 = vld [vmem:[%s12] sm:$0x1]
  %v4579 = vlaneseq
  %v4580 = vshrl.u32 %v4579, 7
  %v4581 = vsub.s32 0, %v4580
  %v4582 = vrot.slane %v4577, %v4581
  %v4584 = vadd.f32 %v4576, %v4582
  %v4585 = vmax.f32 %v4584, 0.0
  %v4586 = vpack.c.bf16 %v4585, %v4585
  %v4587 = vld [vmem:[%s13] sm:$0xf]
  %v4588 = vld [vmem:[%s13 + $0x4] sm:$0xf]
  %v4589 = vld [vmem:[%s13 + $0x8] sm:$0xf]
  %v4590 = vld [vmem:[%s13 + $0xc] sm:$0xf]
  %v4591 = vld [vmem:[%s14] sm:$0x1]
  %v4593 = vlaneseq
  %v4594 = vshrl.u32 %v4593, 7
  %v4595 = vsub.s32 0, %v4594
  %v4596 = vrot.slane %v4591, %v4595
  %v4602 = vunpack.c.l.b16 %v4587
  %v4603 = vunpack.c.l.b16 %v4588
  %v4604 = vunpack.c.l.b16 %v4589
  %v4605 = vunpack.c.l.b16 %v4590
  %v4606 = vpack.c.b16 %v4603, %v4602
  %v4607 = vpack.c.b16 %v4605, %v4604
  %vm4610 = vcmask 261120
  %v4612 = vsel %vm4610, %v4586, 0
  %4614 = vmatprep.subr.bf16.mxu0 0
  %4615 = vmatpush1.bf16.msra.mxu0 0
  %4616 = vmatprep.subr.bf16.mxu0 0
  %4617 = vmatpush1.bf16.msra.mxu0 0
  %4618 = vmatprep.subr.bf16.mxu0 0
  %4619 = vmatpush1.bf16.msra.mxu0 0
  %4620 = vmatprep.subr.bf16.mxu0 0
  %4621 = vmatpush1.bf16.msra.mxu0 0
  %4622 = vmatprep.subr.bf16.mxu0 0
  %4623 = vmatpush1.bf16.msra.mxu0 0
  %4624 = vmatprep.subr.bf16.mxu0 0
  %4625 = vmatpush1.bf16.msra.mxu0 0
  %4626 = vmatprep.subr.bf16.mxu0 0
  %4627 = vmatpush1.bf16.msra.mxu0 %v4607
  %4628 = vmatprep.subr.bf16.mxu0 0
  %4629 = vmatpush1.bf16.msra.mxu0 %v4606
  %4630 = vmatprep.subr.bf16.mxu0 0
  %4631 = vmatpush2.bf16.msra.mxu0 0
  %4632 = vmatprep.subr.bf16.mxu0 0
  %4633 = vmatpush2.bf16.msra.mxu0 0
  %4634 = vmatprep.subr.bf16.mxu0 0
  %4635 = vmatpush2.bf16.msra.mxu0 0
  %4636 = vmatprep.subr.bf16.mxu0 0
  %4637 = vmatpush2.bf16.msra.mxu0 0
  %4638 = vmatprep.subr.bf16.mxu0 0
  %4639 = vmatpush2.bf16.msra.mxu0 0
  %4640 = vmatprep.subr.bf16.mxu0 0
  %4641 = vmatpush2.bf16.msra.mxu0 0
  %4642 = vmatprep.subr.bf16.mxu0 0
  %4643 = vmatpush2.bf16.msra.mxu0 0
  %4644 = vmatprep.subr.bf16.mxu0 0
  %4645 = vmatpush2.bf16.msra.mxu0 0
  %4646 = vmatprep.mubr.bf16.mxu0 0
  %4647 = vmatmul.mubr.bf16.gmra.mxu0 %v4612
  %v4648 = vpop.f32.mrf.mxu0
  %v4649 = vadd.f32 %v4596, %v4648
  %v4650 = vpop.f32.mrf.mxu0
  %v4651 = vpop.f32.mrf.mxu0
  %v4652 = vpop.f32.mrf.mxu0
  %4653 = vdwg.mxu0
  %vm4654 = vcmask 31744
  %4655 = vst.msk [vmem:[%s15] sm:$0xff] %vm4654, %v4649
  // Predicated region
  $region62: #{cnn5_forward_fn.1} parent=0 // pred_check
    _
  $region63: #{cnn5_forward_fn.1} parent=0 // pred_check_branch
    %4657 = sbr.rel (0) target = $region65
  $region64: #{cnn5_forward_fn.1} parent=0 // pred_region
    _
  $region65: #{cnn5_forward_fn.1} parent=0 // pred_fallthru
    _
  // Predicated region
  $region66: #{cnn5_forward_fn.1} parent=0 // pred_check
    _
  $region67: #{cnn5_forward_fn.1} parent=0 // pred_check_branch
    %4659 = sbr.rel (0) target = $region69
  $region68: #{cnn5_forward_fn.1} parent=0 // pred_region
    _
  $region69: #{cnn5_forward_fn.1} parent=0 // pred_fallthru
    _

</llo_original>
